<compile_context>
chip_gen: v6e
topology: v6e:2x2x1
jax: 0.10.0
libtpu: 0.0.40
codegen_flags: <defaults>
</compile_context>

<pallas_src>
import jax
import jax.numpy as jnp
from jax.experimental import pallas as pl
from jax.experimental.pallas import tpu as pltpu

D_MODEL = 32
NUM_HEADS = 4
DFF = 64
DEPTH = D_MODEL // NUM_HEADS
EPS = 1e-6

# Packed weight slab layout (lane-dense, 128 lanes wide):
#   rows [0, 32)    : [wq1*scale | wk1 | wv1 | wo1]  (four 32x32 blocks side by side)
#   rows [32, 64)   : [wq2*scale | wk2 | wv2 | wo2]
#   rows [64, 96)   : wf1 (32x64) in lanes [0, 64)
#   rows [96, 160)  : wf2 (64x32) in lanes [0, 32)
_R_FF1 = 2 * D_MODEL
_R_FF2 = _R_FF1 + D_MODEL
_W_ROWS = _R_FF2 + DFF            # 160
_W_COLS = 4 * D_MODEL             # 128

# Packed vector slab (16 x 64):
#   rows 0..3  : bq1*scale, bk1, bv1, bo1
#   rows 4..7  : bq2*scale, bk2, bv2, bo2
#   rows 8..13 : g1, be1, g2, be2, g3, be3
#   row 14     : bf2
#   row 15     : bf1 (64 lanes)
_V_ROWS = 16
_V_COLS = DFF


def _layer_norm(v, g, b):
    mu = jnp.mean(v, axis=-1, keepdims=True)
    var = jnp.mean((v - mu) ** 2, axis=-1, keepdims=True)
    return (v - mu) * jax.lax.rsqrt(var + EPS) * g + b


def _mha(q3, kv3, mask4, hmask, wq, bq, wk, bk, wv, bv, wo, bo, attn_ref):
    """Multi-head attention with 2-D projections and a lane-masked head split.

    q3: (B, Sq, D)   kv3: (B, Sk, D)
    mask4: broadcastable to (B, H, Sq, Sk), 1.0 == masked
    hmask: (1, H, 1, D) with hmask[0,h,0,e] = 1.0 iff lane e belongs to head h
    wq/bq carry the folded 1/sqrt(DEPTH) scale.
    attn_ref: (B, H, Sq, Sk) output ref.  Returns (B, Sq, D).
    """
    B, Sq, D = q3.shape
    Sk = kv3.shape[1]
    H = NUM_HEADS
    N = B * H

    dn_qkt = (((2,), (2,)), ((0,), (0,)))   # (N,q,d) x (N,k,d) -> (N,q,k)
    dn_pv = (((2,), (1,)), ((0,), (0,)))    # (N,q,k) x (N,k,d) -> (N,q,d)

    # Single 2-D projections over all B*S rows (one MXU matmul each).
    q = (jnp.dot(q3.reshape(B * Sq, D), wq, preferred_element_type=jnp.float32)
         + bq).reshape(B, Sq, D)
    k = (jnp.dot(kv3.reshape(B * Sk, D), wk, preferred_element_type=jnp.float32)
         + bk).reshape(B, Sk, D)
    v = (jnp.dot(kv3.reshape(B * Sk, D), wv, preferred_element_type=jnp.float32)
         + bv).reshape(B, Sk, D)

    # Per-head scores: masking Q to head h's DEPTH lanes makes the D-wide
    # contraction equal the per-head DEPTH-wide one -> no head-split transpose.
    qm = (q[:, None] * hmask).reshape(N, Sq, D)
    kb = jnp.broadcast_to(k[:, None], (B, H, Sk, D)).reshape(N, Sk, D)
    vb = jnp.broadcast_to(v[:, None], (B, H, Sk, D)).reshape(N, Sk, D)

    s = jax.lax.dot_general(qm, kb, dn_qkt, preferred_element_type=jnp.float32)
    s = s.reshape(B, H, Sq, Sk) + mask4 * (-1e9)
    s = s - jnp.max(s, axis=-1, keepdims=True)
    e = jnp.exp(s)
    attn = e * pl.reciprocal(jnp.sum(e, axis=-1, keepdims=True), approx=True)

    # Single whole-block store of the attention weights.
    attn_ref[...] = attn

    # Context against all lanes, keep each head's own lanes, merge heads by
    # summing, then ONE 2-D output projection with the original wo.
    ctx = jax.lax.dot_general(attn.reshape(N, Sq, Sk), vb, dn_pv,
                              preferred_element_type=jnp.float32)
    ctx = jnp.sum(ctx.reshape(B, H, Sq, D) * hmask, axis=1)          # (B, Sq, D)
    out = jnp.dot(ctx.reshape(B * Sq, D), wo,
                  preferred_element_type=jnp.float32) + bo
    return out.reshape(B, Sq, D)


def decoder_layer_kernel(x_ref, enc_ref, la_ref, pad_ref, hmask_ref, w_ref, v_ref,
                         out_ref, attn1_ref, attn2_ref):
    x = x_ref[...]        # (B, S, D)
    enc = enc_ref[...]    # (B, Se, D)
    B, S, D = x.shape
    hmask = hmask_ref[...]                               # (1, H, 1, D)

    # --- carve the packed weight slab (static slices are cheap) ---
    def wmat(r, c):
        return w_ref[r * D_MODEL:(r + 1) * D_MODEL, c * D_MODEL:(c + 1) * D_MODEL]

    wq1, wk1, wv1, wo1 = wmat(0, 0), wmat(0, 1), wmat(0, 2), wmat(0, 3)
    wq2, wk2, wv2, wo2 = wmat(1, 0), wmat(1, 1), wmat(1, 2), wmat(1, 3)
    wf1 = w_ref[_R_FF1:_R_FF1 + D_MODEL, 0:DFF]          # (32, 64)
    wf2 = w_ref[_R_FF2:_R_FF2 + DFF, 0:D_MODEL]          # (64, 32)

    vecs = v_ref[...]                                    # (16, 64)

    def vrow(i, n=D_MODEL):
        return vecs[i:i + 1, 0:n]

    bq1, bk1, bv1, bo1 = vrow(0), vrow(1), vrow(2), vrow(3)
    bq2, bk2, bv2, bo2 = vrow(4), vrow(5), vrow(6), vrow(7)
    g1, be1, g2, be2, g3, be3 = (vrow(i) for i in range(8, 14))
    bf2 = vrow(14)
    bf1 = vrow(15, DFF)

    mask1 = la_ref[...][None, None, :, :]                # (1, 1, S, S)
    mask2 = pad_ref[...][:, :, None, :]                  # (B, 1, 1, Se)

    # --- Block 1: masked self-attention ---
    a1 = _mha(x, x, mask1, hmask, wq1, bq1, wk1, bk1, wv1, bv1, wo1, bo1, attn1_ref)
    # TODO(synk): dropout1/2/3 run in inference mode (identity); train-mode RNG dropout not implemented.
    out1 = _layer_norm(a1 + x, g1, be1)

    # --- Block 2: cross-attention over the encoder output ---
    a2 = _mha(out1, enc, mask2, hmask, wq2, bq2, wk2, bk2, wv2, bv2, wo2, bo2, attn2_ref)
    out2 = _layer_norm(a2 + out1, g2, be2)

    # --- FFN: Linear(D->DFF) -> ReLU -> Linear(DFF->D), plain 2-D matmuls ---
    out2_2d = out2.reshape(B * S, D)
    hid = jnp.maximum(jnp.dot(out2_2d, wf1, preferred_element_type=jnp.float32) + bf1, 0.0)
    ffn = (jnp.dot(hid, wf2, preferred_element_type=jnp.float32) + bf2).reshape(B, S, D)

    out_ref[...] = _layer_norm(ffn + out2, g3, be3)


@jax.jit
def decoder_layer(x, enc, la_mask, pad_mask, params):
    """x: (B,S,D)  enc: (B,Se,D)  la_mask: (S,S)  pad_mask: (B,1,Se); 1.0 == masked."""
    B, S, D = x.shape
    Se = enc.shape[1]
    H = NUM_HEADS
    scale = 1.0 / jnp.sqrt(jnp.float32(DEPTH))

    # Pack the 10 weight matrices into one lane-dense (160, 128) slab.
    W = jnp.zeros((_W_ROWS, _W_COLS), jnp.float32)
    mats1 = [params["wq1"] * scale, params["wk1"], params["wv1"], params["wo1"]]
    mats2 = [params["wq2"] * scale, params["wk2"], params["wv2"], params["wo2"]]
    for c, m in enumerate(mats1):
        W = W.at[0:D_MODEL, c * D_MODEL:(c + 1) * D_MODEL].set(m)
    for c, m in enumerate(mats2):
        W = W.at[D_MODEL:2 * D_MODEL, c * D_MODEL:(c + 1) * D_MODEL].set(m)
    W = W.at[_R_FF1:_R_FF1 + D_MODEL, 0:DFF].set(params["wf1"])
    W = W.at[_R_FF2:_R_FF2 + DFF, 0:D_MODEL].set(params["wf2"])

    # Pack the 16 bias / LayerNorm vectors into one (16, 64) slab.
    Vp = jnp.zeros((_V_ROWS, _V_COLS), jnp.float32)
    vec32 = [params["bq1"] * scale, params["bk1"], params["bv1"], params["bo1"],
             params["bq2"] * scale, params["bk2"], params["bv2"], params["bo2"],
             params["g1"], params["be1"], params["g2"], params["be2"],
             params["g3"], params["be3"], params["bf2"]]
    for i, vv in enumerate(vec32):
        Vp = Vp.at[i:i + 1, 0:D_MODEL].set(vv.reshape(1, D_MODEL))
    Vp = Vp.at[_V_ROWS - 1:_V_ROWS, 0:DFF].set(params["bf1"].reshape(1, DFF))

    # Per-head lane mask: hmask[0,h,0,e] = 1.0 iff e // DEPTH == h.
    hmask = (jnp.arange(D_MODEL)[None, :] // DEPTH
             == jnp.arange(H)[:, None]).astype(jnp.float32).reshape(1, H, 1, D_MODEL)

    out_shape = (
        jax.ShapeDtypeStruct((B, S, D), jnp.float32),
        jax.ShapeDtypeStruct((B, H, S, S), jnp.float32),
        jax.ShapeDtypeStruct((B, H, S, Se), jnp.float32),
    )
    vmem = pl.BlockSpec(memory_space=pltpu.MemorySpace.VMEM)
    fn = pl.pallas_call(
        decoder_layer_kernel,
        out_shape=out_shape,
        in_specs=[vmem] * 7,
        out_specs=(vmem, vmem, vmem),
    )
    return fn(x, enc, la_mask, pad_mask, hmask, W, Vp)


# ------------------------- pure-JAX reference (for verification) -------------------------
def reference(x, enc, la_mask, pad_mask, p):
    def mha(v, k, q, mask, wq, bq, wk, bk, wv, bv, wo, bo):
        B, Sq, D = q.shape
        Sk = k.shape[1]
        qp, kp, vp = q @ wq + bq, k @ wk + bk, v @ wv + bv

        def split(t, S):
            return t.reshape(B, S, NUM_HEADS, DEPTH).transpose(0, 2, 1, 3)

        qh, kh, vh = split(qp, Sq), split(kp, Sk), split(vp, Sk)
        scores = jnp.einsum("bhqd,bhkd->bhqk", qh, kh) / jnp.sqrt(jnp.float32(DEPTH))
        scores = scores + mask[:, None, :, :] * (-1e9)
        attn = jax.nn.softmax(scores, axis=-1)
        out = jnp.einsum("bhqk,bhkd->bhqd", attn, vh)
        out = out.transpose(0, 2, 1, 3).reshape(B, Sq, D)
        return out @ wo + bo, attn

    def ln(v, g, b):
        mu = v.mean(-1, keepdims=True)
        var = ((v - mu) ** 2).mean(-1, keepdims=True)
        return (v - mu) * jax.lax.rsqrt(var + EPS) * g + b

    a1, w1 = mha(x, x, x, la_mask, p["wq1"], p["bq1"], p["wk1"], p["bk1"],
                 p["wv1"], p["bv1"], p["wo1"], p["bo1"])
    out1 = ln(a1 + x, p["g1"], p["be1"])
    a2, w2 = mha(enc, enc, out1, pad_mask, p["wq2"], p["bq2"], p["wk2"], p["bk2"],
                 p["wv2"], p["bv2"], p["wo2"], p["bo2"])
    out2 = ln(a2 + out1, p["g2"], p["be2"])
    h = jax.nn.relu(out2 @ p["wf1"] + p["bf1"])
    f = h @ p["wf2"] + p["bf2"]
    return ln(f + out2, p["g3"], p["be3"]), w1, w2


def init_params(key):
    p = {}
    keys = iter(jax.random.split(key, 16))

    def dense(wname, bname, fan_in, fan_out):
        kw, kb = jax.random.split(next(keys))
        lim = 1.0 / jnp.sqrt(jnp.float32(fan_in))
        p[wname] = jax.random.uniform(kw, (fan_in, fan_out), jnp.float32, -lim, lim)
        p[bname] = jax.random.uniform(kb, (1, fan_out), jnp.float32, -lim, lim)

    for pre in ("1", "2"):
        dense("wq" + pre, "bq" + pre, D_MODEL, D_MODEL)
        dense("wk" + pre, "bk" + pre, D_MODEL, D_MODEL)
        dense("wv" + pre, "bv" + pre, D_MODEL, D_MODEL)
        dense("wo" + pre, "bo" + pre, D_MODEL, D_MODEL)
    dense("wf1", "bf1", D_MODEL, DFF)
    dense("wf2", "bf2", DFF, D_MODEL)
    for i in ("1", "2", "3"):
        p["g" + i] = jnp.ones((1, D_MODEL), jnp.float32)
        p["be" + i] = jnp.zeros((1, D_MODEL), jnp.float32)
    return p


if __name__ == "__main__":
    B, S, Se = 2, 8, 8
    root = jax.random.PRNGKey(0)
    k_param, k_x, k_enc = jax.random.split(root, 3)

    params = init_params(k_param)
    x = jax.random.normal(k_x, (B, S, D_MODEL), jnp.float32)
    enc_output = jax.random.normal(k_enc, (B, Se, D_MODEL), jnp.float32)

    # causal (look-ahead) mask, compact (S, S); 1.0 above the diagonal == masked
    look_ahead_mask = 1.0 - jnp.tril(jnp.ones((S, S), jnp.float32))
    # padding mask, compact (B, 1, Se); last 2 encoder positions are padding
    padding_mask = jnp.zeros((B, 1, Se), jnp.float32).at[:, :, Se - 2:].set(1.0)

    out, attn1, attn2 = decoder_layer(x, enc_output, look_ahead_mask, padding_mask, params)
    jax.block_until_ready(out)

    ref_out, ref_a1, ref_a2 = reference(
        x, enc_output,
        jnp.broadcast_to(look_ahead_mask, (B, S, S)),
        jnp.broadcast_to(padding_mask, (B, S, Se)),
        params)
    assert jnp.allclose(out, ref_out, rtol=2e-3, atol=2e-3), "final output mismatch"
    assert jnp.allclose(attn1, ref_a1, rtol=2e-3, atol=2e-3), "attn block1 mismatch"
    assert jnp.allclose(attn2, ref_a2, rtol=2e-3, atol=2e-3), "attn block2 mismatch"

    print("KERNEL_OK")
</pallas_src>

<mosaic_0001>
module attributes {stable_mosaic.version = 11 : i64} {
  func.func @decoder_layer_kernel(%arg0: memref<2x8x32xf32, #tpu.memory_space<vmem>>, %arg1: memref<2x8x32xf32, #tpu.memory_space<vmem>>, %arg2: memref<8x8xf32, #tpu.memory_space<vmem>>, %arg3: memref<2x1x8xf32, #tpu.memory_space<vmem>>, %arg4: memref<1x4x1x32xf32, #tpu.memory_space<vmem>>, %arg5: memref<160x128xf32, #tpu.memory_space<vmem>>, %arg6: memref<16x64xf32, #tpu.memory_space<vmem>>, %arg7: memref<2x8x32xf32, #tpu.memory_space<vmem>>, %arg8: memref<2x4x8x8xf32, #tpu.memory_space<vmem>>, %arg9: memref<2x4x8x8xf32, #tpu.memory_space<vmem>>) attributes {dimension_semantics = [], scalar_prefetch = 0 : i64, scratch_operands = 0 : i64, tpu.core_type = #tpu.core_type<tc>} {
    %c0 = arith.constant 0 : index
    %c0_0 = arith.constant 0 : index
    %c0_1 = arith.constant 0 : index
    %0 = vector.load %arg0[%c0, %c0_0, %c0_1] : memref<2x8x32xf32, #tpu.memory_space<vmem>>, vector<2x8x32xf32>
    %c0_2 = arith.constant 0 : index
    %c0_3 = arith.constant 0 : index
    %c0_4 = arith.constant 0 : index
    %1 = vector.load %arg1[%c0_2, %c0_3, %c0_4] : memref<2x8x32xf32, #tpu.memory_space<vmem>>, vector<2x8x32xf32>
    %c0_5 = arith.constant 0 : index
    %c0_6 = arith.constant 0 : index
    %c0_7 = arith.constant 0 : index
    %c0_8 = arith.constant 0 : index
    %2 = vector.load %arg4[%c0_5, %c0_6, %c0_7, %c0_8] : memref<1x4x1x32xf32, #tpu.memory_space<vmem>>, vector<1x4x1x32xf32>
    %c0_9 = arith.constant 0 : index
    %c0_10 = arith.constant 0 : index
    %3 = vector.load %arg5[%c0_9, %c0_10] : memref<160x128xf32, #tpu.memory_space<vmem>>, vector<32x32xf32>
    %c0_11 = arith.constant 0 : index
    %c32 = arith.constant 32 : index
    %4 = vector.load %arg5[%c0_11, %c32] : memref<160x128xf32, #tpu.memory_space<vmem>>, vector<32x32xf32>
    %c0_12 = arith.constant 0 : index
    %c64 = arith.constant 64 : index
    %5 = vector.load %arg5[%c0_12, %c64] : memref<160x128xf32, #tpu.memory_space<vmem>>, vector<32x32xf32>
    %c0_13 = arith.constant 0 : index
    %c96 = arith.constant 96 : index
    %6 = vector.load %arg5[%c0_13, %c96] : memref<160x128xf32, #tpu.memory_space<vmem>>, vector<32x32xf32>
    %c32_14 = arith.constant 32 : index
    %c0_15 = arith.constant 0 : index
    %7 = vector.load %arg5[%c32_14, %c0_15] : memref<160x128xf32, #tpu.memory_space<vmem>>, vector<32x32xf32>
    %c32_16 = arith.constant 32 : index
    %c32_17 = arith.constant 32 : index
    %8 = vector.load %arg5[%c32_16, %c32_17] : memref<160x128xf32, #tpu.memory_space<vmem>>, vector<32x32xf32>
    %c32_18 = arith.constant 32 : index
    %c64_19 = arith.constant 64 : index
    %9 = vector.load %arg5[%c32_18, %c64_19] : memref<160x128xf32, #tpu.memory_space<vmem>>, vector<32x32xf32>
    %c32_20 = arith.constant 32 : index
    %c96_21 = arith.constant 96 : index
    %10 = vector.load %arg5[%c32_20, %c96_21] : memref<160x128xf32, #tpu.memory_space<vmem>>, vector<32x32xf32>
    %c64_22 = arith.constant 64 : index
    %c0_23 = arith.constant 0 : index
    %11 = vector.load %arg5[%c64_22, %c0_23] : memref<160x128xf32, #tpu.memory_space<vmem>>, vector<32x64xf32>
    %c96_24 = arith.constant 96 : index
    %c0_25 = arith.constant 0 : index
    %12 = vector.load %arg5[%c96_24, %c0_25] : memref<160x128xf32, #tpu.memory_space<vmem>>, vector<64x32xf32>
    %c0_26 = arith.constant 0 : index
    %c0_27 = arith.constant 0 : index
    %13 = vector.load %arg6[%c0_26, %c0_27] : memref<16x64xf32, #tpu.memory_space<vmem>>, vector<16x64xf32>
    %14 = vector.extract_strided_slice %13 {offsets = [0, 0], sizes = [1, 32], strides = [1, 1]} : vector<16x64xf32> to vector<1x32xf32>
    %15 = vector.extract_strided_slice %13 {offsets = [1, 0], sizes = [1, 32], strides = [1, 1]} : vector<16x64xf32> to vector<1x32xf32>
    %16 = vector.extract_strided_slice %13 {offsets = [2, 0], sizes = [1, 32], strides = [1, 1]} : vector<16x64xf32> to vector<1x32xf32>
    %17 = vector.extract_strided_slice %13 {offsets = [3, 0], sizes = [1, 32], strides = [1, 1]} : vector<16x64xf32> to vector<1x32xf32>
    %18 = vector.extract_strided_slice %13 {offsets = [4, 0], sizes = [1, 32], strides = [1, 1]} : vector<16x64xf32> to vector<1x32xf32>
    %19 = vector.extract_strided_slice %13 {offsets = [5, 0], sizes = [1, 32], strides = [1, 1]} : vector<16x64xf32> to vector<1x32xf32>
    %20 = vector.extract_strided_slice %13 {offsets = [6, 0], sizes = [1, 32], strides = [1, 1]} : vector<16x64xf32> to vector<1x32xf32>
    %21 = vector.extract_strided_slice %13 {offsets = [7, 0], sizes = [1, 32], strides = [1, 1]} : vector<16x64xf32> to vector<1x32xf32>
    %22 = vector.extract_strided_slice %13 {offsets = [8, 0], sizes = [1, 32], strides = [1, 1]} : vector<16x64xf32> to vector<1x32xf32>
    %23 = vector.extract_strided_slice %13 {offsets = [9, 0], sizes = [1, 32], strides = [1, 1]} : vector<16x64xf32> to vector<1x32xf32>
    %24 = vector.extract_strided_slice %13 {offsets = [10, 0], sizes = [1, 32], strides = [1, 1]} : vector<16x64xf32> to vector<1x32xf32>
    %25 = vector.extract_strided_slice %13 {offsets = [11, 0], sizes = [1, 32], strides = [1, 1]} : vector<16x64xf32> to vector<1x32xf32>
    %26 = vector.extract_strided_slice %13 {offsets = [12, 0], sizes = [1, 32], strides = [1, 1]} : vector<16x64xf32> to vector<1x32xf32>
    %27 = vector.extract_strided_slice %13 {offsets = [13, 0], sizes = [1, 32], strides = [1, 1]} : vector<16x64xf32> to vector<1x32xf32>
    %28 = vector.extract_strided_slice %13 {offsets = [14, 0], sizes = [1, 32], strides = [1, 1]} : vector<16x64xf32> to vector<1x32xf32>
    %29 = vector.extract_strided_slice %13 {offsets = [15, 0], sizes = [1, 64], strides = [1, 1]} : vector<16x64xf32> to vector<1x64xf32>
    %c0_28 = arith.constant 0 : index
    %c0_29 = arith.constant 0 : index
    %30 = vector.load %arg2[%c0_28, %c0_29] : memref<8x8xf32, #tpu.memory_space<vmem>>, vector<8x8xf32>
    %31 = vector.shape_cast %30 : vector<8x8xf32> to vector<1x1x8x8xf32>
    %c0_30 = arith.constant 0 : index
    %c0_31 = arith.constant 0 : index
    %c0_32 = arith.constant 0 : index
    %32 = vector.load %arg3[%c0_30, %c0_31, %c0_32] : memref<2x1x8xf32, #tpu.memory_space<vmem>>, vector<2x1x8xf32>
    %33 = vector.shape_cast %32 : vector<2x1x8xf32> to vector<2x1x1x8xf32>
    %34 = vector.shape_cast %0 : vector<2x8x32xf32> to vector<16x32xf32>
    %cst = arith.constant dense<0.000000e+00> : vector<16x32xf32>
    %35 = tpu.matmul %34, %3, %cst {dimension_numbers = #tpu.dot_dimension_numbers<[1], [0], [0], [1], [0, 0, 1, 1], [], []>} : vector<16x32xf32>, vector<32x32xf32>, vector<16x32xf32> -> vector<16x32xf32>
    %36 = vector.broadcast %14 : vector<1x32xf32> to vector<16x32xf32>
    %37 = arith.addf %35, %36 : vector<16x32xf32>
    %38 = vector.shape_cast %37 : vector<16x32xf32> to vector<2x8x32xf32>
    %39 = vector.shape_cast %0 : vector<2x8x32xf32> to vector<16x32xf32>
    %cst_33 = arith.constant dense<0.000000e+00> : vector<16x32xf32>
    %40 = tpu.matmul %39, %4, %cst_33 {dimension_numbers = #tpu.dot_dimension_numbers<[1], [0], [0], [1], [0, 0, 1, 1], [], []>} : vector<16x32xf32>, vector<32x32xf32>, vector<16x32xf32> -> vector<16x32xf32>
    %41 = vector.broadcast %15 : vector<1x32xf32> to vector<16x32xf32>
    %42 = arith.addf %40, %41 : vector<16x32xf32>
    %43 = vector.shape_cast %42 : vector<16x32xf32> to vector<2x8x32xf32>
    %44 = vector.shape_cast %0 : vector<2x8x32xf32> to vector<16x32xf32>
    %cst_34 = arith.constant dense<0.000000e+00> : vector<16x32xf32>
    %45 = tpu.matmul %44, %5, %cst_34 {dimension_numbers = #tpu.dot_dimension_numbers<[1], [0], [0], [1], [0, 0, 1, 1], [], []>} : vector<16x32xf32>, vector<32x32xf32>, vector<16x32xf32> -> vector<16x32xf32>
    %46 = vector.broadcast %16 : vector<1x32xf32> to vector<16x32xf32>
    %47 = arith.addf %45, %46 : vector<16x32xf32>
    %48 = vector.shape_cast %47 : vector<16x32xf32> to vector<2x8x32xf32>
    %49 = vector.shape_cast %38 : vector<2x8x32xf32> to vector<2x1x8x32xf32>
    %50 = vector.broadcast %49 : vector<2x1x8x32xf32> to vector<2x4x8x32xf32>
    %51 = vector.broadcast %2 : vector<1x4x1x32xf32> to vector<2x4x8x32xf32>
    %52 = arith.mulf %50, %51 : vector<2x4x8x32xf32>
    %53 = vector.shape_cast %52 : vector<2x4x8x32xf32> to vector<8x8x32xf32>
    %54 = vector.shape_cast %43 : vector<2x8x32xf32> to vector<2x1x8x32xf32>
    %55 = vector.shape_cast %54 : vector<2x1x8x32xf32> to vector<2x1x8x32xf32>
    %56 = vector.broadcast %55 : vector<2x1x8x32xf32> to vector<2x4x8x32xf32>
    %57 = vector.shape_cast %56 : vector<2x4x8x32xf32> to vector<8x8x32xf32>
    %58 = vector.shape_cast %48 : vector<2x8x32xf32> to vector<2x1x8x32xf32>
    %59 = vector.shape_cast %58 : vector<2x1x8x32xf32> to vector<2x1x8x32xf32>
    %60 = vector.broadcast %59 : vector<2x1x8x32xf32> to vector<2x4x8x32xf32>
    %61 = vector.shape_cast %60 : vector<2x4x8x32xf32> to vector<8x8x32xf32>
    %cst_35 = arith.constant dense<0.000000e+00> : vector<8x8x8xf32>
    %62 = tpu.matmul %53, %57, %cst_35 {dimension_numbers = #tpu.dot_dimension_numbers<[2], [2], [1], [1], [0, 0, 0, 1, 1, 1], [0], [0]>} : vector<8x8x32xf32>, vector<8x8x32xf32>, vector<8x8x8xf32> -> vector<8x8x8xf32>
    %63 = vector.shape_cast %62 : vector<8x8x8xf32> to vector<2x4x8x8xf32>
    %cst_36 = arith.constant -1.000000e+09 : f32
    %64 = vector.broadcast %cst_36 : f32 to vector<1x1x8x8xf32>
    %65 = arith.mulf %31, %64 : vector<1x1x8x8xf32>
    %66 = vector.broadcast %65 : vector<1x1x8x8xf32> to vector<2x4x8x8xf32>
    %67 = arith.addf %63, %66 : vector<2x4x8x8xf32>
    %cst_37 = arith.constant dense<0xFF800000> : vector<2x4x8xf32>
    %68 = vector.multi_reduction <maximumf>, %67, %cst_37 [3] : vector<2x4x8x8xf32> to vector<2x4x8xf32>
    %69 = vector.shape_cast %68 : vector<2x4x8xf32> to vector<2x4x8x1xf32>
    %70 = vector.broadcast %69 : vector<2x4x8x1xf32> to vector<2x4x8x8xf32>
    %71 = arith.subf %67, %70 : vector<2x4x8x8xf32>
    %72 = math.exp %71 : vector<2x4x8x8xf32>
    %cst_38 = arith.constant dense<0.000000e+00> : vector<2x4x8xf32>
    %73 = vector.multi_reduction <add>, %72, %cst_38 [3] : vector<2x4x8x8xf32> to vector<2x4x8xf32>
    %74 = vector.shape_cast %73 : vector<2x4x8xf32> to vector<2x4x8x1xf32>
    %75 = tpu.reciprocal %74 {approx = true} : vector<2x4x8x1xf32> -> vector<2x4x8x1xf32>
    %76 = vector.broadcast %75 : vector<2x4x8x1xf32> to vector<2x4x8x8xf32>
    %77 = arith.mulf %72, %76 : vector<2x4x8x8xf32>
    %c0_39 = arith.constant 0 : index
    %c0_40 = arith.constant 0 : index
    %c0_41 = arith.constant 0 : index
    %c0_42 = arith.constant 0 : index
    %78 = vector.load %arg8[%c0_39, %c0_40, %c0_41, %c0_42] : memref<2x4x8x8xf32, #tpu.memory_space<vmem>>, vector<2x4x8x8xf32>
    tpu.vector_store %arg8[%c0_39, %c0_40, %c0_41, %c0_42], %77 {strides = array<i32>} : memref<2x4x8x8xf32, #tpu.memory_space<vmem>>, vector<2x4x8x8xf32>,
    %79 = vector.shape_cast %77 : vector<2x4x8x8xf32> to vector<8x8x8xf32>
    %cst_43 = arith.constant dense<0.000000e+00> : vector<8x8x32xf32>
    %80 = tpu.matmul %79, %61, %cst_43 {dimension_numbers = #tpu.dot_dimension_numbers<[2], [1], [1], [2], [0, 0, 0, 1, 1, 2], [0], [0]>} : vector<8x8x8xf32>, vector<8x8x32xf32>, vector<8x8x32xf32> -> vector<8x8x32xf32>
    %81 = vector.shape_cast %80 : vector<8x8x32xf32> to vector<2x4x8x32xf32>
    %82 = vector.broadcast %2 : vector<1x4x1x32xf32> to vector<2x4x8x32xf32>
    %83 = arith.mulf %81, %82 : vector<2x4x8x32xf32>
    %cst_44 = arith.constant dense<0.000000e+00> : vector<2x8x32xf32>
    %84 = vector.multi_reduction <add>, %83, %cst_44 [1] : vector<2x4x8x32xf32> to vector<2x8x32xf32>
    %85 = vector.shape_cast %84 : vector<2x8x32xf32> to vector<16x32xf32>
    %cst_45 = arith.constant dense<0.000000e+00> : vector<16x32xf32>
    %86 = tpu.matmul %85, %6, %cst_45 {dimension_numbers = #tpu.dot_dimension_numbers<[1], [0], [0], [1], [0, 0, 1, 1], [], []>} : vector<16x32xf32>, vector<32x32xf32>, vector<16x32xf32> -> vector<16x32xf32>
    %87 = vector.broadcast %17 : vector<1x32xf32> to vector<16x32xf32>
    %88 = arith.addf %86, %87 : vector<16x32xf32>
    %89 = vector.shape_cast %88 : vector<16x32xf32> to vector<2x8x32xf32>
    %90 = arith.addf %89, %0 : vector<2x8x32xf32>
    %cst_46 = arith.constant dense<0.000000e+00> : vector<2x8xf32>
    %91 = vector.multi_reduction <add>, %90, %cst_46 [2] : vector<2x8x32xf32> to vector<2x8xf32>
    %92 = vector.shape_cast %91 : vector<2x8xf32> to vector<2x8x1xf32>
    %cst_47 = arith.constant 3.200000e+01 : f32
    %93 = vector.broadcast %cst_47 : f32 to vector<2x8x1xf32>
    %94 = arith.divf %92, %93 : vector<2x8x1xf32>
    %95 = vector.broadcast %94 : vector<2x8x1xf32> to vector<2x8x32xf32>
    %96 = arith.subf %90, %95 : vector<2x8x32xf32>
    %97 = arith.mulf %96, %96 : vector<2x8x32xf32>
    %cst_48 = arith.constant dense<0.000000e+00> : vector<2x8xf32>
    %98 = vector.multi_reduction <add>, %97, %cst_48 [2] : vector<2x8x32xf32> to vector<2x8xf32>
    %99 = vector.shape_cast %98 : vector<2x8xf32> to vector<2x8x1xf32>
    %cst_49 = arith.constant 3.200000e+01 : f32
    %100 = vector.broadcast %cst_49 : f32 to vector<2x8x1xf32>
    %101 = arith.divf %99, %100 : vector<2x8x1xf32>
    %102 = vector.broadcast %94 : vector<2x8x1xf32> to vector<2x8x32xf32>
    %103 = arith.subf %90, %102 : vector<2x8x32xf32>
    %cst_50 = arith.constant 9.99999997E-7 : f32
    %104 = vector.broadcast %cst_50 : f32 to vector<2x8x1xf32>
    %105 = arith.addf %101, %104 : vector<2x8x1xf32>
    %106 = math.rsqrt %105 : vector<2x8x1xf32>
    %107 = vector.broadcast %106 : vector<2x8x1xf32> to vector<2x8x32xf32>
    %108 = arith.mulf %103, %107 : vector<2x8x32xf32>
    %109 = vector.shape_cast %22 : vector<1x32xf32> to vector<1x1x32xf32>
    %110 = vector.broadcast %109 : vector<1x1x32xf32> to vector<2x8x32xf32>
    %111 = arith.mulf %108, %110 : vector<2x8x32xf32>
    %112 = vector.shape_cast %23 : vector<1x32xf32> to vector<1x1x32xf32>
    %113 = vector.broadcast %112 : vector<1x1x32xf32> to vector<2x8x32xf32>
    %114 = arith.addf %111, %113 : vector<2x8x32xf32>
    %115 = vector.shape_cast %114 : vector<2x8x32xf32> to vector<16x32xf32>
    %cst_51 = arith.constant dense<0.000000e+00> : vector<16x32xf32>
    %116 = tpu.matmul %115, %7, %cst_51 {dimension_numbers = #tpu.dot_dimension_numbers<[1], [0], [0], [1], [0, 0, 1, 1], [], []>} : vector<16x32xf32>, vector<32x32xf32>, vector<16x32xf32> -> vector<16x32xf32>
    %117 = vector.broadcast %18 : vector<1x32xf32> to vector<16x32xf32>
    %118 = arith.addf %116, %117 : vector<16x32xf32>
    %119 = vector.shape_cast %118 : vector<16x32xf32> to vector<2x8x32xf32>
    %120 = vector.shape_cast %1 : vector<2x8x32xf32> to vector<16x32xf32>
    %cst_52 = arith.constant dense<0.000000e+00> : vector<16x32xf32>
    %121 = tpu.matmul %120, %8, %cst_52 {dimension_numbers = #tpu.dot_dimension_numbers<[1], [0], [0], [1], [0, 0, 1, 1], [], []>} : vector<16x32xf32>, vector<32x32xf32>, vector<16x32xf32> -> vector<16x32xf32>
    %122 = vector.broadcast %19 : vector<1x32xf32> to vector<16x32xf32>
    %123 = arith.addf %121, %122 : vector<16x32xf32>
    %124 = vector.shape_cast %123 : vector<16x32xf32> to vector<2x8x32xf32>
    %125 = vector.shape_cast %1 : vector<2x8x32xf32> to vector<16x32xf32>
    %cst_53 = arith.constant dense<0.000000e+00> : vector<16x32xf32>
    %126 = tpu.matmul %125, %9, %cst_53 {dimension_numbers = #tpu.dot_dimension_numbers<[1], [0], [0], [1], [0, 0, 1, 1], [], []>} : vector<16x32xf32>, vector<32x32xf32>, vector<16x32xf32> -> vector<16x32xf32>
    %127 = vector.broadcast %20 : vector<1x32xf32> to vector<16x32xf32>
    %128 = arith.addf %126, %127 : vector<16x32xf32>
    %129 = vector.shape_cast %128 : vector<16x32xf32> to vector<2x8x32xf32>
    %130 = vector.shape_cast %119 : vector<2x8x32xf32> to vector<2x1x8x32xf32>
    %131 = vector.broadcast %130 : vector<2x1x8x32xf32> to vector<2x4x8x32xf32>
    %132 = vector.broadcast %2 : vector<1x4x1x32xf32> to vector<2x4x8x32xf32>
    %133 = arith.mulf %131, %132 : vector<2x4x8x32xf32>
    %134 = vector.shape_cast %133 : vector<2x4x8x32xf32> to vector<8x8x32xf32>
    %135 = vector.shape_cast %124 : vector<2x8x32xf32> to vector<2x1x8x32xf32>
    %136 = vector.shape_cast %135 : vector<2x1x8x32xf32> to vector<2x1x8x32xf32>
    %137 = vector.broadcast %136 : vector<2x1x8x32xf32> to vector<2x4x8x32xf32>
    %138 = vector.shape_cast %137 : vector<2x4x8x32xf32> to vector<8x8x32xf32>
    %139 = vector.shape_cast %129 : vector<2x8x32xf32> to vector<2x1x8x32xf32>
    %140 = vector.shape_cast %139 : vector<2x1x8x32xf32> to vector<2x1x8x32xf32>
    %141 = vector.broadcast %140 : vector<2x1x8x32xf32> to vector<2x4x8x32xf32>
    %142 = vector.shape_cast %141 : vector<2x4x8x32xf32> to vector<8x8x32xf32>
    %cst_54 = arith.constant dense<0.000000e+00> : vector<8x8x8xf32>
    %143 = tpu.matmul %134, %138, %cst_54 {dimension_numbers = #tpu.dot_dimension_numbers<[2], [2], [1], [1], [0, 0, 0, 1, 1, 1], [0], [0]>} : vector<8x8x32xf32>, vector<8x8x32xf32>, vector<8x8x8xf32> -> vector<8x8x8xf32>
    %144 = vector.shape_cast %143 : vector<8x8x8xf32> to vector<2x4x8x8xf32>
    %cst_55 = arith.constant -1.000000e+09 : f32
    %145 = vector.broadcast %cst_55 : f32 to vector<2x1x1x8xf32>
    %146 = arith.mulf %33, %145 : vector<2x1x1x8xf32>
    %147 = vector.broadcast %146 : vector<2x1x1x8xf32> to vector<2x4x8x8xf32>
    %148 = arith.addf %144, %147 : vector<2x4x8x8xf32>
    %cst_56 = arith.constant dense<0xFF800000> : vector<2x4x8xf32>
    %149 = vector.multi_reduction <maximumf>, %148, %cst_56 [3] : vector<2x4x8x8xf32> to vector<2x4x8xf32>
    %150 = vector.shape_cast %149 : vector<2x4x8xf32> to vector<2x4x8x1xf32>
    %151 = vector.broadcast %150 : vector<2x4x8x1xf32> to vector<2x4x8x8xf32>
    %152 = arith.subf %148, %151 : vector<2x4x8x8xf32>
    %153 = math.exp %152 : vector<2x4x8x8xf32>
    %cst_57 = arith.constant dense<0.000000e+00> : vector<2x4x8xf32>
    %154 = vector.multi_reduction <add>, %153, %cst_57 [3] : vector<2x4x8x8xf32> to vector<2x4x8xf32>
    %155 = vector.shape_cast %154 : vector<2x4x8xf32> to vector<2x4x8x1xf32>
    %156 = tpu.reciprocal %155 {approx = true} : vector<2x4x8x1xf32> -> vector<2x4x8x1xf32>
    %157 = vector.broadcast %156 : vector<2x4x8x1xf32> to vector<2x4x8x8xf32>
    %158 = arith.mulf %153, %157 : vector<2x4x8x8xf32>
    %c0_58 = arith.constant 0 : index
    %c0_59 = arith.constant 0 : index
    %c0_60 = arith.constant 0 : index
    %c0_61 = arith.constant 0 : index
    %159 = vector.load %arg9[%c0_58, %c0_59, %c0_60, %c0_61] : memref<2x4x8x8xf32, #tpu.memory_space<vmem>>, vector<2x4x8x8xf32>
    tpu.vector_store %arg9[%c0_58, %c0_59, %c0_60, %c0_61], %158 {strides = array<i32>} : memref<2x4x8x8xf32, #tpu.memory_space<vmem>>, vector<2x4x8x8xf32>,
    %160 = vector.shape_cast %158 : vector<2x4x8x8xf32> to vector<8x8x8xf32>
    %cst_62 = arith.constant dense<0.000000e+00> : vector<8x8x32xf32>
    %161 = tpu.matmul %160, %142, %cst_62 {dimension_numbers = #tpu.dot_dimension_numbers<[2], [1], [1], [2], [0, 0, 0, 1, 1, 2], [0], [0]>} : vector<8x8x8xf32>, vector<8x8x32xf32>, vector<8x8x32xf32> -> vector<8x8x32xf32>
    %162 = vector.shape_cast %161 : vector<8x8x32xf32> to vector<2x4x8x32xf32>
    %163 = vector.broadcast %2 : vector<1x4x1x32xf32> to vector<2x4x8x32xf32>
    %164 = arith.mulf %162, %163 : vector<2x4x8x32xf32>
    %cst_63 = arith.constant dense<0.000000e+00> : vector<2x8x32xf32>
    %165 = vector.multi_reduction <add>, %164, %cst_63 [1] : vector<2x4x8x32xf32> to vector<2x8x32xf32>
    %166 = vector.shape_cast %165 : vector<2x8x32xf32> to vector<16x32xf32>
    %cst_64 = arith.constant dense<0.000000e+00> : vector<16x32xf32>
    %167 = tpu.matmul %166, %10, %cst_64 {dimension_numbers = #tpu.dot_dimension_numbers<[1], [0], [0], [1], [0, 0, 1, 1], [], []>} : vector<16x32xf32>, vector<32x32xf32>, vector<16x32xf32> -> vector<16x32xf32>
    %168 = vector.broadcast %21 : vector<1x32xf32> to vector<16x32xf32>
    %169 = arith.addf %167, %168 : vector<16x32xf32>
    %170 = vector.shape_cast %169 : vector<16x32xf32> to vector<2x8x32xf32>
    %171 = arith.addf %170, %114 : vector<2x8x32xf32>
    %cst_65 = arith.constant dense<0.000000e+00> : vector<2x8xf32>
    %172 = vector.multi_reduction <add>, %171, %cst_65 [2] : vector<2x8x32xf32> to vector<2x8xf32>
    %173 = vector.shape_cast %172 : vector<2x8xf32> to vector<2x8x1xf32>
    %cst_66 = arith.constant 3.200000e+01 : f32
    %174 = vector.broadcast %cst_66 : f32 to vector<2x8x1xf32>
    %175 = arith.divf %173, %174 : vector<2x8x1xf32>
    %176 = vector.broadcast %175 : vector<2x8x1xf32> to vector<2x8x32xf32>
    %177 = arith.subf %171, %176 : vector<2x8x32xf32>
    %178 = arith.mulf %177, %177 : vector<2x8x32xf32>
    %cst_67 = arith.constant dense<0.000000e+00> : vector<2x8xf32>
    %179 = vector.multi_reduction <add>, %178, %cst_67 [2] : vector<2x8x32xf32> to vector<2x8xf32>
    %180 = vector.shape_cast %179 : vector<2x8xf32> to vector<2x8x1xf32>
    %cst_68 = arith.constant 3.200000e+01 : f32
    %181 = vector.broadcast %cst_68 : f32 to vector<2x8x1xf32>
    %182 = arith.divf %180, %181 : vector<2x8x1xf32>
    %183 = vector.broadcast %175 : vector<2x8x1xf32> to vector<2x8x32xf32>
    %184 = arith.subf %171, %183 : vector<2x8x32xf32>
    %cst_69 = arith.constant 9.99999997E-7 : f32
    %185 = vector.broadcast %cst_69 : f32 to vector<2x8x1xf32>
    %186 = arith.addf %182, %185 : vector<2x8x1xf32>
    %187 = math.rsqrt %186 : vector<2x8x1xf32>
    %188 = vector.broadcast %187 : vector<2x8x1xf32> to vector<2x8x32xf32>
    %189 = arith.mulf %184, %188 : vector<2x8x32xf32>
    %190 = vector.shape_cast %24 : vector<1x32xf32> to vector<1x1x32xf32>
    %191 = vector.broadcast %190 : vector<1x1x32xf32> to vector<2x8x32xf32>
    %192 = arith.mulf %189, %191 : vector<2x8x32xf32>
    %193 = vector.shape_cast %25 : vector<1x32xf32> to vector<1x1x32xf32>
    %194 = vector.broadcast %193 : vector<1x1x32xf32> to vector<2x8x32xf32>
    %195 = arith.addf %192, %194 : vector<2x8x32xf32>
    %196 = vector.shape_cast %195 : vector<2x8x32xf32> to vector<16x32xf32>
    %cst_70 = arith.constant dense<0.000000e+00> : vector<16x64xf32>
    %197 = tpu.matmul %196, %11, %cst_70 {dimension_numbers = #tpu.dot_dimension_numbers<[1], [0], [0], [1], [0, 0, 1, 1], [], []>} : vector<16x32xf32>, vector<32x64xf32>, vector<16x64xf32> -> vector<16x64xf32>
    %198 = vector.broadcast %29 : vector<1x64xf32> to vector<16x64xf32>
    %199 = arith.addf %197, %198 : vector<16x64xf32>
    %cst_71 = arith.constant 0.000000e+00 : f32
    %200 = vector.broadcast %cst_71 : f32 to vector<16x64xf32>
    %201 = arith.maximumf %199, %200 : vector<16x64xf32>
    %cst_72 = arith.constant dense<0.000000e+00> : vector<16x32xf32>
    %202 = tpu.matmul %201, %12, %cst_72 {dimension_numbers = #tpu.dot_dimension_numbers<[1], [0], [0], [1], [0, 0, 1, 1], [], []>} : vector<16x64xf32>, vector<64x32xf32>, vector<16x32xf32> -> vector<16x32xf32>
    %203 = vector.broadcast %28 : vector<1x32xf32> to vector<16x32xf32>
    %204 = arith.addf %202, %203 : vector<16x32xf32>
    %205 = vector.shape_cast %204 : vector<16x32xf32> to vector<2x8x32xf32>
    %206 = arith.addf %205, %195 : vector<2x8x32xf32>
    %cst_73 = arith.constant dense<0.000000e+00> : vector<2x8xf32>
    %207 = vector.multi_reduction <add>, %206, %cst_73 [2] : vector<2x8x32xf32> to vector<2x8xf32>
    %208 = vector.shape_cast %207 : vector<2x8xf32> to vector<2x8x1xf32>
    %cst_74 = arith.constant 3.200000e+01 : f32
    %209 = vector.broadcast %cst_74 : f32 to vector<2x8x1xf32>
    %210 = arith.divf %208, %209 : vector<2x8x1xf32>
    %211 = vector.broadcast %210 : vector<2x8x1xf32> to vector<2x8x32xf32>
    %212 = arith.subf %206, %211 : vector<2x8x32xf32>
    %213 = arith.mulf %212, %212 : vector<2x8x32xf32>
    %cst_75 = arith.constant dense<0.000000e+00> : vector<2x8xf32>
    %214 = vector.multi_reduction <add>, %213, %cst_75 [2] : vector<2x8x32xf32> to vector<2x8xf32>
    %215 = vector.shape_cast %214 : vector<2x8xf32> to vector<2x8x1xf32>
    %cst_76 = arith.constant 3.200000e+01 : f32
    %216 = vector.broadcast %cst_76 : f32 to vector<2x8x1xf32>
    %217 = arith.divf %215, %216 : vector<2x8x1xf32>
    %218 = vector.broadcast %210 : vector<2x8x1xf32> to vector<2x8x32xf32>
    %219 = arith.subf %206, %218 : vector<2x8x32xf32>
    %cst_77 = arith.constant 9.99999997E-7 : f32
    %220 = vector.broadcast %cst_77 : f32 to vector<2x8x1xf32>
    %221 = arith.addf %217, %220 : vector<2x8x1xf32>
    %222 = math.rsqrt %221 : vector<2x8x1xf32>
    %223 = vector.broadcast %222 : vector<2x8x1xf32> to vector<2x8x32xf32>
    %224 = arith.mulf %219, %223 : vector<2x8x32xf32>
    %225 = vector.shape_cast %26 : vector<1x32xf32> to vector<1x1x32xf32>
    %226 = vector.broadcast %225 : vector<1x1x32xf32> to vector<2x8x32xf32>
    %227 = arith.mulf %224, %226 : vector<2x8x32xf32>
    %228 = vector.shape_cast %27 : vector<1x32xf32> to vector<1x1x32xf32>
    %229 = vector.broadcast %228 : vector<1x1x32xf32> to vector<2x8x32xf32>
    %230 = arith.addf %227, %229 : vector<2x8x32xf32>
    %c0_78 = arith.constant 0 : index
    %c0_79 = arith.constant 0 : index
    %c0_80 = arith.constant 0 : index
    %231 = vector.load %arg7[%c0_78, %c0_79, %c0_80] : memref<2x8x32xf32, #tpu.memory_space<vmem>>, vector<2x8x32xf32>
    tpu.vector_store %arg7[%c0_78, %c0_79, %c0_80], %230 {strides = array<i32>} : memref<2x8x32xf32, #tpu.memory_space<vmem>>, vector<2x8x32xf32>,
    return
  }
}

</mosaic_0001>

<llo_original>
// kernel: decoder_layer.1
$region0: #{decoder_layer.1}
  #allocation0 [shape = 'u32[]', space=smem, size = 0x4, offset = 0x4, fixed_abs, tag = 'smem constant byte address 0x4 - core index']
  #allocation1 [shape = 'u32[144,128]{1,0:T(1,128)}', space=vmem, size = 0x12000, scoped, tag = 'internal scratch']
  %s0 = inlined_call_operand.vmem [shape: f32[2,8,32], index: 0, kind: input, shape index: {}]
  %s1 = inlined_call_operand.vmem [shape: f32[2,8,32], index: 1, kind: input, shape index: {}]
  %s2 = inlined_call_operand.vmem [shape: f32[8,8], index: 2, kind: input, shape index: {}]
  %s3 = inlined_call_operand.vmem [shape: f32[2,1,8], index: 3, kind: input, shape index: {}]
  %s4 = inlined_call_operand.vmem [shape: f32[1,4,1,32], index: 4, kind: input, shape index: {}]
  %s5 = inlined_call_operand.vmem [shape: f32[160,128], index: 5, kind: input, shape index: {}]
  %s6 = inlined_call_operand.vmem [shape: f32[16,64], index: 6, kind: input, shape index: {}]
  %s7 = inlined_call_operand.hbm [shape: f32[2,8,32], index: 7, kind: output, shape index: {0}]
  %s8 = inlined_call_operand.hbm [shape: f32[2,4,8,8], index: 8, kind: output, shape index: {1}]
  %s9 = inlined_call_operand.hbm [shape: f32[2,4,8,8], index: 9, kind: output, shape index: {2}]
  %10 = xla_tuple %s7, %s8, %s9
  %s11 = sld [smem:[#allocation0]]
  $region54: #{decoder_layer.1} parent=0
    _
  %s13 = ssub.s32 1, %s11
  %s14 = scalar_select 0, %s13, %s11
  $region1: #{decoder_layer.1} parent=0
    #allocation2 [shape = 'u8[8192]{0}', space=vmem, size = 0x2000, scoped, tag = 'output window, operand 0, single buffered']
    #allocation3 [shape = 's32[1]{0}', space=sflag, size = 0x4, scoped, tag = 'scoped memory for decoder_layer.1']
    #allocation4 [shape = 'u8[32768]{0}', space=vmem, size = 0x8000, scoped, tag = 'output window, operand 1, single buffered']
    #allocation5 [shape = 's32[1]{0}', space=sflag, size = 0x4, scoped, tag = 'scoped memory for decoder_layer.1']
    #allocation6 [shape = 'u8[32768]{0}', space=vmem, size = 0x8000, scoped, tag = 'output window, operand 2, single buffered']
    %15 = vsyncpa [#allocation3], 0
    %16 = vsyncpa [#allocation5], 0
    // Predicated region
    $region2: #{decoder_layer.1} parent=1 // pred_check
      _
    $region3: #{decoder_layer.1} parent=1 // pred_check_branch
      %18 = sbr.rel (0) target = $region5
    $region4: #{decoder_layer.1} parent=1 // pred_region
      _
    $region5: #{decoder_layer.1} parent=1 // pred_fallthru
      _
    // Predicated region
    $region6: #{decoder_layer.1} parent=1 // pred_check
      _
    $region7: #{decoder_layer.1} parent=1 // pred_check_branch
      %20 = sbr.rel (0) target = $region9
    $region8: #{decoder_layer.1} parent=1 // pred_region
      _
    $region9: #{decoder_layer.1} parent=1 // pred_fallthru
      _
    // Predicated region
    $region10: #{decoder_layer.1} parent=1 // pred_check
      _
    $region11: #{decoder_layer.1} parent=1 // pred_check_branch
      %22 = sbr.rel (0) target = $region13
    $region12: #{decoder_layer.1} parent=1 // pred_region
      _
    $region13: #{decoder_layer.1} parent=1 // pred_fallthru
      _
    // Predicated region
    $region14: #{decoder_layer.1} parent=1 // pred_check
      _
    $region15: #{decoder_layer.1} parent=1 // pred_check_branch
      %24 = sbr.rel (0) target = $region17
    $region16: #{decoder_layer.1} parent=1 // pred_region
      _
    $region17: #{decoder_layer.1} parent=1 // pred_fallthru
      _
    // Predicated region
    $region18: #{decoder_layer.1} parent=1 // pred_check
      _
    $region19: #{decoder_layer.1} parent=1 // pred_check_branch
      %26 = sbr.rel (0) target = $region21
    $region20: #{decoder_layer.1} parent=1 // pred_region
      _
    $region21: #{decoder_layer.1} parent=1 // pred_fallthru
      _
    // Predicated region
    $region22: #{decoder_layer.1} parent=1 // pred_check
      _
    $region23: #{decoder_layer.1} parent=1 // pred_check_branch
      %28 = sbr.rel (0) target = $region25
    $region24: #{decoder_layer.1} parent=1 // pred_region
      _
    $region25: #{decoder_layer.1} parent=1 // pred_fallthru
      _
    // Predicated region
    $region26: #{decoder_layer.1} parent=1 // pred_check
      _
    $region27: #{decoder_layer.1} parent=1 // pred_check_branch
      %30 = sbr.rel (0) target = $region29
    $region28: #{decoder_layer.1} parent=1 // pred_region
      _
    $region29: #{decoder_layer.1} parent=1 // pred_fallthru
      _
    %v31 = vld [vmem:[%s0] sm:$0xff]
    %v32 = vld [vmem:[%s0 + $0x8] sm:$0xff]
    %v33 = vld [vmem:[%s1] sm:$0xff]
    %v34 = vld [vmem:[%s1 + $0x8] sm:$0xff]
    %v35 = vld [vmem:[%s4] sm:$0x1]
    %v36 = vld [vmem:[%s4 + $0x1] sm:$0x1]
    %v37 = vld [vmem:[%s4 + $0x2] sm:$0x1]
    %v38 = vld [vmem:[%s4 + $0x3] sm:$0x1]
    %v39 = vld [vmem:[%s5] sm:$0xff]
    %v40 = vld [vmem:[%s5 + $0x8] sm:$0xff]
    %v41 = vld [vmem:[%s5 + $0x10] sm:$0xff]
    %v42 = vld [vmem:[%s5 + $0x18] sm:$0xff]
    %v43 = vld [vmem:[%s5 + $0x20] sm:$0xff]
    %v44 = vld [vmem:[%s5 + $0x28] sm:$0xff]
    %v45 = vld [vmem:[%s5 + $0x30] sm:$0xff]
    %v46 = vld [vmem:[%s5 + $0x38] sm:$0xff]
    %v47 = vld [vmem:[%s5 + $0x40] sm:$0xff]
    %v48 = vld [vmem:[%s5 + $0x48] sm:$0xff]
    %v49 = vld [vmem:[%s5 + $0x50] sm:$0xff]
    %v50 = vld [vmem:[%s5 + $0x58] sm:$0xff]
    %v51 = vld [vmem:[%s5 + $0x60] sm:$0xff]
    %v52 = vld [vmem:[%s5 + $0x68] sm:$0xff]
    %v53 = vld [vmem:[%s5 + $0x70] sm:$0xff]
    %v54 = vld [vmem:[%s5 + $0x78] sm:$0xff]
    %v55 = vld [vmem:[%s5 + $0x80] sm:$0xff]
    %v56 = vld [vmem:[%s5 + $0x88] sm:$0xff]
    %v57 = vld [vmem:[%s5 + $0x90] sm:$0xff]
    %v58 = vld [vmem:[%s5 + $0x98] sm:$0xff]
    %v59 = vld [vmem:[%s6] sm:$0xff]
    %v60 = vld [vmem:[%s6 + $0x8] sm:$0xff]
    %v61 = vld [vmem:[%s2] sm:$0xff]
    %v62 = vld [vmem:[%s3] sm:$0x1]
    %v63 = vld [vmem:[%s3 + $0x1] sm:$0x1]
    %v64 = vlaneseq
    %v65 = vshrl.u32 %v64, 7
    %v66 = vsub.s32 0, %v65
    %v67 = vrot.slane %v59, %v66
    %vm68 = vcmask 261120
    %v70 = vsel %vm68, %v31, 0
    %v73 = vsel %vm68, %v32, 0
    %75 = vmatprep.subr.mxu0 0.0
    %76 = vmatpush1.msra.mxu0 0.0
    %77 = vmatprep.subr.mxu0 0.0
    %78 = vmatpush1.msra.mxu0 0.0
    %79 = vmatprep.subr.mxu0 0.0
    %80 = vmatpush1.msra.mxu0 0.0
    %81 = vmatprep.subr.mxu0 0.0
    %82 = vmatpush1.msra.mxu0 0.0
    %83 = vmatprep.subr.mxu0 0.0
    %84 = vmatpush1.msra.mxu0 0.0
    %85 = vmatprep.subr.mxu0 0.0
    %86 = vmatpush1.msra.mxu0 0.0
    %87 = vmatprep.subr.mxu0 0.0
    %88 = vmatpush1.msra.mxu0 0.0
    %89 = vmatprep.subr.mxu0 0.0
    %90 = vmatpush1.msra.mxu0 0.0
    %91 = vmatprep.subr.mxu0 0.0
    %92 = vmatpush1.msra.mxu0 0.0
    %93 = vmatprep.subr.mxu0 0.0
    %94 = vmatpush1.msra.mxu0 0.0
    %95 = vmatprep.subr.mxu0 0.0
    %96 = vmatpush1.msra.mxu0 0.0
    %97 = vmatprep.subr.mxu0 0.0
    %98 = vmatpush1.msra.mxu0 0.0
    %99 = vmatprep.subr.mxu0 0.0
    %100 = vmatpush1.msra.mxu0 %v42
    %101 = vmatprep.subr.mxu0 0.0
    %102 = vmatpush1.msra.mxu0 %v41
    %103 = vmatprep.subr.mxu0 0.0
    %104 = vmatpush1.msra.mxu0 %v40
    %105 = vmatprep.subr.mxu0 0.0
    %106 = vmatpush1.msra.mxu0 %v39
    %107 = vmatprep.subr.mxu0 0.0
    %108 = vmatpush2.msra.mxu0 0.0
    %109 = vmatprep.subr.mxu0 0.0
    %110 = vmatpush2.msra.mxu0 0.0
    %111 = vmatprep.subr.mxu0 0.0
    %112 = vmatpush2.msra.mxu0 0.0
    %113 = vmatprep.subr.mxu0 0.0
    %114 = vmatpush2.msra.mxu0 0.0
    %115 = vmatprep.subr.mxu0 0.0
    %116 = vmatpush2.msra.mxu0 0.0
    %117 = vmatprep.subr.mxu0 0.0
    %118 = vmatpush2.msra.mxu0 0.0
    %119 = vmatprep.subr.mxu0 0.0
    %120 = vmatpush2.msra.mxu0 0.0
    %121 = vmatprep.subr.mxu0 0.0
    %122 = vmatpush2.msra.mxu0 0.0
    %123 = vmatprep.subr.mxu0 0.0
    %124 = vmatpush2.msra.mxu0 0.0
    %125 = vmatprep.subr.mxu0 0.0
    %126 = vmatpush2.msra.mxu0 0.0
    %127 = vmatprep.subr.mxu0 0.0
    %128 = vmatpush2.msra.mxu0 0.0
    %129 = vmatprep.subr.mxu0 0.0
    %130 = vmatpush2.msra.mxu0 0.0
    %131 = vmatprep.subr.mxu0 0.0
    %132 = vmatpush2.msra.mxu0 0.0
    %133 = vmatprep.subr.mxu0 0.0
    %134 = vmatpush2.msra.mxu0 0.0
    %135 = vmatprep.subr.mxu0 0.0
    %136 = vmatpush2.msra.mxu0 0.0
    %137 = vmatprep.subr.mxu0 0.0
    %138 = vmatpush2.msra.mxu0 0.0
    %139 = vmatprep.mubr.f32.mxu0 0.0
    %140 = vmatmul.mubr.f32.gmra.mxu0 %v70
    %v141 = vpop.f32.mrf.mxu0
    %v142 = vadd.f32 %v67, %v141
    %v143 = vpop.f32.mrf.mxu0
    %144 = vmatprep.mubr.f32.mxu0 0.0
    %145 = vmatmul.mubr.f32.gmra.mxu0 %v73
    %v146 = vpop.f32.mrf.mxu0
    %v147 = vadd.f32 %v67, %v146
    %v148 = vpop.f32.mrf.mxu0
    %149 = vdwg.mxu0
    %v150 = vlaneseq
    %v151 = vshrl.u32 %v150, 7
    %v152 = vsub.s32 1, %v151
    %v153 = vrot.slane %v59, %v152
    %158 = vrot.lane.b32.xlu0 %v39, 96
    %v159 = vpop.permute.xlu0 %158
    %160 = vrot.lane.b32.xlu0 %v40, 96
    %v161 = vpop.permute.xlu0 %160
    %162 = vrot.lane.b32.xlu0 %v41, 96
    %v163 = vpop.permute.xlu0 %162
    %164 = vrot.lane.b32.xlu0 %v42, 96
    %v165 = vpop.permute.xlu0 %164
    %170 = vmatprep.subr.mxu0 0.0
    %171 = vmatpush1.msra.mxu0 0.0
    %172 = vmatprep.subr.mxu0 0.0
    %173 = vmatpush1.msra.mxu0 0.0
    %174 = vmatprep.subr.mxu0 0.0
    %175 = vmatpush1.msra.mxu0 0.0
    %176 = vmatprep.subr.mxu0 0.0
    %177 = vmatpush1.msra.mxu0 0.0
    %178 = vmatprep.subr.mxu0 0.0
    %179 = vmatpush1.msra.mxu0 0.0
    %180 = vmatprep.subr.mxu0 0.0
    %181 = vmatpush1.msra.mxu0 0.0
    %182 = vmatprep.subr.mxu0 0.0
    %183 = vmatpush1.msra.mxu0 0.0
    %184 = vmatprep.subr.mxu0 0.0
    %185 = vmatpush1.msra.mxu0 0.0
    %186 = vmatprep.subr.mxu0 0.0
    %187 = vmatpush1.msra.mxu0 0.0
    %188 = vmatprep.subr.mxu0 0.0
    %189 = vmatpush1.msra.mxu0 0.0
    %190 = vmatprep.subr.mxu0 0.0
    %191 = vmatpush1.msra.mxu0 0.0
    %192 = vmatprep.subr.mxu0 0.0
    %193 = vmatpush1.msra.mxu0 0.0
    %194 = vmatprep.subr.mxu0 0.0
    %195 = vmatpush1.msra.mxu0 %v165
    %196 = vmatprep.subr.mxu0 0.0
    %197 = vmatpush1.msra.mxu0 %v163
    %198 = vmatprep.subr.mxu0 0.0
    %199 = vmatpush1.msra.mxu0 %v161
    %200 = vmatprep.subr.mxu0 0.0
    %201 = vmatpush1.msra.mxu0 %v159
    %202 = vmatprep.subr.mxu0 0.0
    %203 = vmatpush2.msra.mxu0 0.0
    %204 = vmatprep.subr.mxu0 0.0
    %205 = vmatpush2.msra.mxu0 0.0
    %206 = vmatprep.subr.mxu0 0.0
    %207 = vmatpush2.msra.mxu0 0.0
    %208 = vmatprep.subr.mxu0 0.0
    %209 = vmatpush2.msra.mxu0 0.0
    %210 = vmatprep.subr.mxu0 0.0
    %211 = vmatpush2.msra.mxu0 0.0
    %212 = vmatprep.subr.mxu0 0.0
    %213 = vmatpush2.msra.mxu0 0.0
    %214 = vmatprep.subr.mxu0 0.0
    %215 = vmatpush2.msra.mxu0 0.0
    %216 = vmatprep.subr.mxu0 0.0
    %217 = vmatpush2.msra.mxu0 0.0
    %218 = vmatprep.subr.mxu0 0.0
    %219 = vmatpush2.msra.mxu0 0.0
    %220 = vmatprep.subr.mxu0 0.0
    %221 = vmatpush2.msra.mxu0 0.0
    %222 = vmatprep.subr.mxu0 0.0
    %223 = vmatpush2.msra.mxu0 0.0
    %224 = vmatprep.subr.mxu0 0.0
    %225 = vmatpush2.msra.mxu0 0.0
    %226 = vmatprep.subr.mxu0 0.0
    %227 = vmatpush2.msra.mxu0 0.0
    %228 = vmatprep.subr.mxu0 0.0
    %229 = vmatpush2.msra.mxu0 0.0
    %230 = vmatprep.subr.mxu0 0.0
    %231 = vmatpush2.msra.mxu0 0.0
    %232 = vmatprep.subr.mxu0 0.0
    %233 = vmatpush2.msra.mxu0 0.0
    %234 = vmatprep.mubr.f32.mxu0 0.0
    %235 = vmatmul.mubr.f32.gmra.mxu0 %v70
    %v236 = vpop.f32.mrf.mxu0
    %v237 = vadd.f32 %v153, %v236
    %v238 = vpop.f32.mrf.mxu0
    %239 = vmatprep.mubr.f32.mxu0 0.0
    %240 = vmatmul.mubr.f32.gmra.mxu0 %v73
    %v241 = vpop.f32.mrf.mxu0
    %v242 = vadd.f32 %v153, %v241
    %v243 = vpop.f32.mrf.mxu0
    %244 = vdwg.mxu0
    %v245 = vlaneseq
    %v246 = vshrl.u32 %v245, 7
    %v247 = vsub.s32 2, %v246
    %v248 = vrot.slane %v59, %v247
    %249 = vrot.lane.b32.xlu0 %v39, 64
    %v250 = vpop.permute.xlu0 %249
    %251 = vrot.lane.b32.xlu0 %v40, 64
    %v252 = vpop.permute.xlu0 %251
    %253 = vrot.lane.b32.xlu0 %v41, 64
    %v254 = vpop.permute.xlu0 %253
    %255 = vrot.lane.b32.xlu0 %v42, 64
    %v256 = vpop.permute.xlu0 %255
    %261 = vmatprep.subr.mxu0 0.0
    %262 = vmatpush1.msra.mxu0 0.0
    %263 = vmatprep.subr.mxu0 0.0
    %264 = vmatpush1.msra.mxu0 0.0
    %265 = vmatprep.subr.mxu0 0.0
    %266 = vmatpush1.msra.mxu0 0.0
    %267 = vmatprep.subr.mxu0 0.0
    %268 = vmatpush1.msra.mxu0 0.0
    %269 = vmatprep.subr.mxu0 0.0
    %270 = vmatpush1.msra.mxu0 0.0
    %271 = vmatprep.subr.mxu0 0.0
    %272 = vmatpush1.msra.mxu0 0.0
    %273 = vmatprep.subr.mxu0 0.0
    %274 = vmatpush1.msra.mxu0 0.0
    %275 = vmatprep.subr.mxu0 0.0
    %276 = vmatpush1.msra.mxu0 0.0
    %277 = vmatprep.subr.mxu0 0.0
    %278 = vmatpush1.msra.mxu0 0.0
    %279 = vmatprep.subr.mxu0 0.0
    %280 = vmatpush1.msra.mxu0 0.0
    %281 = vmatprep.subr.mxu0 0.0
    %282 = vmatpush1.msra.mxu0 0.0
    %283 = vmatprep.subr.mxu0 0.0
    %284 = vmatpush1.msra.mxu0 0.0
    %285 = vmatprep.subr.mxu0 0.0
    %286 = vmatpush1.msra.mxu0 %v256
    %287 = vmatprep.subr.mxu0 0.0
    %288 = vmatpush1.msra.mxu0 %v254
    %289 = vmatprep.subr.mxu0 0.0
    %290 = vmatpush1.msra.mxu0 %v252
    %291 = vmatprep.subr.mxu0 0.0
    %292 = vmatpush1.msra.mxu0 %v250
    %293 = vmatprep.subr.mxu0 0.0
    %294 = vmatpush2.msra.mxu0 0.0
    %295 = vmatprep.subr.mxu0 0.0
    %296 = vmatpush2.msra.mxu0 0.0
    %297 = vmatprep.subr.mxu0 0.0
    %298 = vmatpush2.msra.mxu0 0.0
    %299 = vmatprep.subr.mxu0 0.0
    %300 = vmatpush2.msra.mxu0 0.0
    %301 = vmatprep.subr.mxu0 0.0
    %302 = vmatpush2.msra.mxu0 0.0
    %303 = vmatprep.subr.mxu0 0.0
    %304 = vmatpush2.msra.mxu0 0.0
    %305 = vmatprep.subr.mxu0 0.0
    %306 = vmatpush2.msra.mxu0 0.0
    %307 = vmatprep.subr.mxu0 0.0
    %308 = vmatpush2.msra.mxu0 0.0
    %309 = vmatprep.subr.mxu0 0.0
    %310 = vmatpush2.msra.mxu0 0.0
    %311 = vmatprep.subr.mxu0 0.0
    %312 = vmatpush2.msra.mxu0 0.0
    %313 = vmatprep.subr.mxu0 0.0
    %314 = vmatpush2.msra.mxu0 0.0
    %315 = vmatprep.subr.mxu0 0.0
    %316 = vmatpush2.msra.mxu0 0.0
    %317 = vmatprep.subr.mxu0 0.0
    %318 = vmatpush2.msra.mxu0 0.0
    %319 = vmatprep.subr.mxu0 0.0
    %320 = vmatpush2.msra.mxu0 0.0
    %321 = vmatprep.subr.mxu0 0.0
    %322 = vmatpush2.msra.mxu0 0.0
    %323 = vmatprep.subr.mxu0 0.0
    %324 = vmatpush2.msra.mxu0 0.0
    %325 = vmatprep.mubr.f32.mxu0 0.0
    %326 = vmatmul.mubr.f32.gmra.mxu0 %v70
    %v327 = vpop.f32.mrf.mxu0
    %v328 = vadd.f32 %v248, %v327
    %v329 = vpop.f32.mrf.mxu0
    %330 = vmatprep.mubr.f32.mxu0 0.0
    %331 = vmatmul.mubr.f32.gmra.mxu0 %v73
    %v332 = vpop.f32.mrf.mxu0
    %v333 = vadd.f32 %v248, %v332
    %v334 = vpop.f32.mrf.mxu0
    %335 = vdwg.mxu0
    %v340 = vlaneseq
    %v341 = vshrl.u32 %v340, 7
    %v342 = vsub.s32 0, %v341
    %v343 = vrot.slane %v35, %v342
    %v344 = vlaneseq
    %v345 = vshrl.u32 %v344, 7
    %v346 = vsub.s32 0, %v345
    %v347 = vrot.slane %v36, %v346
    %v348 = vlaneseq
    %v349 = vshrl.u32 %v348, 7
    %v350 = vsub.s32 0, %v349
    %v351 = vrot.slane %v37, %v350
    %v352 = vlaneseq
    %v353 = vshrl.u32 %v352, 7
    %v354 = vsub.s32 0, %v353
    %v355 = vrot.slane %v38, %v354
    %v360 = vmul.f32 %v142, %v343
    %v361 = vmul.f32 %v142, %v347
    %v362 = vmul.f32 %v142, %v351
    %v363 = vmul.f32 %v142, %v355
    %v364 = vmul.f32 %v147, %v343
    %v365 = vmul.f32 %v147, %v347
    %v366 = vmul.f32 %v147, %v351
    %v367 = vmul.f32 %v147, %v355
    %v369 = vsel %vm68, %v360, 0
    %v372 = vsel %vm68, %v237, 0
    %374 = vmatprep.subr.mxu0 0.0
    %375 = vmatpush1.xpose.msra.mxu0 0.0
    %376 = vmatprep.subr.mxu0 0.0
    %377 = vmatpush1.xpose.msra.mxu0 0.0
    %378 = vmatprep.subr.mxu0 0.0
    %379 = vmatpush1.xpose.msra.mxu0 0.0
    %380 = vmatprep.subr.mxu0 0.0
    %381 = vmatpush1.xpose.msra.mxu0 0.0
    %382 = vmatprep.subr.mxu0 0.0
    %383 = vmatpush1.xpose.msra.mxu0 0.0
    %384 = vmatprep.subr.mxu0 0.0
    %385 = vmatpush1.xpose.msra.mxu0 0.0
    %386 = vmatprep.subr.mxu0 0.0
    %387 = vmatpush1.xpose.msra.mxu0 0.0
    %388 = vmatprep.subr.mxu0 0.0
    %389 = vmatpush1.xpose.msra.mxu0 0.0
    %390 = vmatprep.subr.mxu0 0.0
    %391 = vmatpush1.xpose.msra.mxu0 0.0
    %392 = vmatprep.subr.mxu0 0.0
    %393 = vmatpush1.xpose.msra.mxu0 0.0
    %394 = vmatprep.subr.mxu0 0.0
    %395 = vmatpush1.xpose.msra.mxu0 0.0
    %396 = vmatprep.subr.mxu0 0.0
    %397 = vmatpush1.xpose.msra.mxu0 0.0
    %398 = vmatprep.subr.mxu0 0.0
    %399 = vmatpush1.xpose.msra.mxu0 0.0
    %400 = vmatprep.subr.mxu0 0.0
    %401 = vmatpush1.xpose.msra.mxu0 0.0
    %402 = vmatprep.subr.mxu0 0.0
    %403 = vmatpush1.xpose.msra.mxu0 0.0
    %404 = vmatprep.subr.mxu0 0.0
    %405 = vmatpush1.xpose.msra.mxu0 %v372
    %406 = vmatprep.subr.mxu0 0.0
    %407 = vmatpush2.xpose.msra.mxu0 0.0
    %408 = vmatprep.subr.mxu0 0.0
    %409 = vmatpush2.xpose.msra.mxu0 0.0
    %410 = vmatprep.subr.mxu0 0.0
    %411 = vmatpush2.xpose.msra.mxu0 0.0
    %412 = vmatprep.subr.mxu0 0.0
    %413 = vmatpush2.xpose.msra.mxu0 0.0
    %414 = vmatprep.subr.mxu0 0.0
    %415 = vmatpush2.xpose.msra.mxu0 0.0
    %416 = vmatprep.subr.mxu0 0.0
    %417 = vmatpush2.xpose.msra.mxu0 0.0
    %418 = vmatprep.subr.mxu0 0.0
    %419 = vmatpush2.xpose.msra.mxu0 0.0
    %420 = vmatprep.subr.mxu0 0.0
    %421 = vmatpush2.xpose.msra.mxu0 0.0
    %422 = vmatprep.subr.mxu0 0.0
    %423 = vmatpush2.xpose.msra.mxu0 0.0
    %424 = vmatprep.subr.mxu0 0.0
    %425 = vmatpush2.xpose.msra.mxu0 0.0
    %426 = vmatprep.subr.mxu0 0.0
    %427 = vmatpush2.xpose.msra.mxu0 0.0
    %428 = vmatprep.subr.mxu0 0.0
    %429 = vmatpush2.xpose.msra.mxu0 0.0
    %430 = vmatprep.subr.mxu0 0.0
    %431 = vmatpush2.xpose.msra.mxu0 0.0
    %432 = vmatprep.subr.mxu0 0.0
    %433 = vmatpush2.xpose.msra.mxu0 0.0
    %434 = vmatprep.subr.mxu0 0.0
    %435 = vmatpush2.xpose.msra.mxu0 0.0
    %436 = vmatprep.subr.mxu0 0.0
    %437 = vmatpush2.xpose.msra.mxu0 0.0
    %438 = vmatprep.mubr.f32.mxu0 0.0
    %439 = vmatmul.mubr.f32.gmra.mxu0 %v369
    %v440 = vpop.f32.mrf.mxu0
    %v441 = vadd.f32 0.0, %v440
    %v442 = vpop.f32.mrf.mxu0
    %443 = vdwg.mxu0
    %v445 = vsel %vm68, %v361, 0
    %447 = vmatprep.subr.mxu0 0.0
    %448 = vmatpush1.xpose.msra.mxu0 0.0
    %449 = vmatprep.subr.mxu0 0.0
    %450 = vmatpush1.xpose.msra.mxu0 0.0
    %451 = vmatprep.subr.mxu0 0.0
    %452 = vmatpush1.xpose.msra.mxu0 0.0
    %453 = vmatprep.subr.mxu0 0.0
    %454 = vmatpush1.xpose.msra.mxu0 0.0
    %455 = vmatprep.subr.mxu0 0.0
    %456 = vmatpush1.xpose.msra.mxu0 0.0
    %457 = vmatprep.subr.mxu0 0.0
    %458 = vmatpush1.xpose.msra.mxu0 0.0
    %459 = vmatprep.subr.mxu0 0.0
    %460 = vmatpush1.xpose.msra.mxu0 0.0
    %461 = vmatprep.subr.mxu0 0.0
    %462 = vmatpush1.xpose.msra.mxu0 0.0
    %463 = vmatprep.subr.mxu0 0.0
    %464 = vmatpush1.xpose.msra.mxu0 0.0
    %465 = vmatprep.subr.mxu0 0.0
    %466 = vmatpush1.xpose.msra.mxu0 0.0
    %467 = vmatprep.subr.mxu0 0.0
    %468 = vmatpush1.xpose.msra.mxu0 0.0
    %469 = vmatprep.subr.mxu0 0.0
    %470 = vmatpush1.xpose.msra.mxu0 0.0
    %471 = vmatprep.subr.mxu0 0.0
    %472 = vmatpush1.xpose.msra.mxu0 0.0
    %473 = vmatprep.subr.mxu0 0.0
    %474 = vmatpush1.xpose.msra.mxu0 0.0
    %475 = vmatprep.subr.mxu0 0.0
    %476 = vmatpush1.xpose.msra.mxu0 0.0
    %477 = vmatprep.subr.mxu0 0.0
    %478 = vmatpush1.xpose.msra.mxu0 %v372
    %479 = vmatprep.subr.mxu0 0.0
    %480 = vmatpush2.xpose.msra.mxu0 0.0
    %481 = vmatprep.subr.mxu0 0.0
    %482 = vmatpush2.xpose.msra.mxu0 0.0
    %483 = vmatprep.subr.mxu0 0.0
    %484 = vmatpush2.xpose.msra.mxu0 0.0
    %485 = vmatprep.subr.mxu0 0.0
    %486 = vmatpush2.xpose.msra.mxu0 0.0
    %487 = vmatprep.subr.mxu0 0.0
    %488 = vmatpush2.xpose.msra.mxu0 0.0
    %489 = vmatprep.subr.mxu0 0.0
    %490 = vmatpush2.xpose.msra.mxu0 0.0
    %491 = vmatprep.subr.mxu0 0.0
    %492 = vmatpush2.xpose.msra.mxu0 0.0
    %493 = vmatprep.subr.mxu0 0.0
    %494 = vmatpush2.xpose.msra.mxu0 0.0
    %495 = vmatprep.subr.mxu0 0.0
    %496 = vmatpush2.xpose.msra.mxu0 0.0
    %497 = vmatprep.subr.mxu0 0.0
    %498 = vmatpush2.xpose.msra.mxu0 0.0
    %499 = vmatprep.subr.mxu0 0.0
    %500 = vmatpush2.xpose.msra.mxu0 0.0
    %501 = vmatprep.subr.mxu0 0.0
    %502 = vmatpush2.xpose.msra.mxu0 0.0
    %503 = vmatprep.subr.mxu0 0.0
    %504 = vmatpush2.xpose.msra.mxu0 0.0
    %505 = vmatprep.subr.mxu0 0.0
    %506 = vmatpush2.xpose.msra.mxu0 0.0
    %507 = vmatprep.subr.mxu0 0.0
    %508 = vmatpush2.xpose.msra.mxu0 0.0
    %509 = vmatprep.subr.mxu0 0.0
    %510 = vmatpush2.xpose.msra.mxu0 0.0
    %511 = vmatprep.mubr.f32.mxu0 0.0
    %512 = vmatmul.mubr.f32.gmra.mxu0 %v445
    %v513 = vpop.f32.mrf.mxu0
    %v514 = vadd.f32 0.0, %v513
    %v515 = vpop.f32.mrf.mxu0
    %516 = vdwg.mxu0
    %v518 = vsel %vm68, %v362, 0
    %520 = vmatprep.subr.mxu0 0.0
    %521 = vmatpush1.xpose.msra.mxu0 0.0
    %522 = vmatprep.subr.mxu0 0.0
    %523 = vmatpush1.xpose.msra.mxu0 0.0
    %524 = vmatprep.subr.mxu0 0.0
    %525 = vmatpush1.xpose.msra.mxu0 0.0
    %526 = vmatprep.subr.mxu0 0.0
    %527 = vmatpush1.xpose.msra.mxu0 0.0
    %528 = vmatprep.subr.mxu0 0.0
    %529 = vmatpush1.xpose.msra.mxu0 0.0
    %530 = vmatprep.subr.mxu0 0.0
    %531 = vmatpush1.xpose.msra.mxu0 0.0
    %532 = vmatprep.subr.mxu0 0.0
    %533 = vmatpush1.xpose.msra.mxu0 0.0
    %534 = vmatprep.subr.mxu0 0.0
    %535 = vmatpush1.xpose.msra.mxu0 0.0
    %536 = vmatprep.subr.mxu0 0.0
    %537 = vmatpush1.xpose.msra.mxu0 0.0
    %538 = vmatprep.subr.mxu0 0.0
    %539 = vmatpush1.xpose.msra.mxu0 0.0
    %540 = vmatprep.subr.mxu0 0.0
    %541 = vmatpush1.xpose.msra.mxu0 0.0
    %542 = vmatprep.subr.mxu0 0.0
    %543 = vmatpush1.xpose.msra.mxu0 0.0
    %544 = vmatprep.subr.mxu0 0.0
    %545 = vmatpush1.xpose.msra.mxu0 0.0
    %546 = vmatprep.subr.mxu0 0.0
    %547 = vmatpush1.xpose.msra.mxu0 0.0
    %548 = vmatprep.subr.mxu0 0.0
    %549 = vmatpush1.xpose.msra.mxu0 0.0
    %550 = vmatprep.subr.mxu0 0.0
    %551 = vmatpush1.xpose.msra.mxu0 %v372
    %552 = vmatprep.subr.mxu0 0.0
    %553 = vmatpush2.xpose.msra.mxu0 0.0
    %554 = vmatprep.subr.mxu0 0.0
    %555 = vmatpush2.xpose.msra.mxu0 0.0
    %556 = vmatprep.subr.mxu0 0.0
    %557 = vmatpush2.xpose.msra.mxu0 0.0
    %558 = vmatprep.subr.mxu0 0.0
    %559 = vmatpush2.xpose.msra.mxu0 0.0
    %560 = vmatprep.subr.mxu0 0.0
    %561 = vmatpush2.xpose.msra.mxu0 0.0
    %562 = vmatprep.subr.mxu0 0.0
    %563 = vmatpush2.xpose.msra.mxu0 0.0
    %564 = vmatprep.subr.mxu0 0.0
    %565 = vmatpush2.xpose.msra.mxu0 0.0
    %566 = vmatprep.subr.mxu0 0.0
    %567 = vmatpush2.xpose.msra.mxu0 0.0
    %568 = vmatprep.subr.mxu0 0.0
    %569 = vmatpush2.xpose.msra.mxu0 0.0
    %570 = vmatprep.subr.mxu0 0.0
    %571 = vmatpush2.xpose.msra.mxu0 0.0
    %572 = vmatprep.subr.mxu0 0.0
    %573 = vmatpush2.xpose.msra.mxu0 0.0
    %574 = vmatprep.subr.mxu0 0.0
    %575 = vmatpush2.xpose.msra.mxu0 0.0
    %576 = vmatprep.subr.mxu0 0.0
    %577 = vmatpush2.xpose.msra.mxu0 0.0
    %578 = vmatprep.subr.mxu0 0.0
    %579 = vmatpush2.xpose.msra.mxu0 0.0
    %580 = vmatprep.subr.mxu0 0.0
    %581 = vmatpush2.xpose.msra.mxu0 0.0
    %582 = vmatprep.subr.mxu0 0.0
    %583 = vmatpush2.xpose.msra.mxu0 0.0
    %584 = vmatprep.mubr.f32.mxu0 0.0
    %585 = vmatmul.mubr.f32.gmra.mxu0 %v518
    %v586 = vpop.f32.mrf.mxu0
    %v587 = vadd.f32 0.0, %v586
    %v588 = vpop.f32.mrf.mxu0
    %589 = vdwg.mxu0
    %v591 = vsel %vm68, %v363, 0
    %593 = vmatprep.subr.mxu0 0.0
    %594 = vmatpush1.xpose.msra.mxu0 0.0
    %595 = vmatprep.subr.mxu0 0.0
    %596 = vmatpush1.xpose.msra.mxu0 0.0
    %597 = vmatprep.subr.mxu0 0.0
    %598 = vmatpush1.xpose.msra.mxu0 0.0
    %599 = vmatprep.subr.mxu0 0.0
    %600 = vmatpush1.xpose.msra.mxu0 0.0
    %601 = vmatprep.subr.mxu0 0.0
    %602 = vmatpush1.xpose.msra.mxu0 0.0
    %603 = vmatprep.subr.mxu0 0.0
    %604 = vmatpush1.xpose.msra.mxu0 0.0
    %605 = vmatprep.subr.mxu0 0.0
    %606 = vmatpush1.xpose.msra.mxu0 0.0
    %607 = vmatprep.subr.mxu0 0.0
    %608 = vmatpush1.xpose.msra.mxu0 0.0
    %609 = vmatprep.subr.mxu0 0.0
    %610 = vmatpush1.xpose.msra.mxu0 0.0
    %611 = vmatprep.subr.mxu0 0.0
    %612 = vmatpush1.xpose.msra.mxu0 0.0
    %613 = vmatprep.subr.mxu0 0.0
    %614 = vmatpush1.xpose.msra.mxu0 0.0
    %615 = vmatprep.subr.mxu0 0.0
    %616 = vmatpush1.xpose.msra.mxu0 0.0
    %617 = vmatprep.subr.mxu0 0.0
    %618 = vmatpush1.xpose.msra.mxu0 0.0
    %619 = vmatprep.subr.mxu0 0.0
    %620 = vmatpush1.xpose.msra.mxu0 0.0
    %621 = vmatprep.subr.mxu0 0.0
    %622 = vmatpush1.xpose.msra.mxu0 0.0
    %623 = vmatprep.subr.mxu0 0.0
    %624 = vmatpush1.xpose.msra.mxu0 %v372
    %625 = vmatprep.subr.mxu0 0.0
    %626 = vmatpush2.xpose.msra.mxu0 0.0
    %627 = vmatprep.subr.mxu0 0.0
    %628 = vmatpush2.xpose.msra.mxu0 0.0
    %629 = vmatprep.subr.mxu0 0.0
    %630 = vmatpush2.xpose.msra.mxu0 0.0
    %631 = vmatprep.subr.mxu0 0.0
    %632 = vmatpush2.xpose.msra.mxu0 0.0
    %633 = vmatprep.subr.mxu0 0.0
    %634 = vmatpush2.xpose.msra.mxu0 0.0
    %635 = vmatprep.subr.mxu0 0.0
    %636 = vmatpush2.xpose.msra.mxu0 0.0
    %637 = vmatprep.subr.mxu0 0.0
    %638 = vmatpush2.xpose.msra.mxu0 0.0
    %639 = vmatprep.subr.mxu0 0.0
    %640 = vmatpush2.xpose.msra.mxu0 0.0
    %641 = vmatprep.subr.mxu0 0.0
    %642 = vmatpush2.xpose.msra.mxu0 0.0
    %643 = vmatprep.subr.mxu0 0.0
    %644 = vmatpush2.xpose.msra.mxu0 0.0
    %645 = vmatprep.subr.mxu0 0.0
    %646 = vmatpush2.xpose.msra.mxu0 0.0
    %647 = vmatprep.subr.mxu0 0.0
    %648 = vmatpush2.xpose.msra.mxu0 0.0
    %649 = vmatprep.subr.mxu0 0.0
    %650 = vmatpush2.xpose.msra.mxu0 0.0
    %651 = vmatprep.subr.mxu0 0.0
    %652 = vmatpush2.xpose.msra.mxu0 0.0
    %653 = vmatprep.subr.mxu0 0.0
    %654 = vmatpush2.xpose.msra.mxu0 0.0
    %655 = vmatprep.subr.mxu0 0.0
    %656 = vmatpush2.xpose.msra.mxu0 0.0
    %657 = vmatprep.mubr.f32.mxu0 0.0
    %658 = vmatmul.mubr.f32.gmra.mxu0 %v591
    %v659 = vpop.f32.mrf.mxu0
    %v660 = vadd.f32 0.0, %v659
    %v661 = vpop.f32.mrf.mxu0
    %662 = vdwg.mxu0
    %v664 = vsel %vm68, %v364, 0
    %v667 = vsel %vm68, %v242, 0
    %669 = vmatprep.subr.mxu0 0.0
    %670 = vmatpush1.xpose.msra.mxu0 0.0
    %671 = vmatprep.subr.mxu0 0.0
    %672 = vmatpush1.xpose.msra.mxu0 0.0
    %673 = vmatprep.subr.mxu0 0.0
    %674 = vmatpush1.xpose.msra.mxu0 0.0
    %675 = vmatprep.subr.mxu0 0.0
    %676 = vmatpush1.xpose.msra.mxu0 0.0
    %677 = vmatprep.subr.mxu0 0.0
    %678 = vmatpush1.xpose.msra.mxu0 0.0
    %679 = vmatprep.subr.mxu0 0.0
    %680 = vmatpush1.xpose.msra.mxu0 0.0
    %681 = vmatprep.subr.mxu0 0.0
    %682 = vmatpush1.xpose.msra.mxu0 0.0
    %683 = vmatprep.subr.mxu0 0.0
    %684 = vmatpush1.xpose.msra.mxu0 0.0
    %685 = vmatprep.subr.mxu0 0.0
    %686 = vmatpush1.xpose.msra.mxu0 0.0
    %687 = vmatprep.subr.mxu0 0.0
    %688 = vmatpush1.xpose.msra.mxu0 0.0
    %689 = vmatprep.subr.mxu0 0.0
    %690 = vmatpush1.xpose.msra.mxu0 0.0
    %691 = vmatprep.subr.mxu0 0.0
    %692 = vmatpush1.xpose.msra.mxu0 0.0
    %693 = vmatprep.subr.mxu0 0.0
    %694 = vmatpush1.xpose.msra.mxu0 0.0
    %695 = vmatprep.subr.mxu0 0.0
    %696 = vmatpush1.xpose.msra.mxu0 0.0
    %697 = vmatprep.subr.mxu0 0.0
    %698 = vmatpush1.xpose.msra.mxu0 0.0
    %699 = vmatprep.subr.mxu0 0.0
    %700 = vmatpush1.xpose.msra.mxu0 %v667
    %701 = vmatprep.subr.mxu0 0.0
    %702 = vmatpush2.xpose.msra.mxu0 0.0
    %703 = vmatprep.subr.mxu0 0.0
    %704 = vmatpush2.xpose.msra.mxu0 0.0
    %705 = vmatprep.subr.mxu0 0.0
    %706 = vmatpush2.xpose.msra.mxu0 0.0
    %707 = vmatprep.subr.mxu0 0.0
    %708 = vmatpush2.xpose.msra.mxu0 0.0
    %709 = vmatprep.subr.mxu0 0.0
    %710 = vmatpush2.xpose.msra.mxu0 0.0
    %711 = vmatprep.subr.mxu0 0.0
    %712 = vmatpush2.xpose.msra.mxu0 0.0
    %713 = vmatprep.subr.mxu0 0.0
    %714 = vmatpush2.xpose.msra.mxu0 0.0
    %715 = vmatprep.subr.mxu0 0.0
    %716 = vmatpush2.xpose.msra.mxu0 0.0
    %717 = vmatprep.subr.mxu0 0.0
    %718 = vmatpush2.xpose.msra.mxu0 0.0
    %719 = vmatprep.subr.mxu0 0.0
    %720 = vmatpush2.xpose.msra.mxu0 0.0
    %721 = vmatprep.subr.mxu0 0.0
    %722 = vmatpush2.xpose.msra.mxu0 0.0
    %723 = vmatprep.subr.mxu0 0.0
    %724 = vmatpush2.xpose.msra.mxu0 0.0
    %725 = vmatprep.subr.mxu0 0.0
    %726 = vmatpush2.xpose.msra.mxu0 0.0
    %727 = vmatprep.subr.mxu0 0.0
    %728 = vmatpush2.xpose.msra.mxu0 0.0
    %729 = vmatprep.subr.mxu0 0.0
    %730 = vmatpush2.xpose.msra.mxu0 0.0
    %731 = vmatprep.subr.mxu0 0.0
    %732 = vmatpush2.xpose.msra.mxu0 0.0
    %733 = vmatprep.mubr.f32.mxu0 0.0
    %734 = vmatmul.mubr.f32.gmra.mxu0 %v664
    %v735 = vpop.f32.mrf.mxu0
    %v736 = vadd.f32 0.0, %v735
    %v737 = vpop.f32.mrf.mxu0
    %738 = vdwg.mxu0
    %v740 = vsel %vm68, %v365, 0
    %742 = vmatprep.subr.mxu0 0.0
    %743 = vmatpush1.xpose.msra.mxu0 0.0
    %744 = vmatprep.subr.mxu0 0.0
    %745 = vmatpush1.xpose.msra.mxu0 0.0
    %746 = vmatprep.subr.mxu0 0.0
    %747 = vmatpush1.xpose.msra.mxu0 0.0
    %748 = vmatprep.subr.mxu0 0.0
    %749 = vmatpush1.xpose.msra.mxu0 0.0
    %750 = vmatprep.subr.mxu0 0.0
    %751 = vmatpush1.xpose.msra.mxu0 0.0
    %752 = vmatprep.subr.mxu0 0.0
    %753 = vmatpush1.xpose.msra.mxu0 0.0
    %754 = vmatprep.subr.mxu0 0.0
    %755 = vmatpush1.xpose.msra.mxu0 0.0
    %756 = vmatprep.subr.mxu0 0.0
    %757 = vmatpush1.xpose.msra.mxu0 0.0
    %758 = vmatprep.subr.mxu0 0.0
    %759 = vmatpush1.xpose.msra.mxu0 0.0
    %760 = vmatprep.subr.mxu0 0.0
    %761 = vmatpush1.xpose.msra.mxu0 0.0
    %762 = vmatprep.subr.mxu0 0.0
    %763 = vmatpush1.xpose.msra.mxu0 0.0
    %764 = vmatprep.subr.mxu0 0.0
    %765 = vmatpush1.xpose.msra.mxu0 0.0
    %766 = vmatprep.subr.mxu0 0.0
    %767 = vmatpush1.xpose.msra.mxu0 0.0
    %768 = vmatprep.subr.mxu0 0.0
    %769 = vmatpush1.xpose.msra.mxu0 0.0
    %770 = vmatprep.subr.mxu0 0.0
    %771 = vmatpush1.xpose.msra.mxu0 0.0
    %772 = vmatprep.subr.mxu0 0.0
    %773 = vmatpush1.xpose.msra.mxu0 %v667
    %774 = vmatprep.subr.mxu0 0.0
    %775 = vmatpush2.xpose.msra.mxu0 0.0
    %776 = vmatprep.subr.mxu0 0.0
    %777 = vmatpush2.xpose.msra.mxu0 0.0
    %778 = vmatprep.subr.mxu0 0.0
    %779 = vmatpush2.xpose.msra.mxu0 0.0
    %780 = vmatprep.subr.mxu0 0.0
    %781 = vmatpush2.xpose.msra.mxu0 0.0
    %782 = vmatprep.subr.mxu0 0.0
    %783 = vmatpush2.xpose.msra.mxu0 0.0
    %784 = vmatprep.subr.mxu0 0.0
    %785 = vmatpush2.xpose.msra.mxu0 0.0
    %786 = vmatprep.subr.mxu0 0.0
    %787 = vmatpush2.xpose.msra.mxu0 0.0
    %788 = vmatprep.subr.mxu0 0.0
    %789 = vmatpush2.xpose.msra.mxu0 0.0
    %790 = vmatprep.subr.mxu0 0.0
    %791 = vmatpush2.xpose.msra.mxu0 0.0
    %792 = vmatprep.subr.mxu0 0.0
    %793 = vmatpush2.xpose.msra.mxu0 0.0
    %794 = vmatprep.subr.mxu0 0.0
    %795 = vmatpush2.xpose.msra.mxu0 0.0
    %796 = vmatprep.subr.mxu0 0.0
    %797 = vmatpush2.xpose.msra.mxu0 0.0
    %798 = vmatprep.subr.mxu0 0.0
    %799 = vmatpush2.xpose.msra.mxu0 0.0
    %800 = vmatprep.subr.mxu0 0.0
    %801 = vmatpush2.xpose.msra.mxu0 0.0
    %802 = vmatprep.subr.mxu0 0.0
    %803 = vmatpush2.xpose.msra.mxu0 0.0
    %804 = vmatprep.subr.mxu0 0.0
    %805 = vmatpush2.xpose.msra.mxu0 0.0
    %806 = vmatprep.mubr.f32.mxu0 0.0
    %807 = vmatmul.mubr.f32.gmra.mxu0 %v740
    %v808 = vpop.f32.mrf.mxu0
    %v809 = vadd.f32 0.0, %v808
    %v810 = vpop.f32.mrf.mxu0
    %811 = vdwg.mxu0
    %v813 = vsel %vm68, %v366, 0
    %815 = vmatprep.subr.mxu0 0.0
    %816 = vmatpush1.xpose.msra.mxu0 0.0
    %817 = vmatprep.subr.mxu0 0.0
    %818 = vmatpush1.xpose.msra.mxu0 0.0
    %819 = vmatprep.subr.mxu0 0.0
    %820 = vmatpush1.xpose.msra.mxu0 0.0
    %821 = vmatprep.subr.mxu0 0.0
    %822 = vmatpush1.xpose.msra.mxu0 0.0
    %823 = vmatprep.subr.mxu0 0.0
    %824 = vmatpush1.xpose.msra.mxu0 0.0
    %825 = vmatprep.subr.mxu0 0.0
    %826 = vmatpush1.xpose.msra.mxu0 0.0
    %827 = vmatprep.subr.mxu0 0.0
    %828 = vmatpush1.xpose.msra.mxu0 0.0
    %829 = vmatprep.subr.mxu0 0.0
    %830 = vmatpush1.xpose.msra.mxu0 0.0
    %831 = vmatprep.subr.mxu0 0.0
    %832 = vmatpush1.xpose.msra.mxu0 0.0
    %833 = vmatprep.subr.mxu0 0.0
    %834 = vmatpush1.xpose.msra.mxu0 0.0
    %835 = vmatprep.subr.mxu0 0.0
    %836 = vmatpush1.xpose.msra.mxu0 0.0
    %837 = vmatprep.subr.mxu0 0.0
    %838 = vmatpush1.xpose.msra.mxu0 0.0
    %839 = vmatprep.subr.mxu0 0.0
    %840 = vmatpush1.xpose.msra.mxu0 0.0
    %841 = vmatprep.subr.mxu0 0.0
    %842 = vmatpush1.xpose.msra.mxu0 0.0
    %843 = vmatprep.subr.mxu0 0.0
    %844 = vmatpush1.xpose.msra.mxu0 0.0
    %845 = vmatprep.subr.mxu0 0.0
    %846 = vmatpush1.xpose.msra.mxu0 %v667
    %847 = vmatprep.subr.mxu0 0.0
    %848 = vmatpush2.xpose.msra.mxu0 0.0
    %849 = vmatprep.subr.mxu0 0.0
    %850 = vmatpush2.xpose.msra.mxu0 0.0
    %851 = vmatprep.subr.mxu0 0.0
    %852 = vmatpush2.xpose.msra.mxu0 0.0
    %853 = vmatprep.subr.mxu0 0.0
    %854 = vmatpush2.xpose.msra.mxu0 0.0
    %855 = vmatprep.subr.mxu0 0.0
    %856 = vmatpush2.xpose.msra.mxu0 0.0
    %857 = vmatprep.subr.mxu0 0.0
    %858 = vmatpush2.xpose.msra.mxu0 0.0
    %859 = vmatprep.subr.mxu0 0.0
    %860 = vmatpush2.xpose.msra.mxu0 0.0
    %861 = vmatprep.subr.mxu0 0.0
    %862 = vmatpush2.xpose.msra.mxu0 0.0
    %863 = vmatprep.subr.mxu0 0.0
    %864 = vmatpush2.xpose.msra.mxu0 0.0
    %865 = vmatprep.subr.mxu0 0.0
    %866 = vmatpush2.xpose.msra.mxu0 0.0
    %867 = vmatprep.subr.mxu0 0.0
    %868 = vmatpush2.xpose.msra.mxu0 0.0
    %869 = vmatprep.subr.mxu0 0.0
    %870 = vmatpush2.xpose.msra.mxu0 0.0
    %871 = vmatprep.subr.mxu0 0.0
    %872 = vmatpush2.xpose.msra.mxu0 0.0
    %873 = vmatprep.subr.mxu0 0.0
    %874 = vmatpush2.xpose.msra.mxu0 0.0
    %875 = vmatprep.subr.mxu0 0.0
    %876 = vmatpush2.xpose.msra.mxu0 0.0
    %877 = vmatprep.subr.mxu0 0.0
    %878 = vmatpush2.xpose.msra.mxu0 0.0
    %879 = vmatprep.mubr.f32.mxu0 0.0
    %880 = vmatmul.mubr.f32.gmra.mxu0 %v813
    %v881 = vpop.f32.mrf.mxu0
    %v882 = vadd.f32 0.0, %v881
    %v883 = vpop.f32.mrf.mxu0
    %884 = vdwg.mxu0
    %v886 = vsel %vm68, %v367, 0
    %888 = vmatprep.subr.mxu0 0.0
    %889 = vmatpush1.xpose.msra.mxu0 0.0
    %890 = vmatprep.subr.mxu0 0.0
    %891 = vmatpush1.xpose.msra.mxu0 0.0
    %892 = vmatprep.subr.mxu0 0.0
    %893 = vmatpush1.xpose.msra.mxu0 0.0
    %894 = vmatprep.subr.mxu0 0.0
    %895 = vmatpush1.xpose.msra.mxu0 0.0
    %896 = vmatprep.subr.mxu0 0.0
    %897 = vmatpush1.xpose.msra.mxu0 0.0
    %898 = vmatprep.subr.mxu0 0.0
    %899 = vmatpush1.xpose.msra.mxu0 0.0
    %900 = vmatprep.subr.mxu0 0.0
    %901 = vmatpush1.xpose.msra.mxu0 0.0
    %902 = vmatprep.subr.mxu0 0.0
    %903 = vmatpush1.xpose.msra.mxu0 0.0
    %904 = vmatprep.subr.mxu0 0.0
    %905 = vmatpush1.xpose.msra.mxu0 0.0
    %906 = vmatprep.subr.mxu0 0.0
    %907 = vmatpush1.xpose.msra.mxu0 0.0
    %908 = vmatprep.subr.mxu0 0.0
    %909 = vmatpush1.xpose.msra.mxu0 0.0
    %910 = vmatprep.subr.mxu0 0.0
    %911 = vmatpush1.xpose.msra.mxu0 0.0
    %912 = vmatprep.subr.mxu0 0.0
    %913 = vmatpush1.xpose.msra.mxu0 0.0
    %914 = vmatprep.subr.mxu0 0.0
    %915 = vmatpush1.xpose.msra.mxu0 0.0
    %916 = vmatprep.subr.mxu0 0.0
    %917 = vmatpush1.xpose.msra.mxu0 0.0
    %918 = vmatprep.subr.mxu0 0.0
    %919 = vmatpush1.xpose.msra.mxu0 %v667
    %920 = vmatprep.subr.mxu0 0.0
    %921 = vmatpush2.xpose.msra.mxu0 0.0
    %922 = vmatprep.subr.mxu0 0.0
    %923 = vmatpush2.xpose.msra.mxu0 0.0
    %924 = vmatprep.subr.mxu0 0.0
    %925 = vmatpush2.xpose.msra.mxu0 0.0
    %926 = vmatprep.subr.mxu0 0.0
    %927 = vmatpush2.xpose.msra.mxu0 0.0
    %928 = vmatprep.subr.mxu0 0.0
    %929 = vmatpush2.xpose.msra.mxu0 0.0
    %930 = vmatprep.subr.mxu0 0.0
    %931 = vmatpush2.xpose.msra.mxu0 0.0
    %932 = vmatprep.subr.mxu0 0.0
    %933 = vmatpush2.xpose.msra.mxu0 0.0
    %934 = vmatprep.subr.mxu0 0.0
    %935 = vmatpush2.xpose.msra.mxu0 0.0
    %936 = vmatprep.subr.mxu0 0.0
    %937 = vmatpush2.xpose.msra.mxu0 0.0
    %938 = vmatprep.subr.mxu0 0.0
    %939 = vmatpush2.xpose.msra.mxu0 0.0
    %940 = vmatprep.subr.mxu0 0.0
    %941 = vmatpush2.xpose.msra.mxu0 0.0
    %942 = vmatprep.subr.mxu0 0.0
    %943 = vmatpush2.xpose.msra.mxu0 0.0
    %944 = vmatprep.subr.mxu0 0.0
    %945 = vmatpush2.xpose.msra.mxu0 0.0
    %946 = vmatprep.subr.mxu0 0.0
    %947 = vmatpush2.xpose.msra.mxu0 0.0
    %948 = vmatprep.subr.mxu0 0.0
    %949 = vmatpush2.xpose.msra.mxu0 0.0
    %950 = vmatprep.subr.mxu0 0.0
    %951 = vmatpush2.xpose.msra.mxu0 0.0
    %952 = vmatprep.mubr.f32.mxu0 0.0
    %953 = vmatmul.mubr.f32.gmra.mxu0 %v886
    %v954 = vpop.f32.mrf.mxu0
    %v955 = vadd.f32 0.0, %v954
    %v956 = vpop.f32.mrf.mxu0
    %957 = vdwg.mxu0
    %v958 = vmul.f32 %v61, -1e+09
    %v959 = vadd.f32 %v441, %v958
    %v960 = vadd.f32 %v514, %v958
    %v961 = vadd.f32 %v587, %v958
    %v962 = vadd.f32 %v660, %v958
    %v963 = vadd.f32 %v736, %v958
    %v964 = vadd.f32 %v809, %v958
    %v965 = vadd.f32 %v882, %v958
    %v966 = vadd.f32 %v955, %v958
    %vm967 = vcmask 64512
    %v968 = vsel %vm967, %v959, -inf
    %969 = vmax.xlane.f32.xlu0 %v968
    %v970 = vpop.xlane.xlu0 %969
    %v971 = vsel %vm967, %v960, -inf
    %972 = vmax.xlane.f32.xlu0 %v971
    %v973 = vpop.xlane.xlu0 %972
    %v974 = vsel %vm967, %v961, -inf
    %975 = vmax.xlane.f32.xlu0 %v974
    %v976 = vpop.xlane.xlu0 %975
    %v977 = vsel %vm967, %v962, -inf
    %978 = vmax.xlane.f32.xlu0 %v977
    %v979 = vpop.xlane.xlu0 %978
    %v980 = vsel %vm967, %v963, -inf
    %981 = vmax.xlane.f32.xlu0 %v980
    %v982 = vpop.xlane.xlu0 %981
    %v983 = vsel %vm967, %v964, -inf
    %984 = vmax.xlane.f32.xlu0 %v983
    %v985 = vpop.xlane.xlu0 %984
    %v986 = vsel %vm967, %v965, -inf
    %987 = vmax.xlane.f32.xlu0 %v986
    %v988 = vpop.xlane.xlu0 %987
    %v989 = vsel %vm967, %v966, -inf
    %990 = vmax.xlane.f32.xlu0 %v989
    %v991 = vpop.xlane.xlu0 %990
    %v992 = vsub.f32 %v959, %v970
    %v993 = vsub.f32 %v960, %v973
    %v994 = vsub.f32 %v961, %v976
    %v995 = vsub.f32 %v962, %v979
    %v996 = vsub.f32 %v963, %v982
    %v997 = vsub.f32 %v964, %v985
    %v998 = vsub.f32 %v965, %v988
    %v999 = vsub.f32 %v966, %v991
    %v1000 = vmul.f32 %v992, 1.442695
    %v1001 = vpow.pop %v1000
    %v1002 = vmul.f32 %v993, 1.442695
    %v1003 = vpow.pop %v1002
    %v1004 = vmul.f32 %v994, 1.442695
    %v1005 = vpow.pop %v1004
    %v1006 = vmul.f32 %v995, 1.442695
    %v1007 = vpow.pop %v1006
    %v1008 = vmul.f32 %v996, 1.442695
    %v1009 = vpow.pop %v1008
    %v1010 = vmul.f32 %v997, 1.442695
    %v1011 = vpow.pop %v1010
    %v1012 = vmul.f32 %v998, 1.442695
    %v1013 = vpow.pop %v1012
    %v1014 = vmul.f32 %v999, 1.442695
    %v1015 = vpow.pop %v1014
    %v1016 = vsel %vm967, %v1001, 0.0
    %1017 = vadd.xlane.f32.xlu0 %v1016
    %v1018 = vpop.xlane.xlu0 %1017
    %v1019 = vsel %vm967, %v1003, 0.0
    %1020 = vadd.xlane.f32.xlu0 %v1019
    %v1021 = vpop.xlane.xlu0 %1020
    %v1022 = vsel %vm967, %v1005, 0.0
    %1023 = vadd.xlane.f32.xlu0 %v1022
    %v1024 = vpop.xlane.xlu0 %1023
    %v1025 = vsel %vm967, %v1007, 0.0
    %1026 = vadd.xlane.f32.xlu0 %v1025
    %v1027 = vpop.xlane.xlu0 %1026
    %v1028 = vsel %vm967, %v1009, 0.0
    %1029 = vadd.xlane.f32.xlu0 %v1028
    %v1030 = vpop.xlane.xlu0 %1029
    %v1031 = vsel %vm967, %v1011, 0.0
    %1032 = vadd.xlane.f32.xlu0 %v1031
    %v1033 = vpop.xlane.xlu0 %1032
    %v1034 = vsel %vm967, %v1013, 0.0
    %1035 = vadd.xlane.f32.xlu0 %v1034
    %v1036 = vpop.xlane.xlu0 %1035
    %v1037 = vsel %vm967, %v1015, 0.0
    %1038 = vadd.xlane.f32.xlu0 %v1037
    %v1039 = vpop.xlane.xlu0 %1038
    %v1040 = vrcp.pop %v1018
    %v1041 = vrcp.pop %v1021
    %v1042 = vrcp.pop %v1024
    %v1043 = vrcp.pop %v1027
    %v1044 = vrcp.pop %v1030
    %v1045 = vrcp.pop %v1033
    %v1046 = vrcp.pop %v1036
    %v1047 = vrcp.pop %v1039
    %v1048 = vmul.f32 %v1001, %v1040
    %v1049 = vmul.f32 %v1003, %v1041
    %v1050 = vmul.f32 %v1005, %v1042
    %v1051 = vmul.f32 %v1007, %v1043
    %v1052 = vmul.f32 %v1009, %v1044
    %v1053 = vmul.f32 %v1011, %v1045
    %v1054 = vmul.f32 %v1013, %v1046
    %v1055 = vmul.f32 %v1015, %v1047
    %1056 = vst.msk [vmem:[#allocation4] sm:$0xff] %vm967, %v1048
    %1057 = vst.msk [vmem:[#allocation4 + $0x8] sm:$0xff] %vm967, %v1049
    %1058 = vst.msk [vmem:[#allocation4 + $0x10] sm:$0xff] %vm967, %v1050
    %1059 = vst.msk [vmem:[#allocation4 + $0x18] sm:$0xff] %vm967, %v1051
    %1060 = vst.msk [vmem:[#allocation4 + $0x20] sm:$0xff] %vm967, %v1052
    %1061 = vst.msk [vmem:[#allocation4 + $0x28] sm:$0xff] %vm967, %v1053
    %1062 = vst.msk [vmem:[#allocation4 + $0x30] sm:$0xff] %vm967, %v1054
    %1063 = vst.msk [vmem:[#allocation4 + $0x38] sm:$0xff] %vm967, %v1055
    %v1065 = vsel %vm967, %v1048, 0
    %1067 = vmatprep.subr.mxu0 0.0
    %1068 = vmatpush1.msra.mxu0 0.0
    %1069 = vmatprep.subr.mxu0 0.0
    %1070 = vmatpush1.msra.mxu0 0.0
    %1071 = vmatprep.subr.mxu0 0.0
    %1072 = vmatpush1.msra.mxu0 0.0
    %1073 = vmatprep.subr.mxu0 0.0
    %1074 = vmatpush1.msra.mxu0 0.0
    %1075 = vmatprep.subr.mxu0 0.0
    %1076 = vmatpush1.msra.mxu0 0.0
    %1077 = vmatprep.subr.mxu0 0.0
    %1078 = vmatpush1.msra.mxu0 0.0
    %1079 = vmatprep.subr.mxu0 0.0
    %1080 = vmatpush1.msra.mxu0 0.0
    %1081 = vmatprep.subr.mxu0 0.0
    %1082 = vmatpush1.msra.mxu0 0.0
    %1083 = vmatprep.subr.mxu0 0.0
    %1084 = vmatpush1.msra.mxu0 0.0
    %1085 = vmatprep.subr.mxu0 0.0
    %1086 = vmatpush1.msra.mxu0 0.0
    %1087 = vmatprep.subr.mxu0 0.0
    %1088 = vmatpush1.msra.mxu0 0.0
    %1089 = vmatprep.subr.mxu0 0.0
    %1090 = vmatpush1.msra.mxu0 0.0
    %1091 = vmatprep.subr.mxu0 0.0
    %1092 = vmatpush1.msra.mxu0 0.0
    %1093 = vmatprep.subr.mxu0 0.0
    %1094 = vmatpush1.msra.mxu0 0.0
    %1095 = vmatprep.subr.mxu0 0.0
    %1096 = vmatpush1.msra.mxu0 0.0
    %1097 = vmatprep.subr.mxu0 0.0
    %1098 = vmatpush1.msra.mxu0 %v328
    %1099 = vmatprep.subr.mxu0 0.0
    %1100 = vmatpush2.msra.mxu0 0.0
    %1101 = vmatprep.subr.mxu0 0.0
    %1102 = vmatpush2.msra.mxu0 0.0
    %1103 = vmatprep.subr.mxu0 0.0
    %1104 = vmatpush2.msra.mxu0 0.0
    %1105 = vmatprep.subr.mxu0 0.0
    %1106 = vmatpush2.msra.mxu0 0.0
    %1107 = vmatprep.subr.mxu0 0.0
    %1108 = vmatpush2.msra.mxu0 0.0
    %1109 = vmatprep.subr.mxu0 0.0
    %1110 = vmatpush2.msra.mxu0 0.0
    %1111 = vmatprep.subr.mxu0 0.0
    %1112 = vmatpush2.msra.mxu0 0.0
    %1113 = vmatprep.subr.mxu0 0.0
    %1114 = vmatpush2.msra.mxu0 0.0
    %1115 = vmatprep.subr.mxu0 0.0
    %1116 = vmatpush2.msra.mxu0 0.0
    %1117 = vmatprep.subr.mxu0 0.0
    %1118 = vmatpush2.msra.mxu0 0.0
    %1119 = vmatprep.subr.mxu0 0.0
    %1120 = vmatpush2.msra.mxu0 0.0
    %1121 = vmatprep.subr.mxu0 0.0
    %1122 = vmatpush2.msra.mxu0 0.0
    %1123 = vmatprep.subr.mxu0 0.0
    %1124 = vmatpush2.msra.mxu0 0.0
    %1125 = vmatprep.subr.mxu0 0.0
    %1126 = vmatpush2.msra.mxu0 0.0
    %1127 = vmatprep.subr.mxu0 0.0
    %1128 = vmatpush2.msra.mxu0 0.0
    %1129 = vmatprep.subr.mxu0 0.0
    %1130 = vmatpush2.msra.mxu0 0.0
    %1131 = vmatprep.mubr.f32.mxu0 0.0
    %1132 = vmatmul.mubr.f32.gmra.mxu0 %v1065
    %v1133 = vpop.f32.mrf.mxu0
    %v1134 = vadd.f32 0.0, %v1133
    %v1135 = vpop.f32.mrf.mxu0
    %1136 = vdwg.mxu0
    %v1138 = vsel %vm967, %v1049, 0
    %1140 = vmatprep.subr.mxu0 0.0
    %1141 = vmatpush1.msra.mxu0 0.0
    %1142 = vmatprep.subr.mxu0 0.0
    %1143 = vmatpush1.msra.mxu0 0.0
    %1144 = vmatprep.subr.mxu0 0.0
    %1145 = vmatpush1.msra.mxu0 0.0
    %1146 = vmatprep.subr.mxu0 0.0
    %1147 = vmatpush1.msra.mxu0 0.0
    %1148 = vmatprep.subr.mxu0 0.0
    %1149 = vmatpush1.msra.mxu0 0.0
    %1150 = vmatprep.subr.mxu0 0.0
    %1151 = vmatpush1.msra.mxu0 0.0
    %1152 = vmatprep.subr.mxu0 0.0
    %1153 = vmatpush1.msra.mxu0 0.0
    %1154 = vmatprep.subr.mxu0 0.0
    %1155 = vmatpush1.msra.mxu0 0.0
    %1156 = vmatprep.subr.mxu0 0.0
    %1157 = vmatpush1.msra.mxu0 0.0
    %1158 = vmatprep.subr.mxu0 0.0
    %1159 = vmatpush1.msra.mxu0 0.0
    %1160 = vmatprep.subr.mxu0 0.0
    %1161 = vmatpush1.msra.mxu0 0.0
    %1162 = vmatprep.subr.mxu0 0.0
    %1163 = vmatpush1.msra.mxu0 0.0
    %1164 = vmatprep.subr.mxu0 0.0
    %1165 = vmatpush1.msra.mxu0 0.0
    %1166 = vmatprep.subr.mxu0 0.0
    %1167 = vmatpush1.msra.mxu0 0.0
    %1168 = vmatprep.subr.mxu0 0.0
    %1169 = vmatpush1.msra.mxu0 0.0
    %1170 = vmatprep.subr.mxu0 0.0
    %1171 = vmatpush1.msra.mxu0 %v328
    %1172 = vmatprep.subr.mxu0 0.0
    %1173 = vmatpush2.msra.mxu0 0.0
    %1174 = vmatprep.subr.mxu0 0.0
    %1175 = vmatpush2.msra.mxu0 0.0
    %1176 = vmatprep.subr.mxu0 0.0
    %1177 = vmatpush2.msra.mxu0 0.0
    %1178 = vmatprep.subr.mxu0 0.0
    %1179 = vmatpush2.msra.mxu0 0.0
    %1180 = vmatprep.subr.mxu0 0.0
    %1181 = vmatpush2.msra.mxu0 0.0
    %1182 = vmatprep.subr.mxu0 0.0
    %1183 = vmatpush2.msra.mxu0 0.0
    %1184 = vmatprep.subr.mxu0 0.0
    %1185 = vmatpush2.msra.mxu0 0.0
    %1186 = vmatprep.subr.mxu0 0.0
    %1187 = vmatpush2.msra.mxu0 0.0
    %1188 = vmatprep.subr.mxu0 0.0
    %1189 = vmatpush2.msra.mxu0 0.0
    %1190 = vmatprep.subr.mxu0 0.0
    %1191 = vmatpush2.msra.mxu0 0.0
    %1192 = vmatprep.subr.mxu0 0.0
    %1193 = vmatpush2.msra.mxu0 0.0
    %1194 = vmatprep.subr.mxu0 0.0
    %1195 = vmatpush2.msra.mxu0 0.0
    %1196 = vmatprep.subr.mxu0 0.0
    %1197 = vmatpush2.msra.mxu0 0.0
    %1198 = vmatprep.subr.mxu0 0.0
    %1199 = vmatpush2.msra.mxu0 0.0
    %1200 = vmatprep.subr.mxu0 0.0
    %1201 = vmatpush2.msra.mxu0 0.0
    %1202 = vmatprep.subr.mxu0 0.0
    %1203 = vmatpush2.msra.mxu0 0.0
    %1204 = vmatprep.mubr.f32.mxu0 0.0
    %1205 = vmatmul.mubr.f32.gmra.mxu0 %v1138
    %v1206 = vpop.f32.mrf.mxu0
    %v1207 = vadd.f32 0.0, %v1206
    %v1208 = vpop.f32.mrf.mxu0
    %1209 = vdwg.mxu0
    %v1211 = vsel %vm967, %v1050, 0
    %1213 = vmatprep.subr.mxu0 0.0
    %1214 = vmatpush1.msra.mxu0 0.0
    %1215 = vmatprep.subr.mxu0 0.0
    %1216 = vmatpush1.msra.mxu0 0.0
    %1217 = vmatprep.subr.mxu0 0.0
    %1218 = vmatpush1.msra.mxu0 0.0
    %1219 = vmatprep.subr.mxu0 0.0
    %1220 = vmatpush1.msra.mxu0 0.0
    %1221 = vmatprep.subr.mxu0 0.0
    %1222 = vmatpush1.msra.mxu0 0.0
    %1223 = vmatprep.subr.mxu0 0.0
    %1224 = vmatpush1.msra.mxu0 0.0
    %1225 = vmatprep.subr.mxu0 0.0
    %1226 = vmatpush1.msra.mxu0 0.0
    %1227 = vmatprep.subr.mxu0 0.0
    %1228 = vmatpush1.msra.mxu0 0.0
    %1229 = vmatprep.subr.mxu0 0.0
    %1230 = vmatpush1.msra.mxu0 0.0
    %1231 = vmatprep.subr.mxu0 0.0
    %1232 = vmatpush1.msra.mxu0 0.0
    %1233 = vmatprep.subr.mxu0 0.0
    %1234 = vmatpush1.msra.mxu0 0.0
    %1235 = vmatprep.subr.mxu0 0.0
    %1236 = vmatpush1.msra.mxu0 0.0
    %1237 = vmatprep.subr.mxu0 0.0
    %1238 = vmatpush1.msra.mxu0 0.0
    %1239 = vmatprep.subr.mxu0 0.0
    %1240 = vmatpush1.msra.mxu0 0.0
    %1241 = vmatprep.subr.mxu0 0.0
    %1242 = vmatpush1.msra.mxu0 0.0
    %1243 = vmatprep.subr.mxu0 0.0
    %1244 = vmatpush1.msra.mxu0 %v328
    %1245 = vmatprep.subr.mxu0 0.0
    %1246 = vmatpush2.msra.mxu0 0.0
    %1247 = vmatprep.subr.mxu0 0.0
    %1248 = vmatpush2.msra.mxu0 0.0
    %1249 = vmatprep.subr.mxu0 0.0
    %1250 = vmatpush2.msra.mxu0 0.0
    %1251 = vmatprep.subr.mxu0 0.0
    %1252 = vmatpush2.msra.mxu0 0.0
    %1253 = vmatprep.subr.mxu0 0.0
    %1254 = vmatpush2.msra.mxu0 0.0
    %1255 = vmatprep.subr.mxu0 0.0
    %1256 = vmatpush2.msra.mxu0 0.0
    %1257 = vmatprep.subr.mxu0 0.0
    %1258 = vmatpush2.msra.mxu0 0.0
    %1259 = vmatprep.subr.mxu0 0.0
    %1260 = vmatpush2.msra.mxu0 0.0
    %1261 = vmatprep.subr.mxu0 0.0
    %1262 = vmatpush2.msra.mxu0 0.0
    %1263 = vmatprep.subr.mxu0 0.0
    %1264 = vmatpush2.msra.mxu0 0.0
    %1265 = vmatprep.subr.mxu0 0.0
    %1266 = vmatpush2.msra.mxu0 0.0
    %1267 = vmatprep.subr.mxu0 0.0
    %1268 = vmatpush2.msra.mxu0 0.0
    %1269 = vmatprep.subr.mxu0 0.0
    %1270 = vmatpush2.msra.mxu0 0.0
    %1271 = vmatprep.subr.mxu0 0.0
    %1272 = vmatpush2.msra.mxu0 0.0
    %1273 = vmatprep.subr.mxu0 0.0
    %1274 = vmatpush2.msra.mxu0 0.0
    %1275 = vmatprep.subr.mxu0 0.0
    %1276 = vmatpush2.msra.mxu0 0.0
    %1277 = vmatprep.mubr.f32.mxu0 0.0
    %1278 = vmatmul.mubr.f32.gmra.mxu0 %v1211
    %v1279 = vpop.f32.mrf.mxu0
    %v1280 = vadd.f32 0.0, %v1279
    %v1281 = vpop.f32.mrf.mxu0
    %1282 = vdwg.mxu0
    %v1284 = vsel %vm967, %v1051, 0
    %1286 = vmatprep.subr.mxu0 0.0
    %1287 = vmatpush1.msra.mxu0 0.0
    %1288 = vmatprep.subr.mxu0 0.0
    %1289 = vmatpush1.msra.mxu0 0.0
    %1290 = vmatprep.subr.mxu0 0.0
    %1291 = vmatpush1.msra.mxu0 0.0
    %1292 = vmatprep.subr.mxu0 0.0
    %1293 = vmatpush1.msra.mxu0 0.0
    %1294 = vmatprep.subr.mxu0 0.0
    %1295 = vmatpush1.msra.mxu0 0.0
    %1296 = vmatprep.subr.mxu0 0.0
    %1297 = vmatpush1.msra.mxu0 0.0
    %1298 = vmatprep.subr.mxu0 0.0
    %1299 = vmatpush1.msra.mxu0 0.0
    %1300 = vmatprep.subr.mxu0 0.0
    %1301 = vmatpush1.msra.mxu0 0.0
    %1302 = vmatprep.subr.mxu0 0.0
    %1303 = vmatpush1.msra.mxu0 0.0
    %1304 = vmatprep.subr.mxu0 0.0
    %1305 = vmatpush1.msra.mxu0 0.0
    %1306 = vmatprep.subr.mxu0 0.0
    %1307 = vmatpush1.msra.mxu0 0.0
    %1308 = vmatprep.subr.mxu0 0.0
    %1309 = vmatpush1.msra.mxu0 0.0
    %1310 = vmatprep.subr.mxu0 0.0
    %1311 = vmatpush1.msra.mxu0 0.0
    %1312 = vmatprep.subr.mxu0 0.0
    %1313 = vmatpush1.msra.mxu0 0.0
    %1314 = vmatprep.subr.mxu0 0.0
    %1315 = vmatpush1.msra.mxu0 0.0
    %1316 = vmatprep.subr.mxu0 0.0
    %1317 = vmatpush1.msra.mxu0 %v328
    %1318 = vmatprep.subr.mxu0 0.0
    %1319 = vmatpush2.msra.mxu0 0.0
    %1320 = vmatprep.subr.mxu0 0.0
    %1321 = vmatpush2.msra.mxu0 0.0
    %1322 = vmatprep.subr.mxu0 0.0
    %1323 = vmatpush2.msra.mxu0 0.0
    %1324 = vmatprep.subr.mxu0 0.0
    %1325 = vmatpush2.msra.mxu0 0.0
    %1326 = vmatprep.subr.mxu0 0.0
    %1327 = vmatpush2.msra.mxu0 0.0
    %1328 = vmatprep.subr.mxu0 0.0
    %1329 = vmatpush2.msra.mxu0 0.0
    %1330 = vmatprep.subr.mxu0 0.0
    %1331 = vmatpush2.msra.mxu0 0.0
    %1332 = vmatprep.subr.mxu0 0.0
    %1333 = vmatpush2.msra.mxu0 0.0
    %1334 = vmatprep.subr.mxu0 0.0
    %1335 = vmatpush2.msra.mxu0 0.0
    %1336 = vmatprep.subr.mxu0 0.0
    %1337 = vmatpush2.msra.mxu0 0.0
    %1338 = vmatprep.subr.mxu0 0.0
    %1339 = vmatpush2.msra.mxu0 0.0
    %1340 = vmatprep.subr.mxu0 0.0
    %1341 = vmatpush2.msra.mxu0 0.0
    %1342 = vmatprep.subr.mxu0 0.0
    %1343 = vmatpush2.msra.mxu0 0.0
    %1344 = vmatprep.subr.mxu0 0.0
    %1345 = vmatpush2.msra.mxu0 0.0
    %1346 = vmatprep.subr.mxu0 0.0
    %1347 = vmatpush2.msra.mxu0 0.0
    %1348 = vmatprep.subr.mxu0 0.0
    %1349 = vmatpush2.msra.mxu0 0.0
    %1350 = vmatprep.mubr.f32.mxu0 0.0
    %1351 = vmatmul.mubr.f32.gmra.mxu0 %v1284
    %v1352 = vpop.f32.mrf.mxu0
    %v1353 = vadd.f32 0.0, %v1352
    %v1354 = vpop.f32.mrf.mxu0
    %1355 = vdwg.mxu0
    %v1357 = vsel %vm967, %v1052, 0
    %1359 = vmatprep.subr.mxu0 0.0
    %1360 = vmatpush1.msra.mxu0 0.0
    %1361 = vmatprep.subr.mxu0 0.0
    %1362 = vmatpush1.msra.mxu0 0.0
    %1363 = vmatprep.subr.mxu0 0.0
    %1364 = vmatpush1.msra.mxu0 0.0
    %1365 = vmatprep.subr.mxu0 0.0
    %1366 = vmatpush1.msra.mxu0 0.0
    %1367 = vmatprep.subr.mxu0 0.0
    %1368 = vmatpush1.msra.mxu0 0.0
    %1369 = vmatprep.subr.mxu0 0.0
    %1370 = vmatpush1.msra.mxu0 0.0
    %1371 = vmatprep.subr.mxu0 0.0
    %1372 = vmatpush1.msra.mxu0 0.0
    %1373 = vmatprep.subr.mxu0 0.0
    %1374 = vmatpush1.msra.mxu0 0.0
    %1375 = vmatprep.subr.mxu0 0.0
    %1376 = vmatpush1.msra.mxu0 0.0
    %1377 = vmatprep.subr.mxu0 0.0
    %1378 = vmatpush1.msra.mxu0 0.0
    %1379 = vmatprep.subr.mxu0 0.0
    %1380 = vmatpush1.msra.mxu0 0.0
    %1381 = vmatprep.subr.mxu0 0.0
    %1382 = vmatpush1.msra.mxu0 0.0
    %1383 = vmatprep.subr.mxu0 0.0
    %1384 = vmatpush1.msra.mxu0 0.0
    %1385 = vmatprep.subr.mxu0 0.0
    %1386 = vmatpush1.msra.mxu0 0.0
    %1387 = vmatprep.subr.mxu0 0.0
    %1388 = vmatpush1.msra.mxu0 0.0
    %1389 = vmatprep.subr.mxu0 0.0
    %1390 = vmatpush1.msra.mxu0 %v333
    %1391 = vmatprep.subr.mxu0 0.0
    %1392 = vmatpush2.msra.mxu0 0.0
    %1393 = vmatprep.subr.mxu0 0.0
    %1394 = vmatpush2.msra.mxu0 0.0
    %1395 = vmatprep.subr.mxu0 0.0
    %1396 = vmatpush2.msra.mxu0 0.0
    %1397 = vmatprep.subr.mxu0 0.0
    %1398 = vmatpush2.msra.mxu0 0.0
    %1399 = vmatprep.subr.mxu0 0.0
    %1400 = vmatpush2.msra.mxu0 0.0
    %1401 = vmatprep.subr.mxu0 0.0
    %1402 = vmatpush2.msra.mxu0 0.0
    %1403 = vmatprep.subr.mxu0 0.0
    %1404 = vmatpush2.msra.mxu0 0.0
    %1405 = vmatprep.subr.mxu0 0.0
    %1406 = vmatpush2.msra.mxu0 0.0
    %1407 = vmatprep.subr.mxu0 0.0
    %1408 = vmatpush2.msra.mxu0 0.0
    %1409 = vmatprep.subr.mxu0 0.0
    %1410 = vmatpush2.msra.mxu0 0.0
    %1411 = vmatprep.subr.mxu0 0.0
    %1412 = vmatpush2.msra.mxu0 0.0
    %1413 = vmatprep.subr.mxu0 0.0
    %1414 = vmatpush2.msra.mxu0 0.0
    %1415 = vmatprep.subr.mxu0 0.0
    %1416 = vmatpush2.msra.mxu0 0.0
    %1417 = vmatprep.subr.mxu0 0.0
    %1418 = vmatpush2.msra.mxu0 0.0
    %1419 = vmatprep.subr.mxu0 0.0
    %1420 = vmatpush2.msra.mxu0 0.0
    %1421 = vmatprep.subr.mxu0 0.0
    %1422 = vmatpush2.msra.mxu0 0.0
    %1423 = vmatprep.mubr.f32.mxu0 0.0
    %1424 = vmatmul.mubr.f32.gmra.mxu0 %v1357
    %v1425 = vpop.f32.mrf.mxu0
    %v1426 = vadd.f32 0.0, %v1425
    %v1427 = vpop.f32.mrf.mxu0
    %1428 = vdwg.mxu0
    %v1430 = vsel %vm967, %v1053, 0
    %1432 = vmatprep.subr.mxu0 0.0
    %1433 = vmatpush1.msra.mxu0 0.0
    %1434 = vmatprep.subr.mxu0 0.0
    %1435 = vmatpush1.msra.mxu0 0.0
    %1436 = vmatprep.subr.mxu0 0.0
    %1437 = vmatpush1.msra.mxu0 0.0
    %1438 = vmatprep.subr.mxu0 0.0
    %1439 = vmatpush1.msra.mxu0 0.0
    %1440 = vmatprep.subr.mxu0 0.0
    %1441 = vmatpush1.msra.mxu0 0.0
    %1442 = vmatprep.subr.mxu0 0.0
    %1443 = vmatpush1.msra.mxu0 0.0
    %1444 = vmatprep.subr.mxu0 0.0
    %1445 = vmatpush1.msra.mxu0 0.0
    %1446 = vmatprep.subr.mxu0 0.0
    %1447 = vmatpush1.msra.mxu0 0.0
    %1448 = vmatprep.subr.mxu0 0.0
    %1449 = vmatpush1.msra.mxu0 0.0
    %1450 = vmatprep.subr.mxu0 0.0
    %1451 = vmatpush1.msra.mxu0 0.0
    %1452 = vmatprep.subr.mxu0 0.0
    %1453 = vmatpush1.msra.mxu0 0.0
    %1454 = vmatprep.subr.mxu0 0.0
    %1455 = vmatpush1.msra.mxu0 0.0
    %1456 = vmatprep.subr.mxu0 0.0
    %1457 = vmatpush1.msra.mxu0 0.0
    %1458 = vmatprep.subr.mxu0 0.0
    %1459 = vmatpush1.msra.mxu0 0.0
    %1460 = vmatprep.subr.mxu0 0.0
    %1461 = vmatpush1.msra.mxu0 0.0
    %1462 = vmatprep.subr.mxu0 0.0
    %1463 = vmatpush1.msra.mxu0 %v333
    %1464 = vmatprep.subr.mxu0 0.0
    %1465 = vmatpush2.msra.mxu0 0.0
    %1466 = vmatprep.subr.mxu0 0.0
    %1467 = vmatpush2.msra.mxu0 0.0
    %1468 = vmatprep.subr.mxu0 0.0
    %1469 = vmatpush2.msra.mxu0 0.0
    %1470 = vmatprep.subr.mxu0 0.0
    %1471 = vmatpush2.msra.mxu0 0.0
    %1472 = vmatprep.subr.mxu0 0.0
    %1473 = vmatpush2.msra.mxu0 0.0
    %1474 = vmatprep.subr.mxu0 0.0
    %1475 = vmatpush2.msra.mxu0 0.0
    %1476 = vmatprep.subr.mxu0 0.0
    %1477 = vmatpush2.msra.mxu0 0.0
    %1478 = vmatprep.subr.mxu0 0.0
    %1479 = vmatpush2.msra.mxu0 0.0
    %1480 = vmatprep.subr.mxu0 0.0
    %1481 = vmatpush2.msra.mxu0 0.0
    %1482 = vmatprep.subr.mxu0 0.0
    %1483 = vmatpush2.msra.mxu0 0.0
    %1484 = vmatprep.subr.mxu0 0.0
    %1485 = vmatpush2.msra.mxu0 0.0
    %1486 = vmatprep.subr.mxu0 0.0
    %1487 = vmatpush2.msra.mxu0 0.0
    %1488 = vmatprep.subr.mxu0 0.0
    %1489 = vmatpush2.msra.mxu0 0.0
    %1490 = vmatprep.subr.mxu0 0.0
    %1491 = vmatpush2.msra.mxu0 0.0
    %1492 = vmatprep.subr.mxu0 0.0
    %1493 = vmatpush2.msra.mxu0 0.0
    %1494 = vmatprep.subr.mxu0 0.0
    %1495 = vmatpush2.msra.mxu0 0.0
    %1496 = vmatprep.mubr.f32.mxu0 0.0
    %1497 = vmatmul.mubr.f32.gmra.mxu0 %v1430
    %v1498 = vpop.f32.mrf.mxu0
    %v1499 = vadd.f32 0.0, %v1498
    %v1500 = vpop.f32.mrf.mxu0
    %1501 = vdwg.mxu0
    %v1503 = vsel %vm967, %v1054, 0
    %1505 = vmatprep.subr.mxu0 0.0
    %1506 = vmatpush1.msra.mxu0 0.0
    %1507 = vmatprep.subr.mxu0 0.0
    %1508 = vmatpush1.msra.mxu0 0.0
    %1509 = vmatprep.subr.mxu0 0.0
    %1510 = vmatpush1.msra.mxu0 0.0
    %1511 = vmatprep.subr.mxu0 0.0
    %1512 = vmatpush1.msra.mxu0 0.0
    %1513 = vmatprep.subr.mxu0 0.0
    %1514 = vmatpush1.msra.mxu0 0.0
    %1515 = vmatprep.subr.mxu0 0.0
    %1516 = vmatpush1.msra.mxu0 0.0
    %1517 = vmatprep.subr.mxu0 0.0
    %1518 = vmatpush1.msra.mxu0 0.0
    %1519 = vmatprep.subr.mxu0 0.0
    %1520 = vmatpush1.msra.mxu0 0.0
    %1521 = vmatprep.subr.mxu0 0.0
    %1522 = vmatpush1.msra.mxu0 0.0
    %1523 = vmatprep.subr.mxu0 0.0
    %1524 = vmatpush1.msra.mxu0 0.0
    %1525 = vmatprep.subr.mxu0 0.0
    %1526 = vmatpush1.msra.mxu0 0.0
    %1527 = vmatprep.subr.mxu0 0.0
    %1528 = vmatpush1.msra.mxu0 0.0
    %1529 = vmatprep.subr.mxu0 0.0
    %1530 = vmatpush1.msra.mxu0 0.0
    %1531 = vmatprep.subr.mxu0 0.0
    %1532 = vmatpush1.msra.mxu0 0.0
    %1533 = vmatprep.subr.mxu0 0.0
    %1534 = vmatpush1.msra.mxu0 0.0
    %1535 = vmatprep.subr.mxu0 0.0
    %1536 = vmatpush1.msra.mxu0 %v333
    %1537 = vmatprep.subr.mxu0 0.0
    %1538 = vmatpush2.msra.mxu0 0.0
    %1539 = vmatprep.subr.mxu0 0.0
    %1540 = vmatpush2.msra.mxu0 0.0
    %1541 = vmatprep.subr.mxu0 0.0
    %1542 = vmatpush2.msra.mxu0 0.0
    %1543 = vmatprep.subr.mxu0 0.0
    %1544 = vmatpush2.msra.mxu0 0.0
    %1545 = vmatprep.subr.mxu0 0.0
    %1546 = vmatpush2.msra.mxu0 0.0
    %1547 = vmatprep.subr.mxu0 0.0
    %1548 = vmatpush2.msra.mxu0 0.0
    %1549 = vmatprep.subr.mxu0 0.0
    %1550 = vmatpush2.msra.mxu0 0.0
    %1551 = vmatprep.subr.mxu0 0.0
    %1552 = vmatpush2.msra.mxu0 0.0
    %1553 = vmatprep.subr.mxu0 0.0
    %1554 = vmatpush2.msra.mxu0 0.0
    %1555 = vmatprep.subr.mxu0 0.0
    %1556 = vmatpush2.msra.mxu0 0.0
    %1557 = vmatprep.subr.mxu0 0.0
    %1558 = vmatpush2.msra.mxu0 0.0
    %1559 = vmatprep.subr.mxu0 0.0
    %1560 = vmatpush2.msra.mxu0 0.0
    %1561 = vmatprep.subr.mxu0 0.0
    %1562 = vmatpush2.msra.mxu0 0.0
    %1563 = vmatprep.subr.mxu0 0.0
    %1564 = vmatpush2.msra.mxu0 0.0
    %1565 = vmatprep.subr.mxu0 0.0
    %1566 = vmatpush2.msra.mxu0 0.0
    %1567 = vmatprep.subr.mxu0 0.0
    %1568 = vmatpush2.msra.mxu0 0.0
    %1569 = vmatprep.mubr.f32.mxu0 0.0
    %1570 = vmatmul.mubr.f32.gmra.mxu0 %v1503
    %v1571 = vpop.f32.mrf.mxu0
    %v1572 = vadd.f32 0.0, %v1571
    %v1573 = vpop.f32.mrf.mxu0
    %1574 = vdwg.mxu0
    %v1576 = vsel %vm967, %v1055, 0
    %1578 = vmatprep.subr.mxu0 0.0
    %1579 = vmatpush1.msra.mxu0 0.0
    %1580 = vmatprep.subr.mxu0 0.0
    %1581 = vmatpush1.msra.mxu0 0.0
    %1582 = vmatprep.subr.mxu0 0.0
    %1583 = vmatpush1.msra.mxu0 0.0
    %1584 = vmatprep.subr.mxu0 0.0
    %1585 = vmatpush1.msra.mxu0 0.0
    %1586 = vmatprep.subr.mxu0 0.0
    %1587 = vmatpush1.msra.mxu0 0.0
    %1588 = vmatprep.subr.mxu0 0.0
    %1589 = vmatpush1.msra.mxu0 0.0
    %1590 = vmatprep.subr.mxu0 0.0
    %1591 = vmatpush1.msra.mxu0 0.0
    %1592 = vmatprep.subr.mxu0 0.0
    %1593 = vmatpush1.msra.mxu0 0.0
    %1594 = vmatprep.subr.mxu0 0.0
    %1595 = vmatpush1.msra.mxu0 0.0
    %1596 = vmatprep.subr.mxu0 0.0
    %1597 = vmatpush1.msra.mxu0 0.0
    %1598 = vmatprep.subr.mxu0 0.0
    %1599 = vmatpush1.msra.mxu0 0.0
    %1600 = vmatprep.subr.mxu0 0.0
    %1601 = vmatpush1.msra.mxu0 0.0
    %1602 = vmatprep.subr.mxu0 0.0
    %1603 = vmatpush1.msra.mxu0 0.0
    %1604 = vmatprep.subr.mxu0 0.0
    %1605 = vmatpush1.msra.mxu0 0.0
    %1606 = vmatprep.subr.mxu0 0.0
    %1607 = vmatpush1.msra.mxu0 0.0
    %1608 = vmatprep.subr.mxu0 0.0
    %1609 = vmatpush1.msra.mxu0 %v333
    %1610 = vmatprep.subr.mxu0 0.0
    %1611 = vmatpush2.msra.mxu0 0.0
    %1612 = vmatprep.subr.mxu0 0.0
    %1613 = vmatpush2.msra.mxu0 0.0
    %1614 = vmatprep.subr.mxu0 0.0
    %1615 = vmatpush2.msra.mxu0 0.0
    %1616 = vmatprep.subr.mxu0 0.0
    %1617 = vmatpush2.msra.mxu0 0.0
    %1618 = vmatprep.subr.mxu0 0.0
    %1619 = vmatpush2.msra.mxu0 0.0
    %1620 = vmatprep.subr.mxu0 0.0
    %1621 = vmatpush2.msra.mxu0 0.0
    %1622 = vmatprep.subr.mxu0 0.0
    %1623 = vmatpush2.msra.mxu0 0.0
    %1624 = vmatprep.subr.mxu0 0.0
    %1625 = vmatpush2.msra.mxu0 0.0
    %1626 = vmatprep.subr.mxu0 0.0
    %1627 = vmatpush2.msra.mxu0 0.0
    %1628 = vmatprep.subr.mxu0 0.0
    %1629 = vmatpush2.msra.mxu0 0.0
    %1630 = vmatprep.subr.mxu0 0.0
    %1631 = vmatpush2.msra.mxu0 0.0
    %1632 = vmatprep.subr.mxu0 0.0
    %1633 = vmatpush2.msra.mxu0 0.0
    %1634 = vmatprep.subr.mxu0 0.0
    %1635 = vmatpush2.msra.mxu0 0.0
    %1636 = vmatprep.subr.mxu0 0.0
    %1637 = vmatpush2.msra.mxu0 0.0
    %1638 = vmatprep.subr.mxu0 0.0
    %1639 = vmatpush2.msra.mxu0 0.0
    %1640 = vmatprep.subr.mxu0 0.0
    %1641 = vmatpush2.msra.mxu0 0.0
    %1642 = vmatprep.mubr.f32.mxu0 0.0
    %1643 = vmatmul.mubr.f32.gmra.mxu0 %v1576
    %v1644 = vpop.f32.mrf.mxu0
    %v1645 = vadd.f32 0.0, %v1644
    %v1646 = vpop.f32.mrf.mxu0
    %1647 = vdwg.mxu0
    %v1648 = vmul.f32 %v1134, %v343
    %v1649 = vmul.f32 %v1207, %v347
    %v1650 = vmul.f32 %v1280, %v351
    %v1651 = vmul.f32 %v1353, %v355
    %v1652 = vmul.f32 %v1426, %v343
    %v1653 = vmul.f32 %v1499, %v347
    %v1654 = vmul.f32 %v1572, %v351
    %v1655 = vmul.f32 %v1645, %v355
    %v1656 = vsel %vm68, %v1648, 0.0
    %v1657 = vsel %vm68, %v1649, 0.0
    %v1658 = vadd.f32 %v1656, %v1657
    %v1659 = vsel %vm68, %v1650, 0.0
    %v1660 = vadd.f32 %v1658, %v1659
    %v1661 = vsel %vm68, %v1651, 0.0
    %v1662 = vadd.f32 %v1660, %v1661
    %v1663 = vsel %vm68, %v1652, 0.0
    %v1664 = vsel %vm68, %v1653, 0.0
    %v1665 = vadd.f32 %v1663, %v1664
    %v1666 = vsel %vm68, %v1654, 0.0
    %v1667 = vadd.f32 %v1665, %v1666
    %v1668 = vsel %vm68, %v1655, 0.0
    %v1669 = vadd.f32 %v1667, %v1668
    %v1670 = vlaneseq
    %v1671 = vshrl.u32 %v1670, 7
    %v1672 = vsub.s32 3, %v1671
    %v1673 = vrot.slane %v59, %v1672
    %1674 = vrot.lane.b32.xlu0 %v39, 32
    %v1675 = vpop.permute.xlu0 %1674
    %1676 = vrot.lane.b32.xlu0 %v40, 32
    %v1677 = vpop.permute.xlu0 %1676
    %1678 = vrot.lane.b32.xlu0 %v41, 32
    %v1679 = vpop.permute.xlu0 %1678
    %1680 = vrot.lane.b32.xlu0 %v42, 32
    %v1681 = vpop.permute.xlu0 %1680
    %v1687 = vsel %vm68, %v1662, 0
    %v1690 = vsel %vm68, %v1669, 0
    %1692 = vmatprep.subr.mxu0 0.0
    %1693 = vmatpush1.msra.mxu0 0.0
    %1694 = vmatprep.subr.mxu0 0.0
    %1695 = vmatpush1.msra.mxu0 0.0
    %1696 = vmatprep.subr.mxu0 0.0
    %1697 = vmatpush1.msra.mxu0 0.0
    %1698 = vmatprep.subr.mxu0 0.0
    %1699 = vmatpush1.msra.mxu0 0.0
    %1700 = vmatprep.subr.mxu0 0.0
    %1701 = vmatpush1.msra.mxu0 0.0
    %1702 = vmatprep.subr.mxu0 0.0
    %1703 = vmatpush1.msra.mxu0 0.0
    %1704 = vmatprep.subr.mxu0 0.0
    %1705 = vmatpush1.msra.mxu0 0.0
    %1706 = vmatprep.subr.mxu0 0.0
    %1707 = vmatpush1.msra.mxu0 0.0
    %1708 = vmatprep.subr.mxu0 0.0
    %1709 = vmatpush1.msra.mxu0 0.0
    %1710 = vmatprep.subr.mxu0 0.0
    %1711 = vmatpush1.msra.mxu0 0.0
    %1712 = vmatprep.subr.mxu0 0.0
    %1713 = vmatpush1.msra.mxu0 0.0
    %1714 = vmatprep.subr.mxu0 0.0
    %1715 = vmatpush1.msra.mxu0 0.0
    %1716 = vmatprep.subr.mxu0 0.0
    %1717 = vmatpush1.msra.mxu0 %v1681
    %1718 = vmatprep.subr.mxu0 0.0
    %1719 = vmatpush1.msra.mxu0 %v1679
    %1720 = vmatprep.subr.mxu0 0.0
    %1721 = vmatpush1.msra.mxu0 %v1677
    %1722 = vmatprep.subr.mxu0 0.0
    %1723 = vmatpush1.msra.mxu0 %v1675
    %1724 = vmatprep.subr.mxu0 0.0
    %1725 = vmatpush2.msra.mxu0 0.0
    %1726 = vmatprep.subr.mxu0 0.0
    %1727 = vmatpush2.msra.mxu0 0.0
    %1728 = vmatprep.subr.mxu0 0.0
    %1729 = vmatpush2.msra.mxu0 0.0
    %1730 = vmatprep.subr.mxu0 0.0
    %1731 = vmatpush2.msra.mxu0 0.0
    %1732 = vmatprep.subr.mxu0 0.0
    %1733 = vmatpush2.msra.mxu0 0.0
    %1734 = vmatprep.subr.mxu0 0.0
    %1735 = vmatpush2.msra.mxu0 0.0
    %1736 = vmatprep.subr.mxu0 0.0
    %1737 = vmatpush2.msra.mxu0 0.0
    %1738 = vmatprep.subr.mxu0 0.0
    %1739 = vmatpush2.msra.mxu0 0.0
    %1740 = vmatprep.subr.mxu0 0.0
    %1741 = vmatpush2.msra.mxu0 0.0
    %1742 = vmatprep.subr.mxu0 0.0
    %1743 = vmatpush2.msra.mxu0 0.0
    %1744 = vmatprep.subr.mxu0 0.0
    %1745 = vmatpush2.msra.mxu0 0.0
    %1746 = vmatprep.subr.mxu0 0.0
    %1747 = vmatpush2.msra.mxu0 0.0
    %1748 = vmatprep.subr.mxu0 0.0
    %1749 = vmatpush2.msra.mxu0 0.0
    %1750 = vmatprep.subr.mxu0 0.0
    %1751 = vmatpush2.msra.mxu0 0.0
    %1752 = vmatprep.subr.mxu0 0.0
    %1753 = vmatpush2.msra.mxu0 0.0
    %1754 = vmatprep.subr.mxu0 0.0
    %1755 = vmatpush2.msra.mxu0 0.0
    %1756 = vmatprep.mubr.f32.mxu0 0.0
    %1757 = vmatmul.mubr.f32.gmra.mxu0 %v1687
    %v1758 = vpop.f32.mrf.mxu0
    %v1759 = vadd.f32 %v1673, %v1758
    %v1760 = vpop.f32.mrf.mxu0
    %1761 = vmatprep.mubr.f32.mxu0 0.0
    %1762 = vmatmul.mubr.f32.gmra.mxu0 %v1690
    %v1763 = vpop.f32.mrf.mxu0
    %v1764 = vadd.f32 %v1673, %v1763
    %v1765 = vpop.f32.mrf.mxu0
    %1766 = vdwg.mxu0
    %v1767 = vadd.f32 %v1759, %v31
    %v1768 = vadd.f32 %v1764, %v32
    %v1769 = vsel %vm68, %v1767, 0.0
    %1770 = vadd.xlane.f32.xlu0 %v1769
    %v1771 = vpop.xlane.xlu0 %1770
    %v1772 = vsel %vm68, %v1768, 0.0
    %1773 = vadd.xlane.f32.xlu0 %v1772
    %v1774 = vpop.xlane.xlu0 %1773
    %v1775 = vrcp.pop 32.0
    %v1776 = vmul.f32 %v1771, %v1775
    %v1777 = vmul.f32 %v1774, %v1775
    %v1778 = vsub.f32 %v1767, %v1776
    %v1779 = vsub.f32 %v1768, %v1777
    %v1780 = vmul.f32 %v1778, %v1778
    %v1781 = vmul.f32 %v1779, %v1779
    %v1782 = vsel %vm68, %v1780, 0.0
    %1783 = vadd.xlane.f32.xlu0 %v1782
    %v1784 = vpop.xlane.xlu0 %1783
    %v1785 = vsel %vm68, %v1781, 0.0
    %1786 = vadd.xlane.f32.xlu0 %v1785
    %v1787 = vpop.xlane.xlu0 %1786
    %v1788 = vmul.f32 %v1784, %v1775
    %v1789 = vmul.f32 %v1787, %v1775
    %v1790 = vadd.f32 %v1788, 1e-06
    %v1791 = vadd.f32 %v1789, 1e-06
    %v1792 = vrsqrt.pop %v1790
    %v1793 = vrsqrt.pop %v1791
    %v1794 = vmul.f32 %v1778, %v1792
    %v1795 = vmul.f32 %v1779, %v1793
    %v1796 = vlaneseq
    %v1797 = vshrl.u32 %v1796, 7
    %v1798 = vsub.s32 0, %v1797
    %v1799 = vrot.slane %v60, %v1798
    %v1800 = vmul.f32 %v1794, %v1799
    %v1801 = vmul.f32 %v1795, %v1799
    %v1802 = vlaneseq
    %v1803 = vshrl.u32 %v1802, 7
    %v1804 = vsub.s32 1, %v1803
    %v1805 = vrot.slane %v60, %v1804
    %v1806 = vadd.f32 %v1800, %v1805
    %v1807 = vadd.f32 %v1801, %v1805
    %v1808 = vlaneseq
    %v1809 = vshrl.u32 %v1808, 7
    %v1810 = vsub.s32 4, %v1809
    %v1811 = vrot.slane %v59, %v1810
    %v1813 = vsel %vm68, %v1806, 0
    %v1816 = vsel %vm68, %v1807, 0
    %1818 = vmatprep.subr.mxu0 0.0
    %1819 = vmatpush1.msra.mxu0 0.0
    %1820 = vmatprep.subr.mxu0 0.0
    %1821 = vmatpush1.msra.mxu0 0.0
    %1822 = vmatprep.subr.mxu0 0.0
    %1823 = vmatpush1.msra.mxu0 0.0
    %1824 = vmatprep.subr.mxu0 0.0
    %1825 = vmatpush1.msra.mxu0 0.0
    %1826 = vmatprep.subr.mxu0 0.0
    %1827 = vmatpush1.msra.mxu0 0.0
    %1828 = vmatprep.subr.mxu0 0.0
    %1829 = vmatpush1.msra.mxu0 0.0
    %1830 = vmatprep.subr.mxu0 0.0
    %1831 = vmatpush1.msra.mxu0 0.0
    %1832 = vmatprep.subr.mxu0 0.0
    %1833 = vmatpush1.msra.mxu0 0.0
    %1834 = vmatprep.subr.mxu0 0.0
    %1835 = vmatpush1.msra.mxu0 0.0
    %1836 = vmatprep.subr.mxu0 0.0
    %1837 = vmatpush1.msra.mxu0 0.0
    %1838 = vmatprep.subr.mxu0 0.0
    %1839 = vmatpush1.msra.mxu0 0.0
    %1840 = vmatprep.subr.mxu0 0.0
    %1841 = vmatpush1.msra.mxu0 0.0
    %1842 = vmatprep.subr.mxu0 0.0
    %1843 = vmatpush1.msra.mxu0 %v46
    %1844 = vmatprep.subr.mxu0 0.0
    %1845 = vmatpush1.msra.mxu0 %v45
    %1846 = vmatprep.subr.mxu0 0.0
    %1847 = vmatpush1.msra.mxu0 %v44
    %1848 = vmatprep.subr.mxu0 0.0
    %1849 = vmatpush1.msra.mxu0 %v43
    %1850 = vmatprep.subr.mxu0 0.0
    %1851 = vmatpush2.msra.mxu0 0.0
    %1852 = vmatprep.subr.mxu0 0.0
    %1853 = vmatpush2.msra.mxu0 0.0
    %1854 = vmatprep.subr.mxu0 0.0
    %1855 = vmatpush2.msra.mxu0 0.0
    %1856 = vmatprep.subr.mxu0 0.0
    %1857 = vmatpush2.msra.mxu0 0.0
    %1858 = vmatprep.subr.mxu0 0.0
    %1859 = vmatpush2.msra.mxu0 0.0
    %1860 = vmatprep.subr.mxu0 0.0
    %1861 = vmatpush2.msra.mxu0 0.0
    %1862 = vmatprep.subr.mxu0 0.0
    %1863 = vmatpush2.msra.mxu0 0.0
    %1864 = vmatprep.subr.mxu0 0.0
    %1865 = vmatpush2.msra.mxu0 0.0
    %1866 = vmatprep.subr.mxu0 0.0
    %1867 = vmatpush2.msra.mxu0 0.0
    %1868 = vmatprep.subr.mxu0 0.0
    %1869 = vmatpush2.msra.mxu0 0.0
    %1870 = vmatprep.subr.mxu0 0.0
    %1871 = vmatpush2.msra.mxu0 0.0
    %1872 = vmatprep.subr.mxu0 0.0
    %1873 = vmatpush2.msra.mxu0 0.0
    %1874 = vmatprep.subr.mxu0 0.0
    %1875 = vmatpush2.msra.mxu0 0.0
    %1876 = vmatprep.subr.mxu0 0.0
    %1877 = vmatpush2.msra.mxu0 0.0
    %1878 = vmatprep.subr.mxu0 0.0
    %1879 = vmatpush2.msra.mxu0 0.0
    %1880 = vmatprep.subr.mxu0 0.0
    %1881 = vmatpush2.msra.mxu0 0.0
    %1882 = vmatprep.mubr.f32.mxu0 0.0
    %1883 = vmatmul.mubr.f32.gmra.mxu0 %v1813
    %v1884 = vpop.f32.mrf.mxu0
    %v1885 = vadd.f32 %v1811, %v1884
    %v1886 = vpop.f32.mrf.mxu0
    %1887 = vmatprep.mubr.f32.mxu0 0.0
    %1888 = vmatmul.mubr.f32.gmra.mxu0 %v1816
    %v1889 = vpop.f32.mrf.mxu0
    %v1890 = vadd.f32 %v1811, %v1889
    %v1891 = vpop.f32.mrf.mxu0
    %1892 = vdwg.mxu0
    %v1893 = vlaneseq
    %v1894 = vshrl.u32 %v1893, 7
    %v1895 = vsub.s32 5, %v1894
    %v1896 = vrot.slane %v59, %v1895
    %1901 = vrot.lane.b32.xlu0 %v43, 96
    %v1902 = vpop.permute.xlu0 %1901
    %1903 = vrot.lane.b32.xlu0 %v44, 96
    %v1904 = vpop.permute.xlu0 %1903
    %1905 = vrot.lane.b32.xlu0 %v45, 96
    %v1906 = vpop.permute.xlu0 %1905
    %1907 = vrot.lane.b32.xlu0 %v46, 96
    %v1908 = vpop.permute.xlu0 %1907
    %v1914 = vsel %vm68, %v33, 0
    %v1917 = vsel %vm68, %v34, 0
    %1919 = vmatprep.subr.mxu0 0.0
    %1920 = vmatpush1.msra.mxu0 0.0
    %1921 = vmatprep.subr.mxu0 0.0
    %1922 = vmatpush1.msra.mxu0 0.0
    %1923 = vmatprep.subr.mxu0 0.0
    %1924 = vmatpush1.msra.mxu0 0.0
    %1925 = vmatprep.subr.mxu0 0.0
    %1926 = vmatpush1.msra.mxu0 0.0
    %1927 = vmatprep.subr.mxu0 0.0
    %1928 = vmatpush1.msra.mxu0 0.0
    %1929 = vmatprep.subr.mxu0 0.0
    %1930 = vmatpush1.msra.mxu0 0.0
    %1931 = vmatprep.subr.mxu0 0.0
    %1932 = vmatpush1.msra.mxu0 0.0
    %1933 = vmatprep.subr.mxu0 0.0
    %1934 = vmatpush1.msra.mxu0 0.0
    %1935 = vmatprep.subr.mxu0 0.0
    %1936 = vmatpush1.msra.mxu0 0.0
    %1937 = vmatprep.subr.mxu0 0.0
    %1938 = vmatpush1.msra.mxu0 0.0
    %1939 = vmatprep.subr.mxu0 0.0
    %1940 = vmatpush1.msra.mxu0 0.0
    %1941 = vmatprep.subr.mxu0 0.0
    %1942 = vmatpush1.msra.mxu0 0.0
    %1943 = vmatprep.subr.mxu0 0.0
    %1944 = vmatpush1.msra.mxu0 %v1908
    %1945 = vmatprep.subr.mxu0 0.0
    %1946 = vmatpush1.msra.mxu0 %v1906
    %1947 = vmatprep.subr.mxu0 0.0
    %1948 = vmatpush1.msra.mxu0 %v1904
    %1949 = vmatprep.subr.mxu0 0.0
    %1950 = vmatpush1.msra.mxu0 %v1902
    %1951 = vmatprep.subr.mxu0 0.0
    %1952 = vmatpush2.msra.mxu0 0.0
    %1953 = vmatprep.subr.mxu0 0.0
    %1954 = vmatpush2.msra.mxu0 0.0
    %1955 = vmatprep.subr.mxu0 0.0
    %1956 = vmatpush2.msra.mxu0 0.0
    %1957 = vmatprep.subr.mxu0 0.0
    %1958 = vmatpush2.msra.mxu0 0.0
    %1959 = vmatprep.subr.mxu0 0.0
    %1960 = vmatpush2.msra.mxu0 0.0
    %1961 = vmatprep.subr.mxu0 0.0
    %1962 = vmatpush2.msra.mxu0 0.0
    %1963 = vmatprep.subr.mxu0 0.0
    %1964 = vmatpush2.msra.mxu0 0.0
    %1965 = vmatprep.subr.mxu0 0.0
    %1966 = vmatpush2.msra.mxu0 0.0
    %1967 = vmatprep.subr.mxu0 0.0
    %1968 = vmatpush2.msra.mxu0 0.0
    %1969 = vmatprep.subr.mxu0 0.0
    %1970 = vmatpush2.msra.mxu0 0.0
    %1971 = vmatprep.subr.mxu0 0.0
    %1972 = vmatpush2.msra.mxu0 0.0
    %1973 = vmatprep.subr.mxu0 0.0
    %1974 = vmatpush2.msra.mxu0 0.0
    %1975 = vmatprep.subr.mxu0 0.0
    %1976 = vmatpush2.msra.mxu0 0.0
    %1977 = vmatprep.subr.mxu0 0.0
    %1978 = vmatpush2.msra.mxu0 0.0
    %1979 = vmatprep.subr.mxu0 0.0
    %1980 = vmatpush2.msra.mxu0 0.0
    %1981 = vmatprep.subr.mxu0 0.0
    %1982 = vmatpush2.msra.mxu0 0.0
    %1983 = vmatprep.mubr.f32.mxu0 0.0
    %1984 = vmatmul.mubr.f32.gmra.mxu0 %v1914
    %v1985 = vpop.f32.mrf.mxu0
    %v1986 = vadd.f32 %v1896, %v1985
    %v1987 = vpop.f32.mrf.mxu0
    %1988 = vmatprep.mubr.f32.mxu0 0.0
    %1989 = vmatmul.mubr.f32.gmra.mxu0 %v1917
    %v1990 = vpop.f32.mrf.mxu0
    %v1991 = vadd.f32 %v1896, %v1990
    %v1992 = vpop.f32.mrf.mxu0
    %1993 = vdwg.mxu0
    %v1994 = vlaneseq
    %v1995 = vshrl.u32 %v1994, 7
    %v1996 = vsub.s32 6, %v1995
    %v1997 = vrot.slane %v59, %v1996
    %1998 = vrot.lane.b32.xlu0 %v43, 64
    %v1999 = vpop.permute.xlu0 %1998
    %2000 = vrot.lane.b32.xlu0 %v44, 64
    %v2001 = vpop.permute.xlu0 %2000
    %2002 = vrot.lane.b32.xlu0 %v45, 64
    %v2003 = vpop.permute.xlu0 %2002
    %2004 = vrot.lane.b32.xlu0 %v46, 64
    %v2005 = vpop.permute.xlu0 %2004
    %2010 = vmatprep.subr.mxu0 0.0
    %2011 = vmatpush1.msra.mxu0 0.0
    %2012 = vmatprep.subr.mxu0 0.0
    %2013 = vmatpush1.msra.mxu0 0.0
    %2014 = vmatprep.subr.mxu0 0.0
    %2015 = vmatpush1.msra.mxu0 0.0
    %2016 = vmatprep.subr.mxu0 0.0
    %2017 = vmatpush1.msra.mxu0 0.0
    %2018 = vmatprep.subr.mxu0 0.0
    %2019 = vmatpush1.msra.mxu0 0.0
    %2020 = vmatprep.subr.mxu0 0.0
    %2021 = vmatpush1.msra.mxu0 0.0
    %2022 = vmatprep.subr.mxu0 0.0
    %2023 = vmatpush1.msra.mxu0 0.0
    %2024 = vmatprep.subr.mxu0 0.0
    %2025 = vmatpush1.msra.mxu0 0.0
    %2026 = vmatprep.subr.mxu0 0.0
    %2027 = vmatpush1.msra.mxu0 0.0
    %2028 = vmatprep.subr.mxu0 0.0
    %2029 = vmatpush1.msra.mxu0 0.0
    %2030 = vmatprep.subr.mxu0 0.0
    %2031 = vmatpush1.msra.mxu0 0.0
    %2032 = vmatprep.subr.mxu0 0.0
    %2033 = vmatpush1.msra.mxu0 0.0
    %2034 = vmatprep.subr.mxu0 0.0
    %2035 = vmatpush1.msra.mxu0 %v2005
    %2036 = vmatprep.subr.mxu0 0.0
    %2037 = vmatpush1.msra.mxu0 %v2003
    %2038 = vmatprep.subr.mxu0 0.0
    %2039 = vmatpush1.msra.mxu0 %v2001
    %2040 = vmatprep.subr.mxu0 0.0
    %2041 = vmatpush1.msra.mxu0 %v1999
    %2042 = vmatprep.subr.mxu0 0.0
    %2043 = vmatpush2.msra.mxu0 0.0
    %2044 = vmatprep.subr.mxu0 0.0
    %2045 = vmatpush2.msra.mxu0 0.0
    %2046 = vmatprep.subr.mxu0 0.0
    %2047 = vmatpush2.msra.mxu0 0.0
    %2048 = vmatprep.subr.mxu0 0.0
    %2049 = vmatpush2.msra.mxu0 0.0
    %2050 = vmatprep.subr.mxu0 0.0
    %2051 = vmatpush2.msra.mxu0 0.0
    %2052 = vmatprep.subr.mxu0 0.0
    %2053 = vmatpush2.msra.mxu0 0.0
    %2054 = vmatprep.subr.mxu0 0.0
    %2055 = vmatpush2.msra.mxu0 0.0
    %2056 = vmatprep.subr.mxu0 0.0
    %2057 = vmatpush2.msra.mxu0 0.0
    %2058 = vmatprep.subr.mxu0 0.0
    %2059 = vmatpush2.msra.mxu0 0.0
    %2060 = vmatprep.subr.mxu0 0.0
    %2061 = vmatpush2.msra.mxu0 0.0
    %2062 = vmatprep.subr.mxu0 0.0
    %2063 = vmatpush2.msra.mxu0 0.0
    %2064 = vmatprep.subr.mxu0 0.0
    %2065 = vmatpush2.msra.mxu0 0.0
    %2066 = vmatprep.subr.mxu0 0.0
    %2067 = vmatpush2.msra.mxu0 0.0
    %2068 = vmatprep.subr.mxu0 0.0
    %2069 = vmatpush2.msra.mxu0 0.0
    %2070 = vmatprep.subr.mxu0 0.0
    %2071 = vmatpush2.msra.mxu0 0.0
    %2072 = vmatprep.subr.mxu0 0.0
    %2073 = vmatpush2.msra.mxu0 0.0
    %2074 = vmatprep.mubr.f32.mxu0 0.0
    %2075 = vmatmul.mubr.f32.gmra.mxu0 %v1914
    %v2076 = vpop.f32.mrf.mxu0
    %v2077 = vadd.f32 %v1997, %v2076
    %v2078 = vpop.f32.mrf.mxu0
    %2079 = vmatprep.mubr.f32.mxu0 0.0
    %2080 = vmatmul.mubr.f32.gmra.mxu0 %v1917
    %v2081 = vpop.f32.mrf.mxu0
    %v2082 = vadd.f32 %v1997, %v2081
    %v2083 = vpop.f32.mrf.mxu0
    %2084 = vdwg.mxu0
    %v2085 = vmul.f32 %v1885, %v343
    %v2086 = vmul.f32 %v1885, %v347
    %v2087 = vmul.f32 %v1885, %v351
    %v2088 = vmul.f32 %v1885, %v355
    %v2089 = vmul.f32 %v1890, %v343
    %v2090 = vmul.f32 %v1890, %v347
    %v2091 = vmul.f32 %v1890, %v351
    %v2092 = vmul.f32 %v1890, %v355
    %v2094 = vsel %vm68, %v2085, 0
    %v2097 = vsel %vm68, %v1986, 0
    %2099 = vmatprep.subr.mxu0 0.0
    %2100 = vmatpush1.xpose.msra.mxu0 0.0
    %2101 = vmatprep.subr.mxu0 0.0
    %2102 = vmatpush1.xpose.msra.mxu0 0.0
    %2103 = vmatprep.subr.mxu0 0.0
    %2104 = vmatpush1.xpose.msra.mxu0 0.0
    %2105 = vmatprep.subr.mxu0 0.0
    %2106 = vmatpush1.xpose.msra.mxu0 0.0
    %2107 = vmatprep.subr.mxu0 0.0
    %2108 = vmatpush1.xpose.msra.mxu0 0.0
    %2109 = vmatprep.subr.mxu0 0.0
    %2110 = vmatpush1.xpose.msra.mxu0 0.0
    %2111 = vmatprep.subr.mxu0 0.0
    %2112 = vmatpush1.xpose.msra.mxu0 0.0
    %2113 = vmatprep.subr.mxu0 0.0
    %2114 = vmatpush1.xpose.msra.mxu0 0.0
    %2115 = vmatprep.subr.mxu0 0.0
    %2116 = vmatpush1.xpose.msra.mxu0 0.0
    %2117 = vmatprep.subr.mxu0 0.0
    %2118 = vmatpush1.xpose.msra.mxu0 0.0
    %2119 = vmatprep.subr.mxu0 0.0
    %2120 = vmatpush1.xpose.msra.mxu0 0.0
    %2121 = vmatprep.subr.mxu0 0.0
    %2122 = vmatpush1.xpose.msra.mxu0 0.0
    %2123 = vmatprep.subr.mxu0 0.0
    %2124 = vmatpush1.xpose.msra.mxu0 0.0
    %2125 = vmatprep.subr.mxu0 0.0
    %2126 = vmatpush1.xpose.msra.mxu0 0.0
    %2127 = vmatprep.subr.mxu0 0.0
    %2128 = vmatpush1.xpose.msra.mxu0 0.0
    %2129 = vmatprep.subr.mxu0 0.0
    %2130 = vmatpush1.xpose.msra.mxu0 %v2097
    %2131 = vmatprep.subr.mxu0 0.0
    %2132 = vmatpush2.xpose.msra.mxu0 0.0
    %2133 = vmatprep.subr.mxu0 0.0
    %2134 = vmatpush2.xpose.msra.mxu0 0.0
    %2135 = vmatprep.subr.mxu0 0.0
    %2136 = vmatpush2.xpose.msra.mxu0 0.0
    %2137 = vmatprep.subr.mxu0 0.0
    %2138 = vmatpush2.xpose.msra.mxu0 0.0
    %2139 = vmatprep.subr.mxu0 0.0
    %2140 = vmatpush2.xpose.msra.mxu0 0.0
    %2141 = vmatprep.subr.mxu0 0.0
    %2142 = vmatpush2.xpose.msra.mxu0 0.0
    %2143 = vmatprep.subr.mxu0 0.0
    %2144 = vmatpush2.xpose.msra.mxu0 0.0
    %2145 = vmatprep.subr.mxu0 0.0
    %2146 = vmatpush2.xpose.msra.mxu0 0.0
    %2147 = vmatprep.subr.mxu0 0.0
    %2148 = vmatpush2.xpose.msra.mxu0 0.0
    %2149 = vmatprep.subr.mxu0 0.0
    %2150 = vmatpush2.xpose.msra.mxu0 0.0
    %2151 = vmatprep.subr.mxu0 0.0
    %2152 = vmatpush2.xpose.msra.mxu0 0.0
    %2153 = vmatprep.subr.mxu0 0.0
    %2154 = vmatpush2.xpose.msra.mxu0 0.0
    %2155 = vmatprep.subr.mxu0 0.0
    %2156 = vmatpush2.xpose.msra.mxu0 0.0
    %2157 = vmatprep.subr.mxu0 0.0
    %2158 = vmatpush2.xpose.msra.mxu0 0.0
    %2159 = vmatprep.subr.mxu0 0.0
    %2160 = vmatpush2.xpose.msra.mxu0 0.0
    %2161 = vmatprep.subr.mxu0 0.0
    %2162 = vmatpush2.xpose.msra.mxu0 0.0
    %2163 = vmatprep.mubr.f32.mxu0 0.0
    %2164 = vmatmul.mubr.f32.gmra.mxu0 %v2094
    %v2165 = vpop.f32.mrf.mxu0
    %v2166 = vadd.f32 0.0, %v2165
    %v2167 = vpop.f32.mrf.mxu0
    %2168 = vdwg.mxu0
    %v2170 = vsel %vm68, %v2086, 0
    %2172 = vmatprep.subr.mxu0 0.0
    %2173 = vmatpush1.xpose.msra.mxu0 0.0
    %2174 = vmatprep.subr.mxu0 0.0
    %2175 = vmatpush1.xpose.msra.mxu0 0.0
    %2176 = vmatprep.subr.mxu0 0.0
    %2177 = vmatpush1.xpose.msra.mxu0 0.0
    %2178 = vmatprep.subr.mxu0 0.0
    %2179 = vmatpush1.xpose.msra.mxu0 0.0
    %2180 = vmatprep.subr.mxu0 0.0
    %2181 = vmatpush1.xpose.msra.mxu0 0.0
    %2182 = vmatprep.subr.mxu0 0.0
    %2183 = vmatpush1.xpose.msra.mxu0 0.0
    %2184 = vmatprep.subr.mxu0 0.0
    %2185 = vmatpush1.xpose.msra.mxu0 0.0
    %2186 = vmatprep.subr.mxu0 0.0
    %2187 = vmatpush1.xpose.msra.mxu0 0.0
    %2188 = vmatprep.subr.mxu0 0.0
    %2189 = vmatpush1.xpose.msra.mxu0 0.0
    %2190 = vmatprep.subr.mxu0 0.0
    %2191 = vmatpush1.xpose.msra.mxu0 0.0
    %2192 = vmatprep.subr.mxu0 0.0
    %2193 = vmatpush1.xpose.msra.mxu0 0.0
    %2194 = vmatprep.subr.mxu0 0.0
    %2195 = vmatpush1.xpose.msra.mxu0 0.0
    %2196 = vmatprep.subr.mxu0 0.0
    %2197 = vmatpush1.xpose.msra.mxu0 0.0
    %2198 = vmatprep.subr.mxu0 0.0
    %2199 = vmatpush1.xpose.msra.mxu0 0.0
    %2200 = vmatprep.subr.mxu0 0.0
    %2201 = vmatpush1.xpose.msra.mxu0 0.0
    %2202 = vmatprep.subr.mxu0 0.0
    %2203 = vmatpush1.xpose.msra.mxu0 %v2097
    %2204 = vmatprep.subr.mxu0 0.0
    %2205 = vmatpush2.xpose.msra.mxu0 0.0
    %2206 = vmatprep.subr.mxu0 0.0
    %2207 = vmatpush2.xpose.msra.mxu0 0.0
    %2208 = vmatprep.subr.mxu0 0.0
    %2209 = vmatpush2.xpose.msra.mxu0 0.0
    %2210 = vmatprep.subr.mxu0 0.0
    %2211 = vmatpush2.xpose.msra.mxu0 0.0
    %2212 = vmatprep.subr.mxu0 0.0
    %2213 = vmatpush2.xpose.msra.mxu0 0.0
    %2214 = vmatprep.subr.mxu0 0.0
    %2215 = vmatpush2.xpose.msra.mxu0 0.0
    %2216 = vmatprep.subr.mxu0 0.0
    %2217 = vmatpush2.xpose.msra.mxu0 0.0
    %2218 = vmatprep.subr.mxu0 0.0
    %2219 = vmatpush2.xpose.msra.mxu0 0.0
    %2220 = vmatprep.subr.mxu0 0.0
    %2221 = vmatpush2.xpose.msra.mxu0 0.0
    %2222 = vmatprep.subr.mxu0 0.0
    %2223 = vmatpush2.xpose.msra.mxu0 0.0
    %2224 = vmatprep.subr.mxu0 0.0
    %2225 = vmatpush2.xpose.msra.mxu0 0.0
    %2226 = vmatprep.subr.mxu0 0.0
    %2227 = vmatpush2.xpose.msra.mxu0 0.0
    %2228 = vmatprep.subr.mxu0 0.0
    %2229 = vmatpush2.xpose.msra.mxu0 0.0
    %2230 = vmatprep.subr.mxu0 0.0
    %2231 = vmatpush2.xpose.msra.mxu0 0.0
    %2232 = vmatprep.subr.mxu0 0.0
    %2233 = vmatpush2.xpose.msra.mxu0 0.0
    %2234 = vmatprep.subr.mxu0 0.0
    %2235 = vmatpush2.xpose.msra.mxu0 0.0
    %2236 = vmatprep.mubr.f32.mxu0 0.0
    %2237 = vmatmul.mubr.f32.gmra.mxu0 %v2170
    %v2238 = vpop.f32.mrf.mxu0
    %v2239 = vadd.f32 0.0, %v2238
    %v2240 = vpop.f32.mrf.mxu0
    %2241 = vdwg.mxu0
    %v2243 = vsel %vm68, %v2087, 0
    %2245 = vmatprep.subr.mxu0 0.0
    %2246 = vmatpush1.xpose.msra.mxu0 0.0
    %2247 = vmatprep.subr.mxu0 0.0
    %2248 = vmatpush1.xpose.msra.mxu0 0.0
    %2249 = vmatprep.subr.mxu0 0.0
    %2250 = vmatpush1.xpose.msra.mxu0 0.0
    %2251 = vmatprep.subr.mxu0 0.0
    %2252 = vmatpush1.xpose.msra.mxu0 0.0
    %2253 = vmatprep.subr.mxu0 0.0
    %2254 = vmatpush1.xpose.msra.mxu0 0.0
    %2255 = vmatprep.subr.mxu0 0.0
    %2256 = vmatpush1.xpose.msra.mxu0 0.0
    %2257 = vmatprep.subr.mxu0 0.0
    %2258 = vmatpush1.xpose.msra.mxu0 0.0
    %2259 = vmatprep.subr.mxu0 0.0
    %2260 = vmatpush1.xpose.msra.mxu0 0.0
    %2261 = vmatprep.subr.mxu0 0.0
    %2262 = vmatpush1.xpose.msra.mxu0 0.0
    %2263 = vmatprep.subr.mxu0 0.0
    %2264 = vmatpush1.xpose.msra.mxu0 0.0
    %2265 = vmatprep.subr.mxu0 0.0
    %2266 = vmatpush1.xpose.msra.mxu0 0.0
    %2267 = vmatprep.subr.mxu0 0.0
    %2268 = vmatpush1.xpose.msra.mxu0 0.0
    %2269 = vmatprep.subr.mxu0 0.0
    %2270 = vmatpush1.xpose.msra.mxu0 0.0
    %2271 = vmatprep.subr.mxu0 0.0
    %2272 = vmatpush1.xpose.msra.mxu0 0.0
    %2273 = vmatprep.subr.mxu0 0.0
    %2274 = vmatpush1.xpose.msra.mxu0 0.0
    %2275 = vmatprep.subr.mxu0 0.0
    %2276 = vmatpush1.xpose.msra.mxu0 %v2097
    %2277 = vmatprep.subr.mxu0 0.0
    %2278 = vmatpush2.xpose.msra.mxu0 0.0
    %2279 = vmatprep.subr.mxu0 0.0
    %2280 = vmatpush2.xpose.msra.mxu0 0.0
    %2281 = vmatprep.subr.mxu0 0.0
    %2282 = vmatpush2.xpose.msra.mxu0 0.0
    %2283 = vmatprep.subr.mxu0 0.0
    %2284 = vmatpush2.xpose.msra.mxu0 0.0
    %2285 = vmatprep.subr.mxu0 0.0
    %2286 = vmatpush2.xpose.msra.mxu0 0.0
    %2287 = vmatprep.subr.mxu0 0.0
    %2288 = vmatpush2.xpose.msra.mxu0 0.0
    %2289 = vmatprep.subr.mxu0 0.0
    %2290 = vmatpush2.xpose.msra.mxu0 0.0
    %2291 = vmatprep.subr.mxu0 0.0
    %2292 = vmatpush2.xpose.msra.mxu0 0.0
    %2293 = vmatprep.subr.mxu0 0.0
    %2294 = vmatpush2.xpose.msra.mxu0 0.0
    %2295 = vmatprep.subr.mxu0 0.0
    %2296 = vmatpush2.xpose.msra.mxu0 0.0
    %2297 = vmatprep.subr.mxu0 0.0
    %2298 = vmatpush2.xpose.msra.mxu0 0.0
    %2299 = vmatprep.subr.mxu0 0.0
    %2300 = vmatpush2.xpose.msra.mxu0 0.0
    %2301 = vmatprep.subr.mxu0 0.0
    %2302 = vmatpush2.xpose.msra.mxu0 0.0
    %2303 = vmatprep.subr.mxu0 0.0
    %2304 = vmatpush2.xpose.msra.mxu0 0.0
    %2305 = vmatprep.subr.mxu0 0.0
    %2306 = vmatpush2.xpose.msra.mxu0 0.0
    %2307 = vmatprep.subr.mxu0 0.0
    %2308 = vmatpush2.xpose.msra.mxu0 0.0
    %2309 = vmatprep.mubr.f32.mxu0 0.0
    %2310 = vmatmul.mubr.f32.gmra.mxu0 %v2243
    %v2311 = vpop.f32.mrf.mxu0
    %v2312 = vadd.f32 0.0, %v2311
    %v2313 = vpop.f32.mrf.mxu0
    %2314 = vdwg.mxu0
    %v2316 = vsel %vm68, %v2088, 0
    %2318 = vmatprep.subr.mxu0 0.0
    %2319 = vmatpush1.xpose.msra.mxu0 0.0
    %2320 = vmatprep.subr.mxu0 0.0
    %2321 = vmatpush1.xpose.msra.mxu0 0.0
    %2322 = vmatprep.subr.mxu0 0.0
    %2323 = vmatpush1.xpose.msra.mxu0 0.0
    %2324 = vmatprep.subr.mxu0 0.0
    %2325 = vmatpush1.xpose.msra.mxu0 0.0
    %2326 = vmatprep.subr.mxu0 0.0
    %2327 = vmatpush1.xpose.msra.mxu0 0.0
    %2328 = vmatprep.subr.mxu0 0.0
    %2329 = vmatpush1.xpose.msra.mxu0 0.0
    %2330 = vmatprep.subr.mxu0 0.0
    %2331 = vmatpush1.xpose.msra.mxu0 0.0
    %2332 = vmatprep.subr.mxu0 0.0
    %2333 = vmatpush1.xpose.msra.mxu0 0.0
    %2334 = vmatprep.subr.mxu0 0.0
    %2335 = vmatpush1.xpose.msra.mxu0 0.0
    %2336 = vmatprep.subr.mxu0 0.0
    %2337 = vmatpush1.xpose.msra.mxu0 0.0
    %2338 = vmatprep.subr.mxu0 0.0
    %2339 = vmatpush1.xpose.msra.mxu0 0.0
    %2340 = vmatprep.subr.mxu0 0.0
    %2341 = vmatpush1.xpose.msra.mxu0 0.0
    %2342 = vmatprep.subr.mxu0 0.0
    %2343 = vmatpush1.xpose.msra.mxu0 0.0
    %2344 = vmatprep.subr.mxu0 0.0
    %2345 = vmatpush1.xpose.msra.mxu0 0.0
    %2346 = vmatprep.subr.mxu0 0.0
    %2347 = vmatpush1.xpose.msra.mxu0 0.0
    %2348 = vmatprep.subr.mxu0 0.0
    %2349 = vmatpush1.xpose.msra.mxu0 %v2097
    %2350 = vmatprep.subr.mxu0 0.0
    %2351 = vmatpush2.xpose.msra.mxu0 0.0
    %2352 = vmatprep.subr.mxu0 0.0
    %2353 = vmatpush2.xpose.msra.mxu0 0.0
    %2354 = vmatprep.subr.mxu0 0.0
    %2355 = vmatpush2.xpose.msra.mxu0 0.0
    %2356 = vmatprep.subr.mxu0 0.0
    %2357 = vmatpush2.xpose.msra.mxu0 0.0
    %2358 = vmatprep.subr.mxu0 0.0
    %2359 = vmatpush2.xpose.msra.mxu0 0.0
    %2360 = vmatprep.subr.mxu0 0.0
    %2361 = vmatpush2.xpose.msra.mxu0 0.0
    %2362 = vmatprep.subr.mxu0 0.0
    %2363 = vmatpush2.xpose.msra.mxu0 0.0
    %2364 = vmatprep.subr.mxu0 0.0
    %2365 = vmatpush2.xpose.msra.mxu0 0.0
    %2366 = vmatprep.subr.mxu0 0.0
    %2367 = vmatpush2.xpose.msra.mxu0 0.0
    %2368 = vmatprep.subr.mxu0 0.0
    %2369 = vmatpush2.xpose.msra.mxu0 0.0
    %2370 = vmatprep.subr.mxu0 0.0
    %2371 = vmatpush2.xpose.msra.mxu0 0.0
    %2372 = vmatprep.subr.mxu0 0.0
    %2373 = vmatpush2.xpose.msra.mxu0 0.0
    %2374 = vmatprep.subr.mxu0 0.0
    %2375 = vmatpush2.xpose.msra.mxu0 0.0
    %2376 = vmatprep.subr.mxu0 0.0
    %2377 = vmatpush2.xpose.msra.mxu0 0.0
    %2378 = vmatprep.subr.mxu0 0.0
    %2379 = vmatpush2.xpose.msra.mxu0 0.0
    %2380 = vmatprep.subr.mxu0 0.0
    %2381 = vmatpush2.xpose.msra.mxu0 0.0
    %2382 = vmatprep.mubr.f32.mxu0 0.0
    %2383 = vmatmul.mubr.f32.gmra.mxu0 %v2316
    %v2384 = vpop.f32.mrf.mxu0
    %v2385 = vadd.f32 0.0, %v2384
    %v2386 = vpop.f32.mrf.mxu0
    %2387 = vdwg.mxu0
    %v2389 = vsel %vm68, %v2089, 0
    %v2392 = vsel %vm68, %v1991, 0
    %2394 = vmatprep.subr.mxu0 0.0
    %2395 = vmatpush1.xpose.msra.mxu0 0.0
    %2396 = vmatprep.subr.mxu0 0.0
    %2397 = vmatpush1.xpose.msra.mxu0 0.0
    %2398 = vmatprep.subr.mxu0 0.0
    %2399 = vmatpush1.xpose.msra.mxu0 0.0
    %2400 = vmatprep.subr.mxu0 0.0
    %2401 = vmatpush1.xpose.msra.mxu0 0.0
    %2402 = vmatprep.subr.mxu0 0.0
    %2403 = vmatpush1.xpose.msra.mxu0 0.0
    %2404 = vmatprep.subr.mxu0 0.0
    %2405 = vmatpush1.xpose.msra.mxu0 0.0
    %2406 = vmatprep.subr.mxu0 0.0
    %2407 = vmatpush1.xpose.msra.mxu0 0.0
    %2408 = vmatprep.subr.mxu0 0.0
    %2409 = vmatpush1.xpose.msra.mxu0 0.0
    %2410 = vmatprep.subr.mxu0 0.0
    %2411 = vmatpush1.xpose.msra.mxu0 0.0
    %2412 = vmatprep.subr.mxu0 0.0
    %2413 = vmatpush1.xpose.msra.mxu0 0.0
    %2414 = vmatprep.subr.mxu0 0.0
    %2415 = vmatpush1.xpose.msra.mxu0 0.0
    %2416 = vmatprep.subr.mxu0 0.0
    %2417 = vmatpush1.xpose.msra.mxu0 0.0
    %2418 = vmatprep.subr.mxu0 0.0
    %2419 = vmatpush1.xpose.msra.mxu0 0.0
    %2420 = vmatprep.subr.mxu0 0.0
    %2421 = vmatpush1.xpose.msra.mxu0 0.0
    %2422 = vmatprep.subr.mxu0 0.0
    %2423 = vmatpush1.xpose.msra.mxu0 0.0
    %2424 = vmatprep.subr.mxu0 0.0
    %2425 = vmatpush1.xpose.msra.mxu0 %v2392
    %2426 = vmatprep.subr.mxu0 0.0
    %2427 = vmatpush2.xpose.msra.mxu0 0.0
    %2428 = vmatprep.subr.mxu0 0.0
    %2429 = vmatpush2.xpose.msra.mxu0 0.0
    %2430 = vmatprep.subr.mxu0 0.0
    %2431 = vmatpush2.xpose.msra.mxu0 0.0
    %2432 = vmatprep.subr.mxu0 0.0
    %2433 = vmatpush2.xpose.msra.mxu0 0.0
    %2434 = vmatprep.subr.mxu0 0.0
    %2435 = vmatpush2.xpose.msra.mxu0 0.0
    %2436 = vmatprep.subr.mxu0 0.0
    %2437 = vmatpush2.xpose.msra.mxu0 0.0
    %2438 = vmatprep.subr.mxu0 0.0
    %2439 = vmatpush2.xpose.msra.mxu0 0.0
    %2440 = vmatprep.subr.mxu0 0.0
    %2441 = vmatpush2.xpose.msra.mxu0 0.0
    %2442 = vmatprep.subr.mxu0 0.0
    %2443 = vmatpush2.xpose.msra.mxu0 0.0
    %2444 = vmatprep.subr.mxu0 0.0
    %2445 = vmatpush2.xpose.msra.mxu0 0.0
    %2446 = vmatprep.subr.mxu0 0.0
    %2447 = vmatpush2.xpose.msra.mxu0 0.0
    %2448 = vmatprep.subr.mxu0 0.0
    %2449 = vmatpush2.xpose.msra.mxu0 0.0
    %2450 = vmatprep.subr.mxu0 0.0
    %2451 = vmatpush2.xpose.msra.mxu0 0.0
    %2452 = vmatprep.subr.mxu0 0.0
    %2453 = vmatpush2.xpose.msra.mxu0 0.0
    %2454 = vmatprep.subr.mxu0 0.0
    %2455 = vmatpush2.xpose.msra.mxu0 0.0
    %2456 = vmatprep.subr.mxu0 0.0
    %2457 = vmatpush2.xpose.msra.mxu0 0.0
    %2458 = vmatprep.mubr.f32.mxu0 0.0
    %2459 = vmatmul.mubr.f32.gmra.mxu0 %v2389
    %v2460 = vpop.f32.mrf.mxu0
    %v2461 = vadd.f32 0.0, %v2460
    %v2462 = vpop.f32.mrf.mxu0
    %2463 = vdwg.mxu0
    %v2465 = vsel %vm68, %v2090, 0
    %2467 = vmatprep.subr.mxu0 0.0
    %2468 = vmatpush1.xpose.msra.mxu0 0.0
    %2469 = vmatprep.subr.mxu0 0.0
    %2470 = vmatpush1.xpose.msra.mxu0 0.0
    %2471 = vmatprep.subr.mxu0 0.0
    %2472 = vmatpush1.xpose.msra.mxu0 0.0
    %2473 = vmatprep.subr.mxu0 0.0
    %2474 = vmatpush1.xpose.msra.mxu0 0.0
    %2475 = vmatprep.subr.mxu0 0.0
    %2476 = vmatpush1.xpose.msra.mxu0 0.0
    %2477 = vmatprep.subr.mxu0 0.0
    %2478 = vmatpush1.xpose.msra.mxu0 0.0
    %2479 = vmatprep.subr.mxu0 0.0
    %2480 = vmatpush1.xpose.msra.mxu0 0.0
    %2481 = vmatprep.subr.mxu0 0.0
    %2482 = vmatpush1.xpose.msra.mxu0 0.0
    %2483 = vmatprep.subr.mxu0 0.0
    %2484 = vmatpush1.xpose.msra.mxu0 0.0
    %2485 = vmatprep.subr.mxu0 0.0
    %2486 = vmatpush1.xpose.msra.mxu0 0.0
    %2487 = vmatprep.subr.mxu0 0.0
    %2488 = vmatpush1.xpose.msra.mxu0 0.0
    %2489 = vmatprep.subr.mxu0 0.0
    %2490 = vmatpush1.xpose.msra.mxu0 0.0
    %2491 = vmatprep.subr.mxu0 0.0
    %2492 = vmatpush1.xpose.msra.mxu0 0.0
    %2493 = vmatprep.subr.mxu0 0.0
    %2494 = vmatpush1.xpose.msra.mxu0 0.0
    %2495 = vmatprep.subr.mxu0 0.0
    %2496 = vmatpush1.xpose.msra.mxu0 0.0
    %2497 = vmatprep.subr.mxu0 0.0
    %2498 = vmatpush1.xpose.msra.mxu0 %v2392
    %2499 = vmatprep.subr.mxu0 0.0
    %2500 = vmatpush2.xpose.msra.mxu0 0.0
    %2501 = vmatprep.subr.mxu0 0.0
    %2502 = vmatpush2.xpose.msra.mxu0 0.0
    %2503 = vmatprep.subr.mxu0 0.0
    %2504 = vmatpush2.xpose.msra.mxu0 0.0
    %2505 = vmatprep.subr.mxu0 0.0
    %2506 = vmatpush2.xpose.msra.mxu0 0.0
    %2507 = vmatprep.subr.mxu0 0.0
    %2508 = vmatpush2.xpose.msra.mxu0 0.0
    %2509 = vmatprep.subr.mxu0 0.0
    %2510 = vmatpush2.xpose.msra.mxu0 0.0
    %2511 = vmatprep.subr.mxu0 0.0
    %2512 = vmatpush2.xpose.msra.mxu0 0.0
    %2513 = vmatprep.subr.mxu0 0.0
    %2514 = vmatpush2.xpose.msra.mxu0 0.0
    %2515 = vmatprep.subr.mxu0 0.0
    %2516 = vmatpush2.xpose.msra.mxu0 0.0
    %2517 = vmatprep.subr.mxu0 0.0
    %2518 = vmatpush2.xpose.msra.mxu0 0.0
    %2519 = vmatprep.subr.mxu0 0.0
    %2520 = vmatpush2.xpose.msra.mxu0 0.0
    %2521 = vmatprep.subr.mxu0 0.0
    %2522 = vmatpush2.xpose.msra.mxu0 0.0
    %2523 = vmatprep.subr.mxu0 0.0
    %2524 = vmatpush2.xpose.msra.mxu0 0.0
    %2525 = vmatprep.subr.mxu0 0.0
    %2526 = vmatpush2.xpose.msra.mxu0 0.0
    %2527 = vmatprep.subr.mxu0 0.0
    %2528 = vmatpush2.xpose.msra.mxu0 0.0
    %2529 = vmatprep.subr.mxu0 0.0
    %2530 = vmatpush2.xpose.msra.mxu0 0.0
    %2531 = vmatprep.mubr.f32.mxu0 0.0
    %2532 = vmatmul.mubr.f32.gmra.mxu0 %v2465
    %v2533 = vpop.f32.mrf.mxu0
    %v2534 = vadd.f32 0.0, %v2533
    %v2535 = vpop.f32.mrf.mxu0
    %2536 = vdwg.mxu0
    %v2538 = vsel %vm68, %v2091, 0
    %2540 = vmatprep.subr.mxu0 0.0
    %2541 = vmatpush1.xpose.msra.mxu0 0.0
    %2542 = vmatprep.subr.mxu0 0.0
    %2543 = vmatpush1.xpose.msra.mxu0 0.0
    %2544 = vmatprep.subr.mxu0 0.0
    %2545 = vmatpush1.xpose.msra.mxu0 0.0
    %2546 = vmatprep.subr.mxu0 0.0
    %2547 = vmatpush1.xpose.msra.mxu0 0.0
    %2548 = vmatprep.subr.mxu0 0.0
    %2549 = vmatpush1.xpose.msra.mxu0 0.0
    %2550 = vmatprep.subr.mxu0 0.0
    %2551 = vmatpush1.xpose.msra.mxu0 0.0
    %2552 = vmatprep.subr.mxu0 0.0
    %2553 = vmatpush1.xpose.msra.mxu0 0.0
    %2554 = vmatprep.subr.mxu0 0.0
    %2555 = vmatpush1.xpose.msra.mxu0 0.0
    %2556 = vmatprep.subr.mxu0 0.0
    %2557 = vmatpush1.xpose.msra.mxu0 0.0
    %2558 = vmatprep.subr.mxu0 0.0
    %2559 = vmatpush1.xpose.msra.mxu0 0.0
    %2560 = vmatprep.subr.mxu0 0.0
    %2561 = vmatpush1.xpose.msra.mxu0 0.0
    %2562 = vmatprep.subr.mxu0 0.0
    %2563 = vmatpush1.xpose.msra.mxu0 0.0
    %2564 = vmatprep.subr.mxu0 0.0
    %2565 = vmatpush1.xpose.msra.mxu0 0.0
    %2566 = vmatprep.subr.mxu0 0.0
    %2567 = vmatpush1.xpose.msra.mxu0 0.0
    %2568 = vmatprep.subr.mxu0 0.0
    %2569 = vmatpush1.xpose.msra.mxu0 0.0
    %2570 = vmatprep.subr.mxu0 0.0
    %2571 = vmatpush1.xpose.msra.mxu0 %v2392
    %2572 = vmatprep.subr.mxu0 0.0
    %2573 = vmatpush2.xpose.msra.mxu0 0.0
    %2574 = vmatprep.subr.mxu0 0.0
    %2575 = vmatpush2.xpose.msra.mxu0 0.0
    %2576 = vmatprep.subr.mxu0 0.0
    %2577 = vmatpush2.xpose.msra.mxu0 0.0
    %2578 = vmatprep.subr.mxu0 0.0
    %2579 = vmatpush2.xpose.msra.mxu0 0.0
    %2580 = vmatprep.subr.mxu0 0.0
    %2581 = vmatpush2.xpose.msra.mxu0 0.0
    %2582 = vmatprep.subr.mxu0 0.0
    %2583 = vmatpush2.xpose.msra.mxu0 0.0
    %2584 = vmatprep.subr.mxu0 0.0
    %2585 = vmatpush2.xpose.msra.mxu0 0.0
    %2586 = vmatprep.subr.mxu0 0.0
    %2587 = vmatpush2.xpose.msra.mxu0 0.0
    %2588 = vmatprep.subr.mxu0 0.0
    %2589 = vmatpush2.xpose.msra.mxu0 0.0
    %2590 = vmatprep.subr.mxu0 0.0
    %2591 = vmatpush2.xpose.msra.mxu0 0.0
    %2592 = vmatprep.subr.mxu0 0.0
    %2593 = vmatpush2.xpose.msra.mxu0 0.0
    %2594 = vmatprep.subr.mxu0 0.0
    %2595 = vmatpush2.xpose.msra.mxu0 0.0
    %2596 = vmatprep.subr.mxu0 0.0
    %2597 = vmatpush2.xpose.msra.mxu0 0.0
    %2598 = vmatprep.subr.mxu0 0.0
    %2599 = vmatpush2.xpose.msra.mxu0 0.0
    %2600 = vmatprep.subr.mxu0 0.0
    %2601 = vmatpush2.xpose.msra.mxu0 0.0
    %2602 = vmatprep.subr.mxu0 0.0
    %2603 = vmatpush2.xpose.msra.mxu0 0.0
    %2604 = vmatprep.mubr.f32.mxu0 0.0
    %2605 = vmatmul.mubr.f32.gmra.mxu0 %v2538
    %v2606 = vpop.f32.mrf.mxu0
    %v2607 = vadd.f32 0.0, %v2606
    %v2608 = vpop.f32.mrf.mxu0
    %2609 = vdwg.mxu0
    %v2611 = vsel %vm68, %v2092, 0
    %2613 = vmatprep.subr.mxu0 0.0
    %2614 = vmatpush1.xpose.msra.mxu0 0.0
    %2615 = vmatprep.subr.mxu0 0.0
    %2616 = vmatpush1.xpose.msra.mxu0 0.0
    %2617 = vmatprep.subr.mxu0 0.0
    %2618 = vmatpush1.xpose.msra.mxu0 0.0
    %2619 = vmatprep.subr.mxu0 0.0
    %2620 = vmatpush1.xpose.msra.mxu0 0.0
    %2621 = vmatprep.subr.mxu0 0.0
    %2622 = vmatpush1.xpose.msra.mxu0 0.0
    %2623 = vmatprep.subr.mxu0 0.0
    %2624 = vmatpush1.xpose.msra.mxu0 0.0
    %2625 = vmatprep.subr.mxu0 0.0
    %2626 = vmatpush1.xpose.msra.mxu0 0.0
    %2627 = vmatprep.subr.mxu0 0.0
    %2628 = vmatpush1.xpose.msra.mxu0 0.0
    %2629 = vmatprep.subr.mxu0 0.0
    %2630 = vmatpush1.xpose.msra.mxu0 0.0
    %2631 = vmatprep.subr.mxu0 0.0
    %2632 = vmatpush1.xpose.msra.mxu0 0.0
    %2633 = vmatprep.subr.mxu0 0.0
    %2634 = vmatpush1.xpose.msra.mxu0 0.0
    %2635 = vmatprep.subr.mxu0 0.0
    %2636 = vmatpush1.xpose.msra.mxu0 0.0
    %2637 = vmatprep.subr.mxu0 0.0
    %2638 = vmatpush1.xpose.msra.mxu0 0.0
    %2639 = vmatprep.subr.mxu0 0.0
    %2640 = vmatpush1.xpose.msra.mxu0 0.0
    %2641 = vmatprep.subr.mxu0 0.0
    %2642 = vmatpush1.xpose.msra.mxu0 0.0
    %2643 = vmatprep.subr.mxu0 0.0
    %2644 = vmatpush1.xpose.msra.mxu0 %v2392
    %2645 = vmatprep.subr.mxu0 0.0
    %2646 = vmatpush2.xpose.msra.mxu0 0.0
    %2647 = vmatprep.subr.mxu0 0.0
    %2648 = vmatpush2.xpose.msra.mxu0 0.0
    %2649 = vmatprep.subr.mxu0 0.0
    %2650 = vmatpush2.xpose.msra.mxu0 0.0
    %2651 = vmatprep.subr.mxu0 0.0
    %2652 = vmatpush2.xpose.msra.mxu0 0.0
    %2653 = vmatprep.subr.mxu0 0.0
    %2654 = vmatpush2.xpose.msra.mxu0 0.0
    %2655 = vmatprep.subr.mxu0 0.0
    %2656 = vmatpush2.xpose.msra.mxu0 0.0
    %2657 = vmatprep.subr.mxu0 0.0
    %2658 = vmatpush2.xpose.msra.mxu0 0.0
    %2659 = vmatprep.subr.mxu0 0.0
    %2660 = vmatpush2.xpose.msra.mxu0 0.0
    %2661 = vmatprep.subr.mxu0 0.0
    %2662 = vmatpush2.xpose.msra.mxu0 0.0
    %2663 = vmatprep.subr.mxu0 0.0
    %2664 = vmatpush2.xpose.msra.mxu0 0.0
    %2665 = vmatprep.subr.mxu0 0.0
    %2666 = vmatpush2.xpose.msra.mxu0 0.0
    %2667 = vmatprep.subr.mxu0 0.0
    %2668 = vmatpush2.xpose.msra.mxu0 0.0
    %2669 = vmatprep.subr.mxu0 0.0
    %2670 = vmatpush2.xpose.msra.mxu0 0.0
    %2671 = vmatprep.subr.mxu0 0.0
    %2672 = vmatpush2.xpose.msra.mxu0 0.0
    %2673 = vmatprep.subr.mxu0 0.0
    %2674 = vmatpush2.xpose.msra.mxu0 0.0
    %2675 = vmatprep.subr.mxu0 0.0
    %2676 = vmatpush2.xpose.msra.mxu0 0.0
    %2677 = vmatprep.mubr.f32.mxu0 0.0
    %2678 = vmatmul.mubr.f32.gmra.mxu0 %v2611
    %v2679 = vpop.f32.mrf.mxu0
    %v2680 = vadd.f32 0.0, %v2679
    %v2681 = vpop.f32.mrf.mxu0
    %2682 = vdwg.mxu0
    %v2683 = vmul.f32 %v62, -1e+09
    %v2684 = vmul.f32 %v63, -1e+09
    %v2687 = vlaneseq
    %v2688 = vshrl.u32 %v2687, 7
    %v2689 = vsub.s32 0, %v2688
    %v2690 = vrot.slane %v2683, %v2689
    %v2691 = vlaneseq
    %v2692 = vshrl.u32 %v2691, 7
    %v2693 = vsub.s32 0, %v2692
    %v2694 = vrot.slane %v2684, %v2693
    %v2697 = vadd.f32 %v2166, %v2690
    %v2698 = vadd.f32 %v2239, %v2690
    %v2699 = vadd.f32 %v2312, %v2690
    %v2700 = vadd.f32 %v2385, %v2690
    %v2701 = vadd.f32 %v2461, %v2694
    %v2702 = vadd.f32 %v2534, %v2694
    %v2703 = vadd.f32 %v2607, %v2694
    %v2704 = vadd.f32 %v2680, %v2694
    %v2705 = vsel %vm967, %v2697, -inf
    %2706 = vmax.xlane.f32.xlu0 %v2705
    %v2707 = vpop.xlane.xlu0 %2706
    %v2708 = vsel %vm967, %v2698, -inf
    %2709 = vmax.xlane.f32.xlu0 %v2708
    %v2710 = vpop.xlane.xlu0 %2709
    %v2711 = vsel %vm967, %v2699, -inf
    %2712 = vmax.xlane.f32.xlu0 %v2711
    %v2713 = vpop.xlane.xlu0 %2712
    %v2714 = vsel %vm967, %v2700, -inf
    %2715 = vmax.xlane.f32.xlu0 %v2714
    %v2716 = vpop.xlane.xlu0 %2715
    %v2717 = vsel %vm967, %v2701, -inf
    %2718 = vmax.xlane.f32.xlu0 %v2717
    %v2719 = vpop.xlane.xlu0 %2718
    %v2720 = vsel %vm967, %v2702, -inf
    %2721 = vmax.xlane.f32.xlu0 %v2720
    %v2722 = vpop.xlane.xlu0 %2721
    %v2723 = vsel %vm967, %v2703, -inf
    %2724 = vmax.xlane.f32.xlu0 %v2723
    %v2725 = vpop.xlane.xlu0 %2724
    %v2726 = vsel %vm967, %v2704, -inf
    %2727 = vmax.xlane.f32.xlu0 %v2726
    %v2728 = vpop.xlane.xlu0 %2727
    %v2729 = vsub.f32 %v2697, %v2707
    %v2730 = vsub.f32 %v2698, %v2710
    %v2731 = vsub.f32 %v2699, %v2713
    %v2732 = vsub.f32 %v2700, %v2716
    %v2733 = vsub.f32 %v2701, %v2719
    %v2734 = vsub.f32 %v2702, %v2722
    %v2735 = vsub.f32 %v2703, %v2725
    %v2736 = vsub.f32 %v2704, %v2728
    %v2737 = vmul.f32 %v2729, 1.442695
    %v2738 = vpow.pop %v2737
    %v2739 = vmul.f32 %v2730, 1.442695
    %v2740 = vpow.pop %v2739
    %v2741 = vmul.f32 %v2731, 1.442695
    %v2742 = vpow.pop %v2741
    %v2743 = vmul.f32 %v2732, 1.442695
    %v2744 = vpow.pop %v2743
    %v2745 = vmul.f32 %v2733, 1.442695
    %v2746 = vpow.pop %v2745
    %v2747 = vmul.f32 %v2734, 1.442695
    %v2748 = vpow.pop %v2747
    %v2749 = vmul.f32 %v2735, 1.442695
    %v2750 = vpow.pop %v2749
    %v2751 = vmul.f32 %v2736, 1.442695
    %v2752 = vpow.pop %v2751
    %v2753 = vsel %vm967, %v2738, 0.0
    %2754 = vadd.xlane.f32.xlu0 %v2753
    %v2755 = vpop.xlane.xlu0 %2754
    %v2756 = vsel %vm967, %v2740, 0.0
    %2757 = vadd.xlane.f32.xlu0 %v2756
    %v2758 = vpop.xlane.xlu0 %2757
    %v2759 = vsel %vm967, %v2742, 0.0
    %2760 = vadd.xlane.f32.xlu0 %v2759
    %v2761 = vpop.xlane.xlu0 %2760
    %v2762 = vsel %vm967, %v2744, 0.0
    %2763 = vadd.xlane.f32.xlu0 %v2762
    %v2764 = vpop.xlane.xlu0 %2763
    %v2765 = vsel %vm967, %v2746, 0.0
    %2766 = vadd.xlane.f32.xlu0 %v2765
    %v2767 = vpop.xlane.xlu0 %2766
    %v2768 = vsel %vm967, %v2748, 0.0
    %2769 = vadd.xlane.f32.xlu0 %v2768
    %v2770 = vpop.xlane.xlu0 %2769
    %v2771 = vsel %vm967, %v2750, 0.0
    %2772 = vadd.xlane.f32.xlu0 %v2771
    %v2773 = vpop.xlane.xlu0 %2772
    %v2774 = vsel %vm967, %v2752, 0.0
    %2775 = vadd.xlane.f32.xlu0 %v2774
    %v2776 = vpop.xlane.xlu0 %2775
    %v2777 = vrcp.pop %v2755
    %v2778 = vrcp.pop %v2758
    %v2779 = vrcp.pop %v2761
    %v2780 = vrcp.pop %v2764
    %v2781 = vrcp.pop %v2767
    %v2782 = vrcp.pop %v2770
    %v2783 = vrcp.pop %v2773
    %v2784 = vrcp.pop %v2776
    %v2785 = vmul.f32 %v2738, %v2777
    %v2786 = vmul.f32 %v2740, %v2778
    %v2787 = vmul.f32 %v2742, %v2779
    %v2788 = vmul.f32 %v2744, %v2780
    %v2789 = vmul.f32 %v2746, %v2781
    %v2790 = vmul.f32 %v2748, %v2782
    %v2791 = vmul.f32 %v2750, %v2783
    %v2792 = vmul.f32 %v2752, %v2784
    %2793 = vst.msk [vmem:[#allocation6] sm:$0xff] %vm967, %v2785
    %2794 = vst.msk [vmem:[#allocation6 + $0x8] sm:$0xff] %vm967, %v2786
    %2795 = vst.msk [vmem:[#allocation6 + $0x10] sm:$0xff] %vm967, %v2787
    %2796 = vst.msk [vmem:[#allocation6 + $0x18] sm:$0xff] %vm967, %v2788
    %2797 = vst.msk [vmem:[#allocation6 + $0x20] sm:$0xff] %vm967, %v2789
    %2798 = vst.msk [vmem:[#allocation6 + $0x28] sm:$0xff] %vm967, %v2790
    %2799 = vst.msk [vmem:[#allocation6 + $0x30] sm:$0xff] %vm967, %v2791
    %2800 = vst.msk [vmem:[#allocation6 + $0x38] sm:$0xff] %vm967, %v2792
    %v2802 = vsel %vm967, %v2785, 0
    %2804 = vmatprep.subr.mxu0 0.0
    %2805 = vmatpush1.msra.mxu0 0.0
    %2806 = vmatprep.subr.mxu0 0.0
    %2807 = vmatpush1.msra.mxu0 0.0
    %2808 = vmatprep.subr.mxu0 0.0
    %2809 = vmatpush1.msra.mxu0 0.0
    %2810 = vmatprep.subr.mxu0 0.0
    %2811 = vmatpush1.msra.mxu0 0.0
    %2812 = vmatprep.subr.mxu0 0.0
    %2813 = vmatpush1.msra.mxu0 0.0
    %2814 = vmatprep.subr.mxu0 0.0
    %2815 = vmatpush1.msra.mxu0 0.0
    %2816 = vmatprep.subr.mxu0 0.0
    %2817 = vmatpush1.msra.mxu0 0.0
    %2818 = vmatprep.subr.mxu0 0.0
    %2819 = vmatpush1.msra.mxu0 0.0
    %2820 = vmatprep.subr.mxu0 0.0
    %2821 = vmatpush1.msra.mxu0 0.0
    %2822 = vmatprep.subr.mxu0 0.0
    %2823 = vmatpush1.msra.mxu0 0.0
    %2824 = vmatprep.subr.mxu0 0.0
    %2825 = vmatpush1.msra.mxu0 0.0
    %2826 = vmatprep.subr.mxu0 0.0
    %2827 = vmatpush1.msra.mxu0 0.0
    %2828 = vmatprep.subr.mxu0 0.0
    %2829 = vmatpush1.msra.mxu0 0.0
    %2830 = vmatprep.subr.mxu0 0.0
    %2831 = vmatpush1.msra.mxu0 0.0
    %2832 = vmatprep.subr.mxu0 0.0
    %2833 = vmatpush1.msra.mxu0 0.0
    %2834 = vmatprep.subr.mxu0 0.0
    %2835 = vmatpush1.msra.mxu0 %v2077
    %2836 = vmatprep.subr.mxu0 0.0
    %2837 = vmatpush2.msra.mxu0 0.0
    %2838 = vmatprep.subr.mxu0 0.0
    %2839 = vmatpush2.msra.mxu0 0.0
    %2840 = vmatprep.subr.mxu0 0.0
    %2841 = vmatpush2.msra.mxu0 0.0
    %2842 = vmatprep.subr.mxu0 0.0
    %2843 = vmatpush2.msra.mxu0 0.0
    %2844 = vmatprep.subr.mxu0 0.0
    %2845 = vmatpush2.msra.mxu0 0.0
    %2846 = vmatprep.subr.mxu0 0.0
    %2847 = vmatpush2.msra.mxu0 0.0
    %2848 = vmatprep.subr.mxu0 0.0
    %2849 = vmatpush2.msra.mxu0 0.0
    %2850 = vmatprep.subr.mxu0 0.0
    %2851 = vmatpush2.msra.mxu0 0.0
    %2852 = vmatprep.subr.mxu0 0.0
    %2853 = vmatpush2.msra.mxu0 0.0
    %2854 = vmatprep.subr.mxu0 0.0
    %2855 = vmatpush2.msra.mxu0 0.0
    %2856 = vmatprep.subr.mxu0 0.0
    %2857 = vmatpush2.msra.mxu0 0.0
    %2858 = vmatprep.subr.mxu0 0.0
    %2859 = vmatpush2.msra.mxu0 0.0
    %2860 = vmatprep.subr.mxu0 0.0
    %2861 = vmatpush2.msra.mxu0 0.0
    %2862 = vmatprep.subr.mxu0 0.0
    %2863 = vmatpush2.msra.mxu0 0.0
    %2864 = vmatprep.subr.mxu0 0.0
    %2865 = vmatpush2.msra.mxu0 0.0
    %2866 = vmatprep.subr.mxu0 0.0
    %2867 = vmatpush2.msra.mxu0 0.0
    %2868 = vmatprep.mubr.f32.mxu0 0.0
    %2869 = vmatmul.mubr.f32.gmra.mxu0 %v2802
    %v2870 = vpop.f32.mrf.mxu0
    %v2871 = vadd.f32 0.0, %v2870
    %v2872 = vpop.f32.mrf.mxu0
    %2873 = vdwg.mxu0
    %v2875 = vsel %vm967, %v2786, 0
    %2877 = vmatprep.subr.mxu0 0.0
    %2878 = vmatpush1.msra.mxu0 0.0
    %2879 = vmatprep.subr.mxu0 0.0
    %2880 = vmatpush1.msra.mxu0 0.0
    %2881 = vmatprep.subr.mxu0 0.0
    %2882 = vmatpush1.msra.mxu0 0.0
    %2883 = vmatprep.subr.mxu0 0.0
    %2884 = vmatpush1.msra.mxu0 0.0
    %2885 = vmatprep.subr.mxu0 0.0
    %2886 = vmatpush1.msra.mxu0 0.0
    %2887 = vmatprep.subr.mxu0 0.0
    %2888 = vmatpush1.msra.mxu0 0.0
    %2889 = vmatprep.subr.mxu0 0.0
    %2890 = vmatpush1.msra.mxu0 0.0
    %2891 = vmatprep.subr.mxu0 0.0
    %2892 = vmatpush1.msra.mxu0 0.0
    %2893 = vmatprep.subr.mxu0 0.0
    %2894 = vmatpush1.msra.mxu0 0.0
    %2895 = vmatprep.subr.mxu0 0.0
    %2896 = vmatpush1.msra.mxu0 0.0
    %2897 = vmatprep.subr.mxu0 0.0
    %2898 = vmatpush1.msra.mxu0 0.0
    %2899 = vmatprep.subr.mxu0 0.0
    %2900 = vmatpush1.msra.mxu0 0.0
    %2901 = vmatprep.subr.mxu0 0.0
    %2902 = vmatpush1.msra.mxu0 0.0
    %2903 = vmatprep.subr.mxu0 0.0
    %2904 = vmatpush1.msra.mxu0 0.0
    %2905 = vmatprep.subr.mxu0 0.0
    %2906 = vmatpush1.msra.mxu0 0.0
    %2907 = vmatprep.subr.mxu0 0.0
    %2908 = vmatpush1.msra.mxu0 %v2077
    %2909 = vmatprep.subr.mxu0 0.0
    %2910 = vmatpush2.msra.mxu0 0.0
    %2911 = vmatprep.subr.mxu0 0.0
    %2912 = vmatpush2.msra.mxu0 0.0
    %2913 = vmatprep.subr.mxu0 0.0
    %2914 = vmatpush2.msra.mxu0 0.0
    %2915 = vmatprep.subr.mxu0 0.0
    %2916 = vmatpush2.msra.mxu0 0.0
    %2917 = vmatprep.subr.mxu0 0.0
    %2918 = vmatpush2.msra.mxu0 0.0
    %2919 = vmatprep.subr.mxu0 0.0
    %2920 = vmatpush2.msra.mxu0 0.0
    %2921 = vmatprep.subr.mxu0 0.0
    %2922 = vmatpush2.msra.mxu0 0.0
    %2923 = vmatprep.subr.mxu0 0.0
    %2924 = vmatpush2.msra.mxu0 0.0
    %2925 = vmatprep.subr.mxu0 0.0
    %2926 = vmatpush2.msra.mxu0 0.0
    %2927 = vmatprep.subr.mxu0 0.0
    %2928 = vmatpush2.msra.mxu0 0.0
    %2929 = vmatprep.subr.mxu0 0.0
    %2930 = vmatpush2.msra.mxu0 0.0
    %2931 = vmatprep.subr.mxu0 0.0
    %2932 = vmatpush2.msra.mxu0 0.0
    %2933 = vmatprep.subr.mxu0 0.0
    %2934 = vmatpush2.msra.mxu0 0.0
    %2935 = vmatprep.subr.mxu0 0.0
    %2936 = vmatpush2.msra.mxu0 0.0
    %2937 = vmatprep.subr.mxu0 0.0
    %2938 = vmatpush2.msra.mxu0 0.0
    %2939 = vmatprep.subr.mxu0 0.0
    %2940 = vmatpush2.msra.mxu0 0.0
    %2941 = vmatprep.mubr.f32.mxu0 0.0
    %2942 = vmatmul.mubr.f32.gmra.mxu0 %v2875
    %v2943 = vpop.f32.mrf.mxu0
    %v2944 = vadd.f32 0.0, %v2943
    %v2945 = vpop.f32.mrf.mxu0
    %2946 = vdwg.mxu0
    %v2948 = vsel %vm967, %v2787, 0
    %2950 = vmatprep.subr.mxu0 0.0
    %2951 = vmatpush1.msra.mxu0 0.0
    %2952 = vmatprep.subr.mxu0 0.0
    %2953 = vmatpush1.msra.mxu0 0.0
    %2954 = vmatprep.subr.mxu0 0.0
    %2955 = vmatpush1.msra.mxu0 0.0
    %2956 = vmatprep.subr.mxu0 0.0
    %2957 = vmatpush1.msra.mxu0 0.0
    %2958 = vmatprep.subr.mxu0 0.0
    %2959 = vmatpush1.msra.mxu0 0.0
    %2960 = vmatprep.subr.mxu0 0.0
    %2961 = vmatpush1.msra.mxu0 0.0
    %2962 = vmatprep.subr.mxu0 0.0
    %2963 = vmatpush1.msra.mxu0 0.0
    %2964 = vmatprep.subr.mxu0 0.0
    %2965 = vmatpush1.msra.mxu0 0.0
    %2966 = vmatprep.subr.mxu0 0.0
    %2967 = vmatpush1.msra.mxu0 0.0
    %2968 = vmatprep.subr.mxu0 0.0
    %2969 = vmatpush1.msra.mxu0 0.0
    %2970 = vmatprep.subr.mxu0 0.0
    %2971 = vmatpush1.msra.mxu0 0.0
    %2972 = vmatprep.subr.mxu0 0.0
    %2973 = vmatpush1.msra.mxu0 0.0
    %2974 = vmatprep.subr.mxu0 0.0
    %2975 = vmatpush1.msra.mxu0 0.0
    %2976 = vmatprep.subr.mxu0 0.0
    %2977 = vmatpush1.msra.mxu0 0.0
    %2978 = vmatprep.subr.mxu0 0.0
    %2979 = vmatpush1.msra.mxu0 0.0
    %2980 = vmatprep.subr.mxu0 0.0
    %2981 = vmatpush1.msra.mxu0 %v2077
    %2982 = vmatprep.subr.mxu0 0.0
    %2983 = vmatpush2.msra.mxu0 0.0
    %2984 = vmatprep.subr.mxu0 0.0
    %2985 = vmatpush2.msra.mxu0 0.0
    %2986 = vmatprep.subr.mxu0 0.0
    %2987 = vmatpush2.msra.mxu0 0.0
    %2988 = vmatprep.subr.mxu0 0.0
    %2989 = vmatpush2.msra.mxu0 0.0
    %2990 = vmatprep.subr.mxu0 0.0
    %2991 = vmatpush2.msra.mxu0 0.0
    %2992 = vmatprep.subr.mxu0 0.0
    %2993 = vmatpush2.msra.mxu0 0.0
    %2994 = vmatprep.subr.mxu0 0.0
    %2995 = vmatpush2.msra.mxu0 0.0
    %2996 = vmatprep.subr.mxu0 0.0
    %2997 = vmatpush2.msra.mxu0 0.0
    %2998 = vmatprep.subr.mxu0 0.0
    %2999 = vmatpush2.msra.mxu0 0.0
    %3000 = vmatprep.subr.mxu0 0.0
    %3001 = vmatpush2.msra.mxu0 0.0
    %3002 = vmatprep.subr.mxu0 0.0
    %3003 = vmatpush2.msra.mxu0 0.0
    %3004 = vmatprep.subr.mxu0 0.0
    %3005 = vmatpush2.msra.mxu0 0.0
    %3006 = vmatprep.subr.mxu0 0.0
    %3007 = vmatpush2.msra.mxu0 0.0
    %3008 = vmatprep.subr.mxu0 0.0
    %3009 = vmatpush2.msra.mxu0 0.0
    %3010 = vmatprep.subr.mxu0 0.0
    %3011 = vmatpush2.msra.mxu0 0.0
    %3012 = vmatprep.subr.mxu0 0.0
    %3013 = vmatpush2.msra.mxu0 0.0
    %3014 = vmatprep.mubr.f32.mxu0 0.0
    %3015 = vmatmul.mubr.f32.gmra.mxu0 %v2948
    %v3016 = vpop.f32.mrf.mxu0
    %v3017 = vadd.f32 0.0, %v3016
    %v3018 = vpop.f32.mrf.mxu0
    %3019 = vdwg.mxu0
    %v3021 = vsel %vm967, %v2788, 0
    %3023 = vmatprep.subr.mxu0 0.0
    %3024 = vmatpush1.msra.mxu0 0.0
    %3025 = vmatprep.subr.mxu0 0.0
    %3026 = vmatpush1.msra.mxu0 0.0
    %3027 = vmatprep.subr.mxu0 0.0
    %3028 = vmatpush1.msra.mxu0 0.0
    %3029 = vmatprep.subr.mxu0 0.0
    %3030 = vmatpush1.msra.mxu0 0.0
    %3031 = vmatprep.subr.mxu0 0.0
    %3032 = vmatpush1.msra.mxu0 0.0
    %3033 = vmatprep.subr.mxu0 0.0
    %3034 = vmatpush1.msra.mxu0 0.0
    %3035 = vmatprep.subr.mxu0 0.0
    %3036 = vmatpush1.msra.mxu0 0.0
    %3037 = vmatprep.subr.mxu0 0.0
    %3038 = vmatpush1.msra.mxu0 0.0
    %3039 = vmatprep.subr.mxu0 0.0
    %3040 = vmatpush1.msra.mxu0 0.0
    %3041 = vmatprep.subr.mxu0 0.0
    %3042 = vmatpush1.msra.mxu0 0.0
    %3043 = vmatprep.subr.mxu0 0.0
    %3044 = vmatpush1.msra.mxu0 0.0
    %3045 = vmatprep.subr.mxu0 0.0
    %3046 = vmatpush1.msra.mxu0 0.0
    %3047 = vmatprep.subr.mxu0 0.0
    %3048 = vmatpush1.msra.mxu0 0.0
    %3049 = vmatprep.subr.mxu0 0.0
    %3050 = vmatpush1.msra.mxu0 0.0
    %3051 = vmatprep.subr.mxu0 0.0
    %3052 = vmatpush1.msra.mxu0 0.0
    %3053 = vmatprep.subr.mxu0 0.0
    %3054 = vmatpush1.msra.mxu0 %v2077
    %3055 = vmatprep.subr.mxu0 0.0
    %3056 = vmatpush2.msra.mxu0 0.0
    %3057 = vmatprep.subr.mxu0 0.0
    %3058 = vmatpush2.msra.mxu0 0.0
    %3059 = vmatprep.subr.mxu0 0.0
    %3060 = vmatpush2.msra.mxu0 0.0
    %3061 = vmatprep.subr.mxu0 0.0
    %3062 = vmatpush2.msra.mxu0 0.0
    %3063 = vmatprep.subr.mxu0 0.0
    %3064 = vmatpush2.msra.mxu0 0.0
    %3065 = vmatprep.subr.mxu0 0.0
    %3066 = vmatpush2.msra.mxu0 0.0
    %3067 = vmatprep.subr.mxu0 0.0
    %3068 = vmatpush2.msra.mxu0 0.0
    %3069 = vmatprep.subr.mxu0 0.0
    %3070 = vmatpush2.msra.mxu0 0.0
    %3071 = vmatprep.subr.mxu0 0.0
    %3072 = vmatpush2.msra.mxu0 0.0
    %3073 = vmatprep.subr.mxu0 0.0
    %3074 = vmatpush2.msra.mxu0 0.0
    %3075 = vmatprep.subr.mxu0 0.0
    %3076 = vmatpush2.msra.mxu0 0.0
    %3077 = vmatprep.subr.mxu0 0.0
    %3078 = vmatpush2.msra.mxu0 0.0
    %3079 = vmatprep.subr.mxu0 0.0
    %3080 = vmatpush2.msra.mxu0 0.0
    %3081 = vmatprep.subr.mxu0 0.0
    %3082 = vmatpush2.msra.mxu0 0.0
    %3083 = vmatprep.subr.mxu0 0.0
    %3084 = vmatpush2.msra.mxu0 0.0
    %3085 = vmatprep.subr.mxu0 0.0
    %3086 = vmatpush2.msra.mxu0 0.0
    %3087 = vmatprep.mubr.f32.mxu0 0.0
    %3088 = vmatmul.mubr.f32.gmra.mxu0 %v3021
    %v3089 = vpop.f32.mrf.mxu0
    %v3090 = vadd.f32 0.0, %v3089
    %v3091 = vpop.f32.mrf.mxu0
    %3092 = vdwg.mxu0
    %v3094 = vsel %vm967, %v2789, 0
    %3096 = vmatprep.subr.mxu0 0.0
    %3097 = vmatpush1.msra.mxu0 0.0
    %3098 = vmatprep.subr.mxu0 0.0
    %3099 = vmatpush1.msra.mxu0 0.0
    %3100 = vmatprep.subr.mxu0 0.0
    %3101 = vmatpush1.msra.mxu0 0.0
    %3102 = vmatprep.subr.mxu0 0.0
    %3103 = vmatpush1.msra.mxu0 0.0
    %3104 = vmatprep.subr.mxu0 0.0
    %3105 = vmatpush1.msra.mxu0 0.0
    %3106 = vmatprep.subr.mxu0 0.0
    %3107 = vmatpush1.msra.mxu0 0.0
    %3108 = vmatprep.subr.mxu0 0.0
    %3109 = vmatpush1.msra.mxu0 0.0
    %3110 = vmatprep.subr.mxu0 0.0
    %3111 = vmatpush1.msra.mxu0 0.0
    %3112 = vmatprep.subr.mxu0 0.0
    %3113 = vmatpush1.msra.mxu0 0.0
    %3114 = vmatprep.subr.mxu0 0.0
    %3115 = vmatpush1.msra.mxu0 0.0
    %3116 = vmatprep.subr.mxu0 0.0
    %3117 = vmatpush1.msra.mxu0 0.0
    %3118 = vmatprep.subr.mxu0 0.0
    %3119 = vmatpush1.msra.mxu0 0.0
    %3120 = vmatprep.subr.mxu0 0.0
    %3121 = vmatpush1.msra.mxu0 0.0
    %3122 = vmatprep.subr.mxu0 0.0
    %3123 = vmatpush1.msra.mxu0 0.0
    %3124 = vmatprep.subr.mxu0 0.0
    %3125 = vmatpush1.msra.mxu0 0.0
    %3126 = vmatprep.subr.mxu0 0.0
    %3127 = vmatpush1.msra.mxu0 %v2082
    %3128 = vmatprep.subr.mxu0 0.0
    %3129 = vmatpush2.msra.mxu0 0.0
    %3130 = vmatprep.subr.mxu0 0.0
    %3131 = vmatpush2.msra.mxu0 0.0
    %3132 = vmatprep.subr.mxu0 0.0
    %3133 = vmatpush2.msra.mxu0 0.0
    %3134 = vmatprep.subr.mxu0 0.0
    %3135 = vmatpush2.msra.mxu0 0.0
    %3136 = vmatprep.subr.mxu0 0.0
    %3137 = vmatpush2.msra.mxu0 0.0
    %3138 = vmatprep.subr.mxu0 0.0
    %3139 = vmatpush2.msra.mxu0 0.0
    %3140 = vmatprep.subr.mxu0 0.0
    %3141 = vmatpush2.msra.mxu0 0.0
    %3142 = vmatprep.subr.mxu0 0.0
    %3143 = vmatpush2.msra.mxu0 0.0
    %3144 = vmatprep.subr.mxu0 0.0
    %3145 = vmatpush2.msra.mxu0 0.0
    %3146 = vmatprep.subr.mxu0 0.0
    %3147 = vmatpush2.msra.mxu0 0.0
    %3148 = vmatprep.subr.mxu0 0.0
    %3149 = vmatpush2.msra.mxu0 0.0
    %3150 = vmatprep.subr.mxu0 0.0
    %3151 = vmatpush2.msra.mxu0 0.0
    %3152 = vmatprep.subr.mxu0 0.0
    %3153 = vmatpush2.msra.mxu0 0.0
    %3154 = vmatprep.subr.mxu0 0.0
    %3155 = vmatpush2.msra.mxu0 0.0
    %3156 = vmatprep.subr.mxu0 0.0
    %3157 = vmatpush2.msra.mxu0 0.0
    %3158 = vmatprep.subr.mxu0 0.0
    %3159 = vmatpush2.msra.mxu0 0.0
    %3160 = vmatprep.mubr.f32.mxu0 0.0
    %3161 = vmatmul.mubr.f32.gmra.mxu0 %v3094
    %v3162 = vpop.f32.mrf.mxu0
    %v3163 = vadd.f32 0.0, %v3162
    %v3164 = vpop.f32.mrf.mxu0
    %3165 = vdwg.mxu0
    %v3167 = vsel %vm967, %v2790, 0
    %3169 = vmatprep.subr.mxu0 0.0
    %3170 = vmatpush1.msra.mxu0 0.0
    %3171 = vmatprep.subr.mxu0 0.0
    %3172 = vmatpush1.msra.mxu0 0.0
    %3173 = vmatprep.subr.mxu0 0.0
    %3174 = vmatpush1.msra.mxu0 0.0
    %3175 = vmatprep.subr.mxu0 0.0
    %3176 = vmatpush1.msra.mxu0 0.0
    %3177 = vmatprep.subr.mxu0 0.0
    %3178 = vmatpush1.msra.mxu0 0.0
    %3179 = vmatprep.subr.mxu0 0.0
    %3180 = vmatpush1.msra.mxu0 0.0
    %3181 = vmatprep.subr.mxu0 0.0
    %3182 = vmatpush1.msra.mxu0 0.0
    %3183 = vmatprep.subr.mxu0 0.0
    %3184 = vmatpush1.msra.mxu0 0.0
    %3185 = vmatprep.subr.mxu0 0.0
    %3186 = vmatpush1.msra.mxu0 0.0
    %3187 = vmatprep.subr.mxu0 0.0
    %3188 = vmatpush1.msra.mxu0 0.0
    %3189 = vmatprep.subr.mxu0 0.0
    %3190 = vmatpush1.msra.mxu0 0.0
    %3191 = vmatprep.subr.mxu0 0.0
    %3192 = vmatpush1.msra.mxu0 0.0
    %3193 = vmatprep.subr.mxu0 0.0
    %3194 = vmatpush1.msra.mxu0 0.0
    %3195 = vmatprep.subr.mxu0 0.0
    %3196 = vmatpush1.msra.mxu0 0.0
    %3197 = vmatprep.subr.mxu0 0.0
    %3198 = vmatpush1.msra.mxu0 0.0
    %3199 = vmatprep.subr.mxu0 0.0
    %3200 = vmatpush1.msra.mxu0 %v2082
    %3201 = vmatprep.subr.mxu0 0.0
    %3202 = vmatpush2.msra.mxu0 0.0
    %3203 = vmatprep.subr.mxu0 0.0
    %3204 = vmatpush2.msra.mxu0 0.0
    %3205 = vmatprep.subr.mxu0 0.0
    %3206 = vmatpush2.msra.mxu0 0.0
    %3207 = vmatprep.subr.mxu0 0.0
    %3208 = vmatpush2.msra.mxu0 0.0
    %3209 = vmatprep.subr.mxu0 0.0
    %3210 = vmatpush2.msra.mxu0 0.0
    %3211 = vmatprep.subr.mxu0 0.0
    %3212 = vmatpush2.msra.mxu0 0.0
    %3213 = vmatprep.subr.mxu0 0.0
    %3214 = vmatpush2.msra.mxu0 0.0
    %3215 = vmatprep.subr.mxu0 0.0
    %3216 = vmatpush2.msra.mxu0 0.0
    %3217 = vmatprep.subr.mxu0 0.0
    %3218 = vmatpush2.msra.mxu0 0.0
    %3219 = vmatprep.subr.mxu0 0.0
    %3220 = vmatpush2.msra.mxu0 0.0
    %3221 = vmatprep.subr.mxu0 0.0
    %3222 = vmatpush2.msra.mxu0 0.0
    %3223 = vmatprep.subr.mxu0 0.0
    %3224 = vmatpush2.msra.mxu0 0.0
    %3225 = vmatprep.subr.mxu0 0.0
    %3226 = vmatpush2.msra.mxu0 0.0
    %3227 = vmatprep.subr.mxu0 0.0
    %3228 = vmatpush2.msra.mxu0 0.0
    %3229 = vmatprep.subr.mxu0 0.0
    %3230 = vmatpush2.msra.mxu0 0.0
    %3231 = vmatprep.subr.mxu0 0.0
    %3232 = vmatpush2.msra.mxu0 0.0
    %3233 = vmatprep.mubr.f32.mxu0 0.0
    %3234 = vmatmul.mubr.f32.gmra.mxu0 %v3167
    %v3235 = vpop.f32.mrf.mxu0
    %v3236 = vadd.f32 0.0, %v3235
    %v3237 = vpop.f32.mrf.mxu0
    %3238 = vdwg.mxu0
    %v3240 = vsel %vm967, %v2791, 0
    %3242 = vmatprep.subr.mxu0 0.0
    %3243 = vmatpush1.msra.mxu0 0.0
    %3244 = vmatprep.subr.mxu0 0.0
    %3245 = vmatpush1.msra.mxu0 0.0
    %3246 = vmatprep.subr.mxu0 0.0
    %3247 = vmatpush1.msra.mxu0 0.0
    %3248 = vmatprep.subr.mxu0 0.0
    %3249 = vmatpush1.msra.mxu0 0.0
    %3250 = vmatprep.subr.mxu0 0.0
    %3251 = vmatpush1.msra.mxu0 0.0
    %3252 = vmatprep.subr.mxu0 0.0
    %3253 = vmatpush1.msra.mxu0 0.0
    %3254 = vmatprep.subr.mxu0 0.0
    %3255 = vmatpush1.msra.mxu0 0.0
    %3256 = vmatprep.subr.mxu0 0.0
    %3257 = vmatpush1.msra.mxu0 0.0
    %3258 = vmatprep.subr.mxu0 0.0
    %3259 = vmatpush1.msra.mxu0 0.0
    %3260 = vmatprep.subr.mxu0 0.0
    %3261 = vmatpush1.msra.mxu0 0.0
    %3262 = vmatprep.subr.mxu0 0.0
    %3263 = vmatpush1.msra.mxu0 0.0
    %3264 = vmatprep.subr.mxu0 0.0
    %3265 = vmatpush1.msra.mxu0 0.0
    %3266 = vmatprep.subr.mxu0 0.0
    %3267 = vmatpush1.msra.mxu0 0.0
    %3268 = vmatprep.subr.mxu0 0.0
    %3269 = vmatpush1.msra.mxu0 0.0
    %3270 = vmatprep.subr.mxu0 0.0
    %3271 = vmatpush1.msra.mxu0 0.0
    %3272 = vmatprep.subr.mxu0 0.0
    %3273 = vmatpush1.msra.mxu0 %v2082
    %3274 = vmatprep.subr.mxu0 0.0
    %3275 = vmatpush2.msra.mxu0 0.0
    %3276 = vmatprep.subr.mxu0 0.0
    %3277 = vmatpush2.msra.mxu0 0.0
    %3278 = vmatprep.subr.mxu0 0.0
    %3279 = vmatpush2.msra.mxu0 0.0
    %3280 = vmatprep.subr.mxu0 0.0
    %3281 = vmatpush2.msra.mxu0 0.0
    %3282 = vmatprep.subr.mxu0 0.0
    %3283 = vmatpush2.msra.mxu0 0.0
    %3284 = vmatprep.subr.mxu0 0.0
    %3285 = vmatpush2.msra.mxu0 0.0
    %3286 = vmatprep.subr.mxu0 0.0
    %3287 = vmatpush2.msra.mxu0 0.0
    %3288 = vmatprep.subr.mxu0 0.0
    %3289 = vmatpush2.msra.mxu0 0.0
    %3290 = vmatprep.subr.mxu0 0.0
    %3291 = vmatpush2.msra.mxu0 0.0
    %3292 = vmatprep.subr.mxu0 0.0
    %3293 = vmatpush2.msra.mxu0 0.0
    %3294 = vmatprep.subr.mxu0 0.0
    %3295 = vmatpush2.msra.mxu0 0.0
    %3296 = vmatprep.subr.mxu0 0.0
    %3297 = vmatpush2.msra.mxu0 0.0
    %3298 = vmatprep.subr.mxu0 0.0
    %3299 = vmatpush2.msra.mxu0 0.0
    %3300 = vmatprep.subr.mxu0 0.0
    %3301 = vmatpush2.msra.mxu0 0.0
    %3302 = vmatprep.subr.mxu0 0.0
    %3303 = vmatpush2.msra.mxu0 0.0
    %3304 = vmatprep.subr.mxu0 0.0
    %3305 = vmatpush2.msra.mxu0 0.0
    %3306 = vmatprep.mubr.f32.mxu0 0.0
    %3307 = vmatmul.mubr.f32.gmra.mxu0 %v3240
    %v3308 = vpop.f32.mrf.mxu0
    %v3309 = vadd.f32 0.0, %v3308
    %v3310 = vpop.f32.mrf.mxu0
    %3311 = vdwg.mxu0
    %v3313 = vsel %vm967, %v2792, 0
    %3315 = vmatprep.subr.mxu0 0.0
    %3316 = vmatpush1.msra.mxu0 0.0
    %3317 = vmatprep.subr.mxu0 0.0
    %3318 = vmatpush1.msra.mxu0 0.0
    %3319 = vmatprep.subr.mxu0 0.0
    %3320 = vmatpush1.msra.mxu0 0.0
    %3321 = vmatprep.subr.mxu0 0.0
    %3322 = vmatpush1.msra.mxu0 0.0
    %3323 = vmatprep.subr.mxu0 0.0
    %3324 = vmatpush1.msra.mxu0 0.0
    %3325 = vmatprep.subr.mxu0 0.0
    %3326 = vmatpush1.msra.mxu0 0.0
    %3327 = vmatprep.subr.mxu0 0.0
    %3328 = vmatpush1.msra.mxu0 0.0
    %3329 = vmatprep.subr.mxu0 0.0
    %3330 = vmatpush1.msra.mxu0 0.0
    %3331 = vmatprep.subr.mxu0 0.0
    %3332 = vmatpush1.msra.mxu0 0.0
    %3333 = vmatprep.subr.mxu0 0.0
    %3334 = vmatpush1.msra.mxu0 0.0
    %3335 = vmatprep.subr.mxu0 0.0
    %3336 = vmatpush1.msra.mxu0 0.0
    %3337 = vmatprep.subr.mxu0 0.0
    %3338 = vmatpush1.msra.mxu0 0.0
    %3339 = vmatprep.subr.mxu0 0.0
    %3340 = vmatpush1.msra.mxu0 0.0
    %3341 = vmatprep.subr.mxu0 0.0
    %3342 = vmatpush1.msra.mxu0 0.0
    %3343 = vmatprep.subr.mxu0 0.0
    %3344 = vmatpush1.msra.mxu0 0.0
    %3345 = vmatprep.subr.mxu0 0.0
    %3346 = vmatpush1.msra.mxu0 %v2082
    %3347 = vmatprep.subr.mxu0 0.0
    %3348 = vmatpush2.msra.mxu0 0.0
    %3349 = vmatprep.subr.mxu0 0.0
    %3350 = vmatpush2.msra.mxu0 0.0
    %3351 = vmatprep.subr.mxu0 0.0
    %3352 = vmatpush2.msra.mxu0 0.0
    %3353 = vmatprep.subr.mxu0 0.0
    %3354 = vmatpush2.msra.mxu0 0.0
    %3355 = vmatprep.subr.mxu0 0.0
    %3356 = vmatpush2.msra.mxu0 0.0
    %3357 = vmatprep.subr.mxu0 0.0
    %3358 = vmatpush2.msra.mxu0 0.0
    %3359 = vmatprep.subr.mxu0 0.0
    %3360 = vmatpush2.msra.mxu0 0.0
    %3361 = vmatprep.subr.mxu0 0.0
    %3362 = vmatpush2.msra.mxu0 0.0
    %3363 = vmatprep.subr.mxu0 0.0
    %3364 = vmatpush2.msra.mxu0 0.0
    %3365 = vmatprep.subr.mxu0 0.0
    %3366 = vmatpush2.msra.mxu0 0.0
    %3367 = vmatprep.subr.mxu0 0.0
    %3368 = vmatpush2.msra.mxu0 0.0
    %3369 = vmatprep.subr.mxu0 0.0
    %3370 = vmatpush2.msra.mxu0 0.0
    %3371 = vmatprep.subr.mxu0 0.0
    %3372 = vmatpush2.msra.mxu0 0.0
    %3373 = vmatprep.subr.mxu0 0.0
    %3374 = vmatpush2.msra.mxu0 0.0
    %3375 = vmatprep.subr.mxu0 0.0
    %3376 = vmatpush2.msra.mxu0 0.0
    %3377 = vmatprep.subr.mxu0 0.0
    %3378 = vmatpush2.msra.mxu0 0.0
    %3379 = vmatprep.mubr.f32.mxu0 0.0
    %3380 = vmatmul.mubr.f32.gmra.mxu0 %v3313
    %v3381 = vpop.f32.mrf.mxu0
    %v3382 = vadd.f32 0.0, %v3381
    %v3383 = vpop.f32.mrf.mxu0
    %3384 = vdwg.mxu0
    %v3385 = vmul.f32 %v2871, %v343
    %v3386 = vmul.f32 %v2944, %v347
    %v3387 = vmul.f32 %v3017, %v351
    %v3388 = vmul.f32 %v3090, %v355
    %v3389 = vmul.f32 %v3163, %v343
    %v3390 = vmul.f32 %v3236, %v347
    %v3391 = vmul.f32 %v3309, %v351
    %v3392 = vmul.f32 %v3382, %v355
    %v3393 = vsel %vm68, %v3385, 0.0
    %v3394 = vsel %vm68, %v3386, 0.0
    %v3395 = vadd.f32 %v3393, %v3394
    %v3396 = vsel %vm68, %v3387, 0.0
    %v3397 = vadd.f32 %v3395, %v3396
    %v3398 = vsel %vm68, %v3388, 0.0
    %v3399 = vadd.f32 %v3397, %v3398
    %v3400 = vsel %vm68, %v3389, 0.0
    %v3401 = vsel %vm68, %v3390, 0.0
    %v3402 = vadd.f32 %v3400, %v3401
    %v3403 = vsel %vm68, %v3391, 0.0
    %v3404 = vadd.f32 %v3402, %v3403
    %v3405 = vsel %vm68, %v3392, 0.0
    %v3406 = vadd.f32 %v3404, %v3405
    %v3407 = vlaneseq
    %v3408 = vshrl.u32 %v3407, 7
    %v3409 = vsub.s32 7, %v3408
    %v3410 = vrot.slane %v59, %v3409
    %3411 = vrot.lane.b32.xlu0 %v43, 32
    %v3412 = vpop.permute.xlu0 %3411
    %3413 = vrot.lane.b32.xlu0 %v44, 32
    %v3414 = vpop.permute.xlu0 %3413
    %3415 = vrot.lane.b32.xlu0 %v45, 32
    %v3416 = vpop.permute.xlu0 %3415
    %3417 = vrot.lane.b32.xlu0 %v46, 32
    %v3418 = vpop.permute.xlu0 %3417
    %v3424 = vsel %vm68, %v3399, 0
    %v3427 = vsel %vm68, %v3406, 0
    %3429 = vmatprep.subr.mxu0 0.0
    %3430 = vmatpush1.msra.mxu0 0.0
    %3431 = vmatprep.subr.mxu0 0.0
    %3432 = vmatpush1.msra.mxu0 0.0
    %3433 = vmatprep.subr.mxu0 0.0
    %3434 = vmatpush1.msra.mxu0 0.0
    %3435 = vmatprep.subr.mxu0 0.0
    %3436 = vmatpush1.msra.mxu0 0.0
    %3437 = vmatprep.subr.mxu0 0.0
    %3438 = vmatpush1.msra.mxu0 0.0
    %3439 = vmatprep.subr.mxu0 0.0
    %3440 = vmatpush1.msra.mxu0 0.0
    %3441 = vmatprep.subr.mxu0 0.0
    %3442 = vmatpush1.msra.mxu0 0.0
    %3443 = vmatprep.subr.mxu0 0.0
    %3444 = vmatpush1.msra.mxu0 0.0
    %3445 = vmatprep.subr.mxu0 0.0
    %3446 = vmatpush1.msra.mxu0 0.0
    %3447 = vmatprep.subr.mxu0 0.0
    %3448 = vmatpush1.msra.mxu0 0.0
    %3449 = vmatprep.subr.mxu0 0.0
    %3450 = vmatpush1.msra.mxu0 0.0
    %3451 = vmatprep.subr.mxu0 0.0
    %3452 = vmatpush1.msra.mxu0 0.0
    %3453 = vmatprep.subr.mxu0 0.0
    %3454 = vmatpush1.msra.mxu0 %v3418
    %3455 = vmatprep.subr.mxu0 0.0
    %3456 = vmatpush1.msra.mxu0 %v3416
    %3457 = vmatprep.subr.mxu0 0.0
    %3458 = vmatpush1.msra.mxu0 %v3414
    %3459 = vmatprep.subr.mxu0 0.0
    %3460 = vmatpush1.msra.mxu0 %v3412
    %3461 = vmatprep.subr.mxu0 0.0
    %3462 = vmatpush2.msra.mxu0 0.0
    %3463 = vmatprep.subr.mxu0 0.0
    %3464 = vmatpush2.msra.mxu0 0.0
    %3465 = vmatprep.subr.mxu0 0.0
    %3466 = vmatpush2.msra.mxu0 0.0
    %3467 = vmatprep.subr.mxu0 0.0
    %3468 = vmatpush2.msra.mxu0 0.0
    %3469 = vmatprep.subr.mxu0 0.0
    %3470 = vmatpush2.msra.mxu0 0.0
    %3471 = vmatprep.subr.mxu0 0.0
    %3472 = vmatpush2.msra.mxu0 0.0
    %3473 = vmatprep.subr.mxu0 0.0
    %3474 = vmatpush2.msra.mxu0 0.0
    %3475 = vmatprep.subr.mxu0 0.0
    %3476 = vmatpush2.msra.mxu0 0.0
    %3477 = vmatprep.subr.mxu0 0.0
    %3478 = vmatpush2.msra.mxu0 0.0
    %3479 = vmatprep.subr.mxu0 0.0
    %3480 = vmatpush2.msra.mxu0 0.0
    %3481 = vmatprep.subr.mxu0 0.0
    %3482 = vmatpush2.msra.mxu0 0.0
    %3483 = vmatprep.subr.mxu0 0.0
    %3484 = vmatpush2.msra.mxu0 0.0
    %3485 = vmatprep.subr.mxu0 0.0
    %3486 = vmatpush2.msra.mxu0 0.0
    %3487 = vmatprep.subr.mxu0 0.0
    %3488 = vmatpush2.msra.mxu0 0.0
    %3489 = vmatprep.subr.mxu0 0.0
    %3490 = vmatpush2.msra.mxu0 0.0
    %3491 = vmatprep.subr.mxu0 0.0
    %3492 = vmatpush2.msra.mxu0 0.0
    %3493 = vmatprep.mubr.f32.mxu0 0.0
    %3494 = vmatmul.mubr.f32.gmra.mxu0 %v3424
    %v3495 = vpop.f32.mrf.mxu0
    %v3496 = vadd.f32 %v3410, %v3495
    %v3497 = vpop.f32.mrf.mxu0
    %3498 = vmatprep.mubr.f32.mxu0 0.0
    %3499 = vmatmul.mubr.f32.gmra.mxu0 %v3427
    %v3500 = vpop.f32.mrf.mxu0
    %v3501 = vadd.f32 %v3410, %v3500
    %v3502 = vpop.f32.mrf.mxu0
    %3503 = vdwg.mxu0
    %v3504 = vadd.f32 %v3496, %v1806
    %v3505 = vadd.f32 %v3501, %v1807
    %v3506 = vsel %vm68, %v3504, 0.0
    %3507 = vadd.xlane.f32.xlu0 %v3506
    %v3508 = vpop.xlane.xlu0 %3507
    %v3509 = vsel %vm68, %v3505, 0.0
    %3510 = vadd.xlane.f32.xlu0 %v3509
    %v3511 = vpop.xlane.xlu0 %3510
    %v3512 = vmul.f32 %v3508, %v1775
    %v3513 = vmul.f32 %v3511, %v1775
    %v3514 = vsub.f32 %v3504, %v3512
    %v3515 = vsub.f32 %v3505, %v3513
    %v3516 = vmul.f32 %v3514, %v3514
    %v3517 = vmul.f32 %v3515, %v3515
    %v3518 = vsel %vm68, %v3516, 0.0
    %3519 = vadd.xlane.f32.xlu0 %v3518
    %v3520 = vpop.xlane.xlu0 %3519
    %v3521 = vsel %vm68, %v3517, 0.0
    %3522 = vadd.xlane.f32.xlu0 %v3521
    %v3523 = vpop.xlane.xlu0 %3522
    %v3524 = vmul.f32 %v3520, %v1775
    %v3525 = vmul.f32 %v3523, %v1775
    %v3526 = vadd.f32 %v3524, 1e-06
    %v3527 = vadd.f32 %v3525, 1e-06
    %v3528 = vrsqrt.pop %v3526
    %v3529 = vrsqrt.pop %v3527
    %v3530 = vmul.f32 %v3514, %v3528
    %v3531 = vmul.f32 %v3515, %v3529
    %v3532 = vlaneseq
    %v3533 = vshrl.u32 %v3532, 7
    %v3534 = vsub.s32 2, %v3533
    %v3535 = vrot.slane %v60, %v3534
    %v3536 = vmul.f32 %v3530, %v3535
    %v3537 = vmul.f32 %v3531, %v3535
    %v3538 = vlaneseq
    %v3539 = vshrl.u32 %v3538, 7
    %v3540 = vsub.s32 3, %v3539
    %v3541 = vrot.slane %v60, %v3540
    %v3542 = vadd.f32 %v3536, %v3541
    %v3543 = vadd.f32 %v3537, %v3541
    %v3544 = vlaneseq
    %v3545 = vshrl.u32 %v3544, 7
    %v3546 = vsub.s32 7, %v3545
    %v3547 = vrot.slane %v60, %v3546
    %v3549 = vsel %vm68, %v3542, 0
    %v3552 = vsel %vm68, %v3543, 0
    %3554 = vmatprep.subr.mxu0 0.0
    %3555 = vmatpush1.msra.mxu0 0.0
    %3556 = vmatprep.subr.mxu0 0.0
    %3557 = vmatpush1.msra.mxu0 0.0
    %3558 = vmatprep.subr.mxu0 0.0
    %3559 = vmatpush1.msra.mxu0 0.0
    %3560 = vmatprep.subr.mxu0 0.0
    %3561 = vmatpush1.msra.mxu0 0.0
    %3562 = vmatprep.subr.mxu0 0.0
    %3563 = vmatpush1.msra.mxu0 0.0
    %3564 = vmatprep.subr.mxu0 0.0
    %3565 = vmatpush1.msra.mxu0 0.0
    %3566 = vmatprep.subr.mxu0 0.0
    %3567 = vmatpush1.msra.mxu0 0.0
    %3568 = vmatprep.subr.mxu0 0.0
    %3569 = vmatpush1.msra.mxu0 0.0
    %3570 = vmatprep.subr.mxu0 0.0
    %3571 = vmatpush1.msra.mxu0 0.0
    %3572 = vmatprep.subr.mxu0 0.0
    %3573 = vmatpush1.msra.mxu0 0.0
    %3574 = vmatprep.subr.mxu0 0.0
    %3575 = vmatpush1.msra.mxu0 0.0
    %3576 = vmatprep.subr.mxu0 0.0
    %3577 = vmatpush1.msra.mxu0 0.0
    %3578 = vmatprep.subr.mxu0 0.0
    %3579 = vmatpush1.msra.mxu0 %v50
    %3580 = vmatprep.subr.mxu0 0.0
    %3581 = vmatpush1.msra.mxu0 %v49
    %3582 = vmatprep.subr.mxu0 0.0
    %3583 = vmatpush1.msra.mxu0 %v48
    %3584 = vmatprep.subr.mxu0 0.0
    %3585 = vmatpush1.msra.mxu0 %v47
    %3586 = vmatprep.subr.mxu0 0.0
    %3587 = vmatpush2.msra.mxu0 0.0
    %3588 = vmatprep.subr.mxu0 0.0
    %3589 = vmatpush2.msra.mxu0 0.0
    %3590 = vmatprep.subr.mxu0 0.0
    %3591 = vmatpush2.msra.mxu0 0.0
    %3592 = vmatprep.subr.mxu0 0.0
    %3593 = vmatpush2.msra.mxu0 0.0
    %3594 = vmatprep.subr.mxu0 0.0
    %3595 = vmatpush2.msra.mxu0 0.0
    %3596 = vmatprep.subr.mxu0 0.0
    %3597 = vmatpush2.msra.mxu0 0.0
    %3598 = vmatprep.subr.mxu0 0.0
    %3599 = vmatpush2.msra.mxu0 0.0
    %3600 = vmatprep.subr.mxu0 0.0
    %3601 = vmatpush2.msra.mxu0 0.0
    %3602 = vmatprep.subr.mxu0 0.0
    %3603 = vmatpush2.msra.mxu0 0.0
    %3604 = vmatprep.subr.mxu0 0.0
    %3605 = vmatpush2.msra.mxu0 0.0
    %3606 = vmatprep.subr.mxu0 0.0
    %3607 = vmatpush2.msra.mxu0 0.0
    %3608 = vmatprep.subr.mxu0 0.0
    %3609 = vmatpush2.msra.mxu0 0.0
    %3610 = vmatprep.subr.mxu0 0.0
    %3611 = vmatpush2.msra.mxu0 0.0
    %3612 = vmatprep.subr.mxu0 0.0
    %3613 = vmatpush2.msra.mxu0 0.0
    %3614 = vmatprep.subr.mxu0 0.0
    %3615 = vmatpush2.msra.mxu0 0.0
    %3616 = vmatprep.subr.mxu0 0.0
    %3617 = vmatpush2.msra.mxu0 0.0
    %3618 = vmatprep.mubr.f32.mxu0 0.0
    %3619 = vmatmul.mubr.f32.gmra.mxu0 %v3549
    %v3620 = vpop.f32.mrf.mxu0
    %v3621 = vadd.f32 %v3547, %v3620
    %v3622 = vpop.f32.mrf.mxu0
    %3623 = vmatprep.mubr.f32.mxu0 0.0
    %3624 = vmatmul.mubr.f32.gmra.mxu0 %v3552
    %v3625 = vpop.f32.mrf.mxu0
    %v3626 = vadd.f32 %v3547, %v3625
    %v3627 = vpop.f32.mrf.mxu0
    %3628 = vdwg.mxu0
    %v3629 = vmax.f32 %v3621, 0.0
    %v3630 = vmax.f32 %v3626, 0.0
    %v3631 = vlaneseq
    %v3632 = vshrl.u32 %v3631, 7
    %v3633 = vsub.s32 6, %v3632
    %v3634 = vrot.slane %v60, %v3633
    %vm3635 = vcmask 523264
    %v3637 = vsel %vm3635, %v3629, 0
    %v3640 = vsel %vm3635, %v3630, 0
    %3642 = vmatprep.subr.mxu0 0.0
    %3643 = vmatpush1.msra.mxu0 0.0
    %3644 = vmatprep.subr.mxu0 0.0
    %3645 = vmatpush1.msra.mxu0 0.0
    %3646 = vmatprep.subr.mxu0 0.0
    %3647 = vmatpush1.msra.mxu0 0.0
    %3648 = vmatprep.subr.mxu0 0.0
    %3649 = vmatpush1.msra.mxu0 0.0
    %3650 = vmatprep.subr.mxu0 0.0
    %3651 = vmatpush1.msra.mxu0 0.0
    %3652 = vmatprep.subr.mxu0 0.0
    %3653 = vmatpush1.msra.mxu0 0.0
    %3654 = vmatprep.subr.mxu0 0.0
    %3655 = vmatpush1.msra.mxu0 0.0
    %3656 = vmatprep.subr.mxu0 0.0
    %3657 = vmatpush1.msra.mxu0 0.0
    %3658 = vmatprep.subr.mxu0 0.0
    %3659 = vmatpush1.msra.mxu0 %v58
    %3660 = vmatprep.subr.mxu0 0.0
    %3661 = vmatpush1.msra.mxu0 %v57
    %3662 = vmatprep.subr.mxu0 0.0
    %3663 = vmatpush1.msra.mxu0 %v56
    %3664 = vmatprep.subr.mxu0 0.0
    %3665 = vmatpush1.msra.mxu0 %v55
    %3666 = vmatprep.subr.mxu0 0.0
    %3667 = vmatpush1.msra.mxu0 %v54
    %3668 = vmatprep.subr.mxu0 0.0
    %3669 = vmatpush1.msra.mxu0 %v53
    %3670 = vmatprep.subr.mxu0 0.0
    %3671 = vmatpush1.msra.mxu0 %v52
    %3672 = vmatprep.subr.mxu0 0.0
    %3673 = vmatpush1.msra.mxu0 %v51
    %3674 = vmatprep.subr.mxu0 0.0
    %3675 = vmatpush2.msra.mxu0 0.0
    %3676 = vmatprep.subr.mxu0 0.0
    %3677 = vmatpush2.msra.mxu0 0.0
    %3678 = vmatprep.subr.mxu0 0.0
    %3679 = vmatpush2.msra.mxu0 0.0
    %3680 = vmatprep.subr.mxu0 0.0
    %3681 = vmatpush2.msra.mxu0 0.0
    %3682 = vmatprep.subr.mxu0 0.0
    %3683 = vmatpush2.msra.mxu0 0.0
    %3684 = vmatprep.subr.mxu0 0.0
    %3685 = vmatpush2.msra.mxu0 0.0
    %3686 = vmatprep.subr.mxu0 0.0
    %3687 = vmatpush2.msra.mxu0 0.0
    %3688 = vmatprep.subr.mxu0 0.0
    %3689 = vmatpush2.msra.mxu0 0.0
    %3690 = vmatprep.subr.mxu0 0.0
    %3691 = vmatpush2.msra.mxu0 0.0
    %3692 = vmatprep.subr.mxu0 0.0
    %3693 = vmatpush2.msra.mxu0 0.0
    %3694 = vmatprep.subr.mxu0 0.0
    %3695 = vmatpush2.msra.mxu0 0.0
    %3696 = vmatprep.subr.mxu0 0.0
    %3697 = vmatpush2.msra.mxu0 0.0
    %3698 = vmatprep.subr.mxu0 0.0
    %3699 = vmatpush2.msra.mxu0 0.0
    %3700 = vmatprep.subr.mxu0 0.0
    %3701 = vmatpush2.msra.mxu0 0.0
    %3702 = vmatprep.subr.mxu0 0.0
    %3703 = vmatpush2.msra.mxu0 0.0
    %3704 = vmatprep.subr.mxu0 0.0
    %3705 = vmatpush2.msra.mxu0 0.0
    %3706 = vmatprep.mubr.f32.mxu0 0.0
    %3707 = vmatmul.mubr.f32.gmra.mxu0 %v3637
    %v3708 = vpop.f32.mrf.mxu0
    %v3709 = vadd.f32 %v3634, %v3708
    %v3710 = vpop.f32.mrf.mxu0
    %3711 = vmatprep.mubr.f32.mxu0 0.0
    %3712 = vmatmul.mubr.f32.gmra.mxu0 %v3640
    %v3713 = vpop.f32.mrf.mxu0
    %v3714 = vadd.f32 %v3634, %v3713
    %v3715 = vpop.f32.mrf.mxu0
    %3716 = vdwg.mxu0
    %v3717 = vadd.f32 %v3709, %v3542
    %v3718 = vadd.f32 %v3714, %v3543
    %v3719 = vsel %vm68, %v3717, 0.0
    %3720 = vadd.xlane.f32.xlu0 %v3719
    %v3721 = vpop.xlane.xlu0 %3720
    %v3722 = vsel %vm68, %v3718, 0.0
    %3723 = vadd.xlane.f32.xlu0 %v3722
    %v3724 = vpop.xlane.xlu0 %3723
    %v3725 = vmul.f32 %v3721, %v1775
    %v3726 = vmul.f32 %v3724, %v1775
    %v3727 = vsub.f32 %v3717, %v3725
    %v3728 = vsub.f32 %v3718, %v3726
    %v3729 = vmul.f32 %v3727, %v3727
    %v3730 = vmul.f32 %v3728, %v3728
    %v3731 = vsel %vm68, %v3729, 0.0
    %3732 = vadd.xlane.f32.xlu0 %v3731
    %v3733 = vpop.xlane.xlu0 %3732
    %v3734 = vsel %vm68, %v3730, 0.0
    %3735 = vadd.xlane.f32.xlu0 %v3734
    %v3736 = vpop.xlane.xlu0 %3735
    %v3737 = vmul.f32 %v3733, %v1775
    %v3738 = vmul.f32 %v3736, %v1775
    %v3739 = vadd.f32 %v3737, 1e-06
    %v3740 = vadd.f32 %v3738, 1e-06
    %v3741 = vrsqrt.pop %v3739
    %v3742 = vrsqrt.pop %v3740
    %v3743 = vmul.f32 %v3727, %v3741
    %v3744 = vmul.f32 %v3728, %v3742
    %v3745 = vlaneseq
    %v3746 = vshrl.u32 %v3745, 7
    %v3747 = vsub.s32 4, %v3746
    %v3748 = vrot.slane %v60, %v3747
    %v3749 = vmul.f32 %v3743, %v3748
    %v3750 = vmul.f32 %v3744, %v3748
    %v3751 = vlaneseq
    %v3752 = vshrl.u32 %v3751, 7
    %v3753 = vsub.s32 5, %v3752
    %v3754 = vrot.slane %v60, %v3753
    %v3755 = vadd.f32 %v3749, %v3754
    %v3756 = vadd.f32 %v3750, %v3754
    %3757 = vst.msk [vmem:[#allocation2] sm:$0xff] %vm68, %v3755
    %3758 = vst.msk [vmem:[#allocation2 + $0x8] sm:$0xff] %vm68, %v3756
    // Predicated region
    $region30: #{decoder_layer.1} parent=1 // pred_check
      _
    $region31: #{decoder_layer.1} parent=1 // pred_check_branch
      %3760 = sbr.rel (0) target = $region33
    $region32: #{decoder_layer.1} parent=1 // pred_region
      %s3762 = ssub.s32 256, 256
      %3763 = vsyncadd [#allocation3], %s3762
      %s3764 = sshll.u32 [#allocation2], 4
      %s3765 = int_to_ptr.vmem [resolvable:$true] %s3764
      %3770 = dma.vmem_to_hbm [thread:$0]  %s3765, 256, %s7, [#allocation3], 128, 128, 8
    $region33: #{decoder_layer.1} parent=1 // pred_fallthru
      _
    // Predicated region
    $region34: #{decoder_layer.1} parent=1 // pred_check
      _
    $region35: #{decoder_layer.1} parent=1 // pred_check_branch
      %3772 = sbr.rel (0) target = $region37
    $region36: #{decoder_layer.1} parent=1 // pred_region
      %s3774 = ssub.s32 1024, 1024
      %3775 = vsyncadd [#allocation5], %s3774
      %s3776 = sshll.u32 [#allocation4], 4
      %s3777 = int_to_ptr.vmem [resolvable:$true] %s3776
      %3782 = dma.vmem_to_hbm [thread:$0]  %s3777, 1024, %s8, [#allocation5], 128, 128, 8
    $region37: #{decoder_layer.1} parent=1 // pred_fallthru
      _
    // Predicated region
    $region38: #{decoder_layer.1} parent=1 // pred_check
      _
    $region39: #{decoder_layer.1} parent=1 // pred_check_branch
      %3784 = sbr.rel (0) target = $region41
    $region40: #{decoder_layer.1} parent=1 // pred_region
      %s3786 = ssub.s32 1024, 1024
      %3787 = vsyncadd [#allocation5], %s3786
      %s3788 = sshll.u32 [#allocation6], 4
      %s3789 = int_to_ptr.vmem [resolvable:$true] %s3788
      %3794 = dma.vmem_to_hbm [thread:$0]  %s3789, 1024, %s9, [#allocation5], 128, 128, 8
    $region41: #{decoder_layer.1} parent=1 // pred_fallthru
      _
    // Predicated region
    $region42: #{decoder_layer.1} parent=1 // pred_check
      _
    $region43: #{decoder_layer.1} parent=1 // pred_check_branch
      %3796 = sbr.rel (0) target = $region45
    $region44: #{decoder_layer.1} parent=1 // pred_region
      %3797 = dma.done [#allocation3], 256
    $region45: #{decoder_layer.1} parent=1 // pred_fallthru
      _
    // Predicated region
    $region46: #{decoder_layer.1} parent=1 // pred_check
      _
    $region47: #{decoder_layer.1} parent=1 // pred_check_branch
      %3799 = sbr.rel (0) target = $region49
    $region48: #{decoder_layer.1} parent=1 // pred_region
      %3800 = dma.done [#allocation5], 1024
    $region49: #{decoder_layer.1} parent=1 // pred_fallthru
      _
    // Predicated region
    $region50: #{decoder_layer.1} parent=1 // pred_check
      _
    $region51: #{decoder_layer.1} parent=1 // pred_check_branch
      %3802 = sbr.rel (0) target = $region53
    $region52: #{decoder_layer.1} parent=1 // pred_region
      %3803 = dma.done [#allocation5], 1024
    $region53: #{decoder_layer.1} parent=1 // pred_fallthru
      _
    %3804 = vsyncpa [#allocation3], 1
    %3805 = vsyncpa [#allocation5], 1

</llo_original>
